<compile_context>
chip_gen: v5e
topology: v5e:2x2
jax: 0.10.0
libtpu: 0.0.40
codegen_flags: <defaults>
</compile_context>

<pallas_src>
import functools

import jax
import jax.numpy as jnp
from jax import lax
from jax.experimental import pallas as pl
from jax.experimental.pallas import tpu as pltpu


# =============================================================================
# Kernels
# =============================================================================
def embed_kernel(patch_ref, w_ref, b_ref, cls_ref, pos_ref, out_ref, *,
                 batch, n_patches, n_pad):
    """PatchEmbed (conv-as-matmul) + cls token + positional embedding.

    Writes directly into disjoint row ranges of the (B, N_pad, D) output
    (no in-kernel concatenate).  Rows >= 1 + n_patches are zero padding that
    only exists to keep the sequence length 8-sublane aligned.
    """
    d = w_ref.shape[1]
    # One big (B*n_patches, P) x (P, D) matmul feeding the MXU.
    emb = jnp.dot(patch_ref[...].astype(jnp.bfloat16), w_ref[...],
                  preferred_element_type=jnp.float32) + b_ref[...]
    emb = emb.reshape(batch, n_patches, d)
    pos = pos_ref[0]                                       # (1 + n_patches, D)

    out_ref[:, 1:1 + n_patches, :] = emb + pos[1:, :][None, :, :]
    cls_row = cls_ref[0] + pos[0:1, :]                     # (1, D)
    out_ref[:, 0:1, :] = jnp.broadcast_to(cls_row[None, :, :], (batch, 1, d))
    if n_pad > 1 + n_patches:
        out_ref[:, 1 + n_patches:, :] = jnp.zeros(
            (batch, n_pad - 1 - n_patches, d), jnp.float32)


def blocks_kernel(tok_ref, g1_ref, b1_ref, wqkv_ref, bqkv_ref, wproj_ref,
                  bproj_ref, g2_ref, b2_ref, wfc1_ref, bfc1_ref, wfc2_ref,
                  bfc2_ref, out_ref, attn_buf, *, n_heads, n_valid):
    """All transformer blocks fused.

    grid=(n_layers,): the token tensor is resident in VMEM (output BlockSpec
    returns the same block for every layer) while per-layer weights stream.
    """
    layer = pl.program_id(0)

    @pl.when(layer == 0)
    def _():
        out_ref[...] = tok_ref[...]

    x = out_ref[...]                                       # (B, N_pad, D) f32
    batch, n_pad, d = x.shape
    hd = d // n_heads
    scale = hd ** (-0.5)
    m = batch * n_pad
    x2 = x.reshape(m, d)                                   # batch the M dim

    def layernorm(z, g, b):
        mu = jnp.mean(z, axis=-1, keepdims=True)
        var = jnp.mean(jnp.square(z - mu), axis=-1, keepdims=True)
        return (z - mu) * lax.rsqrt(var + 1e-6) * g + b

    # ---------------- attention branch (pre-LN) ----------------
    xn = layernorm(x2, g1_ref[0], b1_ref[0])
    qkv = jnp.dot(xn.astype(jnp.bfloat16), wqkv_ref[0],
                  preferred_element_type=jnp.float32) + bqkv_ref[0]
    q = qkv[:, 0:d].reshape(batch, n_pad, d)
    k = qkv[:, d:2 * d].reshape(batch, n_pad, d)
    v = qkv[:, 2 * d:3 * d].reshape(batch, n_pad, d)

    if n_pad > n_valid:
        # Mask padded key positions out of the softmax (keeps real-token
        # results identical to the unpadded computation).
        col = lax.broadcasted_iota(jnp.int32, (n_pad, n_pad), 1)
        key_bias = jnp.where(col < n_valid, 0.0, -1e30).astype(jnp.float32)
        key_bias = key_bias[None, :, :]
    else:
        key_bias = None

    for h in range(n_heads):                               # static unroll
        sl = slice(h * hd, (h + 1) * hd)
        qh = q[:, :, sl].astype(jnp.bfloat16)
        kh = k[:, :, sl].astype(jnp.bfloat16)
        vh = v[:, :, sl].astype(jnp.bfloat16)
        s = jnp.einsum("bqd,bkd->bqk", qh, kh,
                       preferred_element_type=jnp.float32) * scale
        if key_bias is not None:
            s = s + key_bias
        s = s - jnp.max(s, axis=-1, keepdims=True)
        p = jnp.exp(s)
        p = p * pl.reciprocal(jnp.sum(p, axis=-1, keepdims=True), approx=True)
        oh = jnp.einsum("bqk,bkd->bqd", p.astype(jnp.bfloat16), vh,
                        preferred_element_type=jnp.float32)
        attn_buf[:, :, sl] = oh           # head-packed write, no concatenate

    attn = attn_buf[...].reshape(m, d)
    proj = jnp.dot(attn.astype(jnp.bfloat16), wproj_ref[0],
                   preferred_element_type=jnp.float32) + bproj_ref[0]
    x2 = x2 + proj                        # residual stream kept in f32

    # ---------------- MLP branch (pre-LN) ----------------
    xn = layernorm(x2, g2_ref[0], b2_ref[0])
    h1 = jnp.dot(xn.astype(jnp.bfloat16), wfc1_ref[0],
                 preferred_element_type=jnp.float32) + bfc1_ref[0]
    # Exact (erf) GELU to match nn.GELU() defaults.
    h1 = 0.5 * h1 * (1.0 + lax.erf(h1 * 0.7071067811865476))
    h2 = jnp.dot(h1.astype(jnp.bfloat16), wfc2_ref[0],
                 preferred_element_type=jnp.float32) + bfc2_ref[0]
    x2 = x2 + h2

    out_ref[...] = x2.reshape(batch, n_pad, d)


def head_kernel(tok_ref, g_ref, b_ref, w_ref, bias_ref, out_ref):
    """Final LayerNorm on the cls token + classification head (lane-padded)."""
    x = tok_ref[...]                      # (B, 8, D): only 8 token rows DMA'd
    cls = x[:, 0, :]                      # (B, D)
    mu = jnp.mean(cls, axis=-1, keepdims=True)
    var = jnp.mean(jnp.square(cls - mu), axis=-1, keepdims=True)
    xn = (cls - mu) * lax.rsqrt(var + 1e-6) * g_ref[...] + b_ref[...]
    out_ref[...] = jnp.dot(xn, w_ref[...],
                           preferred_element_type=jnp.float32) + bias_ref[...]


# =============================================================================
# Wrappers (pallas_call plumbing)
# =============================================================================
def run_embed(patches2, pe_w, pe_b, cls_tok, pos, *, batch, n_patches, n_pad):
    P = patches2.shape[1]
    D = pe_w.shape[1]
    n_real = n_patches + 1
    return pl.pallas_call(
        functools.partial(embed_kernel, batch=batch, n_patches=n_patches,
                          n_pad=n_pad),
        out_shape=jax.ShapeDtypeStruct((batch, n_pad, D), jnp.float32),
        grid=(1,),
        in_specs=[
            pl.BlockSpec((batch * n_patches, P), lambda i: (0, 0)),
            pl.BlockSpec((P, D), lambda i: (0, 0)),
            pl.BlockSpec((1, D), lambda i: (0, 0)),
            pl.BlockSpec((1, 1, D), lambda i: (0, 0, 0)),
            pl.BlockSpec((1, n_real, D), lambda i: (0, 0, 0)),
        ],
        out_specs=pl.BlockSpec((batch, n_pad, D), lambda i: (0, 0, 0)),
        compiler_params=pltpu.CompilerParams(dimension_semantics=("arbitrary",)),
    )(patches2, pe_w, pe_b, cls_tok, pos)


def _layer_spec(shape):
    """BlockSpec for a (L, *shape) stacked per-layer parameter."""
    zeros = (0,) * len(shape)
    return pl.BlockSpec((1,) + tuple(shape), lambda l: (l,) + zeros)


def run_blocks(tokens, params, *, n_heads, n_valid):
    B, n_pad, D = tokens.shape
    L = params["w_qkv"].shape[0]
    H = params["w_fc1"].shape[2]
    tok_spec = pl.BlockSpec((B, n_pad, D), lambda l: (0, 0, 0))
    return pl.pallas_call(
        functools.partial(blocks_kernel, n_heads=n_heads, n_valid=n_valid),
        out_shape=jax.ShapeDtypeStruct((B, n_pad, D), jnp.float32),
        grid=(L,),
        in_specs=[
            tok_spec,
            _layer_spec((1, D)), _layer_spec((1, D)),          # ln1 g / b
            _layer_spec((D, 3 * D)), _layer_spec((1, 3 * D)),  # qkv
            _layer_spec((D, D)), _layer_spec((1, D)),          # proj
            _layer_spec((1, D)), _layer_spec((1, D)),          # ln2 g / b
            _layer_spec((D, H)), _layer_spec((1, H)),          # fc1
            _layer_spec((H, D)), _layer_spec((1, D)),          # fc2
        ],
        out_specs=tok_spec,                                    # resident acc
        scratch_shapes=[pltpu.VMEM((B, n_pad, D), jnp.float32)],
        compiler_params=pltpu.CompilerParams(dimension_semantics=("arbitrary",)),
    )(tokens,
      params["ln1_g"], params["ln1_b"],
      params["w_qkv"], params["b_qkv"],
      params["w_proj"], params["b_proj"],
      params["ln2_g"], params["ln2_b"],
      params["w_fc1"], params["b_fc1"],
      params["w_fc2"], params["b_fc2"])


def run_head(tokens, norm_g, norm_b, head_w, head_b):
    B, n_pad, D = tokens.shape
    c_pad = head_w.shape[1]
    rows = min(8, n_pad)
    return pl.pallas_call(
        head_kernel,
        out_shape=jax.ShapeDtypeStruct((B, c_pad), jnp.float32),
        grid=(1,),
        in_specs=[
            pl.BlockSpec((B, rows, D), lambda i: (0, 0, 0)),   # only cls rows
            pl.BlockSpec((1, D), lambda i: (0, 0)),
            pl.BlockSpec((1, D), lambda i: (0, 0)),
            pl.BlockSpec((D, c_pad), lambda i: (0, 0)),
            pl.BlockSpec((1, c_pad), lambda i: (0, 0)),
        ],
        out_specs=pl.BlockSpec((B, c_pad), lambda i: (0, 0)),
        compiler_params=pltpu.CompilerParams(dimension_semantics=("arbitrary",)),
    )(tokens, norm_g, norm_b, head_w, head_b)


# =============================================================================
# Plain-JAX glue
# =============================================================================
def extract_patches(x, ps):
    # x: (B, C, H, W) NCHW -> (B, n_patches, C*ps*ps) in (c, kh, kw) order,
    # matching the flattened Conv2d(patch, patch) weight layout.
    B, C, H, W = x.shape
    x = x.reshape(B, C, H // ps, ps, W // ps, ps)
    x = x.transpose(0, 2, 4, 1, 3, 5)            # (B, Hp, Wp, C, ps, ps)
    return x.reshape(B, (H // ps) * (W // ps), C * ps * ps)


def vit_forward(x_img, params, *, patch_size, n_heads, n_classes):
    B = x_img.shape[0]
    patches = extract_patches(x_img, patch_size)             # (B, np, P)
    _, n_patches, P = patches.shape
    patches2 = patches.reshape(B * n_patches, P)
    n_real = n_patches + 1
    n_pad = ((n_real + 7) // 8) * 8                          # 8-sublane align

    tokens = run_embed(patches2, params["pe_w"], params["pe_b"],
                       params["cls"], params["pos"],
                       batch=B, n_patches=n_patches, n_pad=n_pad)
    tokens = run_blocks(tokens, params, n_heads=n_heads, n_valid=n_real)
    logits_pad = run_head(tokens, params["norm_g"], params["norm_b"],
                          params["head_w"], params["head_b"])
    return logits_pad[:, :n_classes]


def init_params(key, *, img_size, patch_size, in_chan, embed_dim,
                mlp_ratio, n_layers, n_classes):
    D = embed_dim
    P = in_chan * patch_size * patch_size
    n_patches = (img_size // patch_size) ** 2
    n_real = n_patches + 1
    H = D * mlp_ratio
    c_pad = ((n_classes + 127) // 128) * 128
    std = 0.02

    ks = jax.random.split(key, 14)

    def nrm(k, shape):
        return jax.random.normal(k, shape, jnp.float32) * std

    # Conv2d weight (D, C, ps, ps) flattened to (P, D), (c, kh, kw) order.
    conv_w = nrm(ks[0], (D, in_chan, patch_size, patch_size))
    head_w = nrm(ks[4], (D, n_classes))
    head_b = nrm(ks[5], (1, n_classes))

    return {
        "pe_w": conv_w.reshape(D, P).T.astype(jnp.bfloat16),
        "pe_b": nrm(ks[1], (1, D)),
        "cls": nrm(ks[2], (1, 1, D)),
        "pos": nrm(ks[3], (1, n_real, D)),
        "norm_g": jnp.ones((1, D), jnp.float32),
        "norm_b": jnp.zeros((1, D), jnp.float32),
        # Classifier padded to a 128-lane-dense slab; sliced back outside.
        "head_w": jnp.zeros((D, c_pad), jnp.float32).at[:, :n_classes].set(head_w),
        "head_b": jnp.zeros((1, c_pad), jnp.float32).at[:, :n_classes].set(head_b),
        # Per-layer parameters stacked along a leading layer axis.
        "ln1_g": jnp.ones((n_layers, 1, D), jnp.float32),
        "ln1_b": jnp.zeros((n_layers, 1, D), jnp.float32),
        "w_qkv": nrm(ks[6], (n_layers, D, 3 * D)).astype(jnp.bfloat16),
        "b_qkv": nrm(ks[7], (n_layers, 1, 3 * D)),
        "w_proj": nrm(ks[8], (n_layers, D, D)).astype(jnp.bfloat16),
        "b_proj": nrm(ks[9], (n_layers, 1, D)),
        "ln2_g": jnp.ones((n_layers, 1, D), jnp.float32),
        "ln2_b": jnp.zeros((n_layers, 1, D), jnp.float32),
        "w_fc1": nrm(ks[10], (n_layers, D, H)).astype(jnp.bfloat16),
        "b_fc1": nrm(ks[11], (n_layers, 1, H)),
        "w_fc2": nrm(ks[12], (n_layers, H, D)).astype(jnp.bfloat16),
        "b_fc2": nrm(ks[13], (n_layers, 1, D)),
    }


# =============================================================================
if __name__ == "__main__":
    # Small ViT config: img 16x16, patch 4 -> 16 patches, seq len 17 (pad 24).
    IMG, PATCH, C_IN = 16, 4, 4
    EMBED, HEADS, MLP_RATIO, LAYERS, CLASSES = 32, 4, 4, 2, 10
    BATCH = 2

    key = jax.random.PRNGKey(0)
    k_params, k_x = jax.random.split(key)
    params = init_params(k_params, img_size=IMG, patch_size=PATCH,
                         in_chan=C_IN, embed_dim=EMBED,
                         mlp_ratio=MLP_RATIO, n_layers=LAYERS,
                         n_classes=CLASSES)

    x = jax.random.normal(k_x, (BATCH, C_IN, IMG, IMG), jnp.float32)   # NCHW

    fwd = jax.jit(functools.partial(vit_forward, patch_size=PATCH,
                                    n_heads=HEADS, n_classes=CLASSES))
    logits = jax.block_until_ready(fwd(x, params))
    assert logits.shape == (BATCH, CLASSES)
    assert bool(jnp.all(jnp.isfinite(logits)))
    print("KERNEL_OK")
</pallas_src>

<mosaic_0001>
module attributes {stable_mosaic.version = 11 : i64} {
  func.func @blocks_kernel(%arg0: i32, %arg1: memref<2x24x32xf32, #tpu.memory_space<vmem>>, %arg2: memref<1x1x32xf32, #tpu.memory_space<vmem>>, %arg3: memref<1x1x32xf32, #tpu.memory_space<vmem>>, %arg4: memref<1x32x96xbf16, #tpu.memory_space<vmem>>, %arg5: memref<1x1x96xf32, #tpu.memory_space<vmem>>, %arg6: memref<1x32x32xbf16, #tpu.memory_space<vmem>>, %arg7: memref<1x1x32xf32, #tpu.memory_space<vmem>>, %arg8: memref<1x1x32xf32, #tpu.memory_space<vmem>>, %arg9: memref<1x1x32xf32, #tpu.memory_space<vmem>>, %arg10: memref<1x32x128xbf16, #tpu.memory_space<vmem>>, %arg11: memref<1x1x128xf32, #tpu.memory_space<vmem>>, %arg12: memref<1x128x32xbf16, #tpu.memory_space<vmem>>, %arg13: memref<1x1x32xf32, #tpu.memory_space<vmem>>, %arg14: memref<2x24x32xf32, #tpu.memory_space<vmem>>, %arg15: memref<2x24x32xf32, #tpu.memory_space<vmem>>) attributes {dimension_semantics = [#tpu.dimension_semantics<arbitrary>], iteration_bounds = array<i64: 2>, scalar_prefetch = 0 : i64, scratch_operands = 1 : i64, tpu.core_type = #tpu.core_type<tc>, window_params = [{pipeline_mode = #tpu.pipeline_mode<synchronous>, transform_indices = @transform_0, window_bounds = array<i64: 2, 24, 32>}, {transform_indices = @transform_1, window_bounds = array<i64: 1, 1, 32>}, {transform_indices = @transform_2, window_bounds = array<i64: 1, 1, 32>}, {transform_indices = @transform_3, window_bounds = array<i64: 1, 32, 96>}, {transform_indices = @transform_4, window_bounds = array<i64: 1, 1, 96>}, {transform_indices = @transform_5, window_bounds = array<i64: 1, 32, 32>}, {transform_indices = @transform_6, window_bounds = array<i64: 1, 1, 32>}, {transform_indices = @transform_7, window_bounds = array<i64: 1, 1, 32>}, {transform_indices = @transform_8, window_bounds = array<i64: 1, 1, 32>}, {transform_indices = @transform_9, window_bounds = array<i64: 1, 32, 128>}, {transform_indices = @transform_10, window_bounds = array<i64: 1, 1, 128>}, {transform_indices = @transform_11, window_bounds = array<i64: 1, 128, 32>}, {transform_indices = @transform_12, window_bounds = array<i64: 1, 1, 32>}, {pipeline_mode = #tpu.pipeline_mode<synchronous>, transform_indices = @transform_13, window_bounds = array<i64: 2, 24, 32>}]} {
    %c0_i32 = arith.constant 0 : i32
    %0 = arith.cmpi eq, %arg0, %c0_i32 : i32
    %1 = arith.extui %0 : i1 to i32
    %c0_i32_0 = arith.constant 0 : i32
    %2 = arith.cmpi ne, %1, %c0_i32_0 : i32
    scf.if %2 {
      %c0_92 = arith.constant 0 : index
      %c0_93 = arith.constant 0 : index
      %c0_94 = arith.constant 0 : index
      %212 = vector.load %arg1[%c0_92, %c0_93, %c0_94] : memref<2x24x32xf32, #tpu.memory_space<vmem>>, vector<2x24x32xf32>
      %c0_95 = arith.constant 0 : index
      %c0_96 = arith.constant 0 : index
      %c0_97 = arith.constant 0 : index
      %213 = vector.load %arg14[%c0_95, %c0_96, %c0_97] : memref<2x24x32xf32, #tpu.memory_space<vmem>>, vector<2x24x32xf32>
      tpu.vector_store %arg14[%c0_95, %c0_96, %c0_97], %212 {strides = array<i32>} : memref<2x24x32xf32, #tpu.memory_space<vmem>>, vector<2x24x32xf32>,
    } else {
    }
    %c0 = arith.constant 0 : index
    %c0_1 = arith.constant 0 : index
    %c0_2 = arith.constant 0 : index
    %3 = vector.load %arg14[%c0, %c0_1, %c0_2] : memref<2x24x32xf32, #tpu.memory_space<vmem>>, vector<2x24x32xf32>
    %4 = vector.shape_cast %3 : vector<2x24x32xf32> to vector<48x32xf32>
    %c0_3 = arith.constant 0 : index
    %c0_4 = arith.constant 0 : index
    %c0_5 = arith.constant 0 : index
    %5 = vector.load %arg2[%c0_3, %c0_4, %c0_5] : memref<1x1x32xf32, #tpu.memory_space<vmem>>, vector<1x1x32xf32>
    %6 = vector.shape_cast %5 : vector<1x1x32xf32> to vector<1x32xf32>
    %c0_6 = arith.constant 0 : index
    %c0_7 = arith.constant 0 : index
    %c0_8 = arith.constant 0 : index
    %7 = vector.load %arg3[%c0_6, %c0_7, %c0_8] : memref<1x1x32xf32, #tpu.memory_space<vmem>>, vector<1x1x32xf32>
    %8 = vector.shape_cast %7 : vector<1x1x32xf32> to vector<1x32xf32>
    %cst = arith.constant dense<0.000000e+00> : vector<48xf32>
    %9 = vector.multi_reduction <add>, %4, %cst [1] : vector<48x32xf32> to vector<48xf32>
    %10 = vector.shape_cast %9 : vector<48xf32> to vector<48x1xf32>
    %cst_9 = arith.constant 3.200000e+01 : f32
    %11 = vector.broadcast %cst_9 : f32 to vector<48x1xf32>
    %12 = arith.divf %10, %11 : vector<48x1xf32>
    %13 = vector.broadcast %12 : vector<48x1xf32> to vector<48x32xf32>
    %14 = arith.subf %4, %13 : vector<48x32xf32>
    %15 = arith.mulf %14, %14 : vector<48x32xf32>
    %cst_10 = arith.constant dense<0.000000e+00> : vector<48xf32>
    %16 = vector.multi_reduction <add>, %15, %cst_10 [1] : vector<48x32xf32> to vector<48xf32>
    %17 = vector.shape_cast %16 : vector<48xf32> to vector<48x1xf32>
    %cst_11 = arith.constant 3.200000e+01 : f32
    %18 = vector.broadcast %cst_11 : f32 to vector<48x1xf32>
    %19 = arith.divf %17, %18 : vector<48x1xf32>
    %20 = vector.broadcast %12 : vector<48x1xf32> to vector<48x32xf32>
    %21 = arith.subf %4, %20 : vector<48x32xf32>
    %cst_12 = arith.constant 9.99999997E-7 : f32
    %22 = vector.broadcast %cst_12 : f32 to vector<48x1xf32>
    %23 = arith.addf %19, %22 : vector<48x1xf32>
    %24 = math.rsqrt %23 : vector<48x1xf32>
    %25 = vector.broadcast %24 : vector<48x1xf32> to vector<48x32xf32>
    %26 = arith.mulf %21, %25 : vector<48x32xf32>
    %27 = vector.broadcast %6 : vector<1x32xf32> to vector<48x32xf32>
    %28 = arith.mulf %26, %27 : vector<48x32xf32>
    %29 = vector.broadcast %8 : vector<1x32xf32> to vector<48x32xf32>
    %30 = arith.addf %28, %29 : vector<48x32xf32>
    %31 = arith.truncf %30 : vector<48x32xf32> to vector<48x32xbf16>
    %c0_13 = arith.constant 0 : index
    %c0_14 = arith.constant 0 : index
    %c0_15 = arith.constant 0 : index
    %32 = vector.load %arg4[%c0_13, %c0_14, %c0_15] : memref<1x32x96xbf16, #tpu.memory_space<vmem>>, vector<1x32x96xbf16>
    %33 = vector.shape_cast %32 : vector<1x32x96xbf16> to vector<32x96xbf16>
    %cst_16 = arith.constant dense<0.000000e+00> : vector<48x96xf32>
    %34 = tpu.matmul %31, %33, %cst_16 {dimension_numbers = #tpu.dot_dimension_numbers<[1], [0], [0], [1], [0, 0, 1, 1], [], []>} : vector<48x32xbf16>, vector<32x96xbf16>, vector<48x96xf32> -> vector<48x96xf32>
    %c0_17 = arith.constant 0 : index
    %c0_18 = arith.constant 0 : index
    %c0_19 = arith.constant 0 : index
    %35 = vector.load %arg5[%c0_17, %c0_18, %c0_19] : memref<1x1x96xf32, #tpu.memory_space<vmem>>, vector<1x1x96xf32>
    %36 = vector.shape_cast %35 : vector<1x1x96xf32> to vector<1x96xf32>
    %37 = vector.broadcast %36 : vector<1x96xf32> to vector<48x96xf32>
    %38 = arith.addf %34, %37 : vector<48x96xf32>
    %39 = vector.extract_strided_slice %38 {offsets = [0, 0], sizes = [48, 32], strides = [1, 1]} : vector<48x96xf32> to vector<48x32xf32>
    %40 = vector.shape_cast %39 : vector<48x32xf32> to vector<2x24x32xf32>
    %41 = vector.extract_strided_slice %38 {offsets = [0, 32], sizes = [48, 32], strides = [1, 1]} : vector<48x96xf32> to vector<48x32xf32>
    %42 = vector.shape_cast %41 : vector<48x32xf32> to vector<2x24x32xf32>
    %43 = vector.extract_strided_slice %38 {offsets = [0, 64], sizes = [48, 32], strides = [1, 1]} : vector<48x96xf32> to vector<48x32xf32>
    %44 = vector.shape_cast %43 : vector<48x32xf32> to vector<2x24x32xf32>
    %45 = tpu.iota {dimensions = array<i32: 1>} : vector<24x24xi32>
    %c17_i32 = arith.constant 17 : i32
    %46 = vector.broadcast %c17_i32 : i32 to vector<24x24xi32>
    %47 = arith.cmpi slt, %45, %46 : vector<24x24xi32>
    %cst_20 = arith.constant 0.000000e+00 : f32
    %cst_21 = arith.constant -1.000000e+30 : f32
    %48 = vector.broadcast %cst_20 : f32 to vector<24x24xf32>
    %49 = vector.broadcast %cst_21 : f32 to vector<24x24xf32>
    %50 = arith.select %47, %48, %49 : vector<24x24xi1>, vector<24x24xf32>
    %51 = vector.shape_cast %50 : vector<24x24xf32> to vector<1x24x24xf32>
    %52 = vector.extract_strided_slice %40 {offsets = [0, 0, 0], sizes = [2, 24, 8], strides = [1, 1, 1]} : vector<2x24x32xf32> to vector<2x24x8xf32>
    %53 = arith.truncf %52 : vector<2x24x8xf32> to vector<2x24x8xbf16>
    %54 = vector.extract_strided_slice %42 {offsets = [0, 0, 0], sizes = [2, 24, 8], strides = [1, 1, 1]} : vector<2x24x32xf32> to vector<2x24x8xf32>
    %55 = arith.truncf %54 : vector<2x24x8xf32> to vector<2x24x8xbf16>
    %56 = vector.extract_strided_slice %44 {offsets = [0, 0, 0], sizes = [2, 24, 8], strides = [1, 1, 1]} : vector<2x24x32xf32> to vector<2x24x8xf32>
    %57 = arith.truncf %56 : vector<2x24x8xf32> to vector<2x24x8xbf16>
    "tpu.trace_start"() <{level = 10 : i32, message = "bqd,bkd->bqk"}> : () -> ()
    %cst_22 = arith.constant dense<0.000000e+00> : vector<2x24x24xf32>
    %58 = tpu.matmul %53, %55, %cst_22 {dimension_numbers = #tpu.dot_dimension_numbers<[2], [2], [1], [1], [0, 0, 0, 1, 1, 1], [0], [0]>} : vector<2x24x8xbf16>, vector<2x24x8xbf16>, vector<2x24x24xf32> -> vector<2x24x24xf32>
    "tpu.trace_stop"() : () -> ()
    %cst_23 = arith.constant 0.353553385 : f32
    %59 = vector.broadcast %cst_23 : f32 to vector<2x24x24xf32>
    %60 = arith.mulf %58, %59 : vector<2x24x24xf32>
    %61 = vector.broadcast %51 : vector<1x24x24xf32> to vector<2x24x24xf32>
    %62 = arith.addf %60, %61 : vector<2x24x24xf32>
    %cst_24 = arith.constant dense<0xFF800000> : vector<2x24xf32>
    %63 = vector.multi_reduction <maximumf>, %62, %cst_24 [2] : vector<2x24x24xf32> to vector<2x24xf32>
    %64 = vector.shape_cast %63 : vector<2x24xf32> to vector<2x24x1xf32>
    %65 = vector.broadcast %64 : vector<2x24x1xf32> to vector<2x24x24xf32>
    %66 = arith.subf %62, %65 : vector<2x24x24xf32>
    %67 = math.exp %66 : vector<2x24x24xf32>
    %cst_25 = arith.constant dense<0.000000e+00> : vector<2x24xf32>
    %68 = vector.multi_reduction <add>, %67, %cst_25 [2] : vector<2x24x24xf32> to vector<2x24xf32>
    %69 = vector.shape_cast %68 : vector<2x24xf32> to vector<2x24x1xf32>
    %70 = tpu.reciprocal %69 {approx = true} : vector<2x24x1xf32> -> vector<2x24x1xf32>
    %71 = vector.broadcast %70 : vector<2x24x1xf32> to vector<2x24x24xf32>
    %72 = arith.mulf %67, %71 : vector<2x24x24xf32>
    %73 = arith.truncf %72 : vector<2x24x24xf32> to vector<2x24x24xbf16>
    "tpu.trace_start"() <{level = 10 : i32, message = "bqk,bkd->bqd"}> : () -> ()
    %cst_26 = arith.constant dense<0.000000e+00> : vector<2x24x8xf32>
    %74 = tpu.matmul %73, %57, %cst_26 {dimension_numbers = #tpu.dot_dimension_numbers<[2], [1], [1], [2], [0, 0, 0, 1, 1, 2], [0], [0]>} : vector<2x24x24xbf16>, vector<2x24x8xbf16>, vector<2x24x8xf32> -> vector<2x24x8xf32>
    "tpu.trace_stop"() : () -> ()
    %c0_27 = arith.constant 0 : index
    %c0_28 = arith.constant 0 : index
    %c0_29 = arith.constant 0 : index
    %75 = vector.load %arg15[%c0_27, %c0_28, %c0_29] : memref<2x24x32xf32, #tpu.memory_space<vmem>>, vector<2x24x8xf32>
    tpu.vector_store %arg15[%c0_27, %c0_28, %c0_29], %74 {strides = array<i32>} : memref<2x24x32xf32, #tpu.memory_space<vmem>>, vector<2x24x8xf32>,
    %76 = vector.extract_strided_slice %40 {offsets = [0, 0, 8], sizes = [2, 24, 8], strides = [1, 1, 1]} : vector<2x24x32xf32> to vector<2x24x8xf32>
    %77 = arith.truncf %76 : vector<2x24x8xf32> to vector<2x24x8xbf16>
    %78 = vector.extract_strided_slice %42 {offsets = [0, 0, 8], sizes = [2, 24, 8], strides = [1, 1, 1]} : vector<2x24x32xf32> to vector<2x24x8xf32>
    %79 = arith.truncf %78 : vector<2x24x8xf32> to vector<2x24x8xbf16>
    %80 = vector.extract_strided_slice %44 {offsets = [0, 0, 8], sizes = [2, 24, 8], strides = [1, 1, 1]} : vector<2x24x32xf32> to vector<2x24x8xf32>
    %81 = arith.truncf %80 : vector<2x24x8xf32> to vector<2x24x8xbf16>
    "tpu.trace_start"() <{level = 10 : i32, message = "bqd,bkd->bqk"}> : () -> ()
    %cst_30 = arith.constant dense<0.000000e+00> : vector<2x24x24xf32>
    %82 = tpu.matmul %77, %79, %cst_30 {dimension_numbers = #tpu.dot_dimension_numbers<[2], [2], [1], [1], [0, 0, 0, 1, 1, 1], [0], [0]>} : vector<2x24x8xbf16>, vector<2x24x8xbf16>, vector<2x24x24xf32> -> vector<2x24x24xf32>
    "tpu.trace_stop"() : () -> ()
    %cst_31 = arith.constant 0.353553385 : f32
    %83 = vector.broadcast %cst_31 : f32 to vector<2x24x24xf32>
    %84 = arith.mulf %82, %83 : vector<2x24x24xf32>
    %85 = vector.broadcast %51 : vector<1x24x24xf32> to vector<2x24x24xf32>
    %86 = arith.addf %84, %85 : vector<2x24x24xf32>
    %cst_32 = arith.constant dense<0xFF800000> : vector<2x24xf32>
    %87 = vector.multi_reduction <maximumf>, %86, %cst_32 [2] : vector<2x24x24xf32> to vector<2x24xf32>
    %88 = vector.shape_cast %87 : vector<2x24xf32> to vector<2x24x1xf32>
    %89 = vector.broadcast %88 : vector<2x24x1xf32> to vector<2x24x24xf32>
    %90 = arith.subf %86, %89 : vector<2x24x24xf32>
    %91 = math.exp %90 : vector<2x24x24xf32>
    %cst_33 = arith.constant dense<0.000000e+00> : vector<2x24xf32>
    %92 = vector.multi_reduction <add>, %91, %cst_33 [2] : vector<2x24x24xf32> to vector<2x24xf32>
    %93 = vector.shape_cast %92 : vector<2x24xf32> to vector<2x24x1xf32>
    %94 = tpu.reciprocal %93 {approx = true} : vector<2x24x1xf32> -> vector<2x24x1xf32>
    %95 = vector.broadcast %94 : vector<2x24x1xf32> to vector<2x24x24xf32>
    %96 = arith.mulf %91, %95 : vector<2x24x24xf32>
    %97 = arith.truncf %96 : vector<2x24x24xf32> to vector<2x24x24xbf16>
    "tpu.trace_start"() <{level = 10 : i32, message = "bqk,bkd->bqd"}> : () -> ()
    %cst_34 = arith.constant dense<0.000000e+00> : vector<2x24x8xf32>
    %98 = tpu.matmul %97, %81, %cst_34 {dimension_numbers = #tpu.dot_dimension_numbers<[2], [1], [1], [2], [0, 0, 0, 1, 1, 2], [0], [0]>} : vector<2x24x24xbf16>, vector<2x24x8xbf16>, vector<2x24x8xf32> -> vector<2x24x8xf32>
    "tpu.trace_stop"() : () -> ()
    %c0_35 = arith.constant 0 : index
    %c0_36 = arith.constant 0 : index
    %c8 = arith.constant 8 : index
    %99 = vector.load %arg15[%c0_35, %c0_36, %c8] : memref<2x24x32xf32, #tpu.memory_space<vmem>>, vector<2x24x8xf32>
    tpu.vector_store %arg15[%c0_35, %c0_36, %c8], %98 {strides = array<i32>} : memref<2x24x32xf32, #tpu.memory_space<vmem>>, vector<2x24x8xf32>,
    %100 = vector.extract_strided_slice %40 {offsets = [0, 0, 16], sizes = [2, 24, 8], strides = [1, 1, 1]} : vector<2x24x32xf32> to vector<2x24x8xf32>
    %101 = arith.truncf %100 : vector<2x24x8xf32> to vector<2x24x8xbf16>
    %102 = vector.extract_strided_slice %42 {offsets = [0, 0, 16], sizes = [2, 24, 8], strides = [1, 1, 1]} : vector<2x24x32xf32> to vector<2x24x8xf32>
    %103 = arith.truncf %102 : vector<2x24x8xf32> to vector<2x24x8xbf16>
    %104 = vector.extract_strided_slice %44 {offsets = [0, 0, 16], sizes = [2, 24, 8], strides = [1, 1, 1]} : vector<2x24x32xf32> to vector<2x24x8xf32>
    %105 = arith.truncf %104 : vector<2x24x8xf32> to vector<2x24x8xbf16>
    "tpu.trace_start"() <{level = 10 : i32, message = "bqd,bkd->bqk"}> : () -> ()
    %cst_37 = arith.constant dense<0.000000e+00> : vector<2x24x24xf32>
    %106 = tpu.matmul %101, %103, %cst_37 {dimension_numbers = #tpu.dot_dimension_numbers<[2], [2], [1], [1], [0, 0, 0, 1, 1, 1], [0], [0]>} : vector<2x24x8xbf16>, vector<2x24x8xbf16>, vector<2x24x24xf32> -> vector<2x24x24xf32>
    "tpu.trace_stop"() : () -> ()
    %cst_38 = arith.constant 0.353553385 : f32
    %107 = vector.broadcast %cst_38 : f32 to vector<2x24x24xf32>
    %108 = arith.mulf %106, %107 : vector<2x24x24xf32>
    %109 = vector.broadcast %51 : vector<1x24x24xf32> to vector<2x24x24xf32>
    %110 = arith.addf %108, %109 : vector<2x24x24xf32>
    %cst_39 = arith.constant dense<0xFF800000> : vector<2x24xf32>
    %111 = vector.multi_reduction <maximumf>, %110, %cst_39 [2] : vector<2x24x24xf32> to vector<2x24xf32>
    %112 = vector.shape_cast %111 : vector<2x24xf32> to vector<2x24x1xf32>
    %113 = vector.broadcast %112 : vector<2x24x1xf32> to vector<2x24x24xf32>
    %114 = arith.subf %110, %113 : vector<2x24x24xf32>
    %115 = math.exp %114 : vector<2x24x24xf32>
    %cst_40 = arith.constant dense<0.000000e+00> : vector<2x24xf32>
    %116 = vector.multi_reduction <add>, %115, %cst_40 [2] : vector<2x24x24xf32> to vector<2x24xf32>
    %117 = vector.shape_cast %116 : vector<2x24xf32> to vector<2x24x1xf32>
    %118 = tpu.reciprocal %117 {approx = true} : vector<2x24x1xf32> -> vector<2x24x1xf32>
    %119 = vector.broadcast %118 : vector<2x24x1xf32> to vector<2x24x24xf32>
    %120 = arith.mulf %115, %119 : vector<2x24x24xf32>
    %121 = arith.truncf %120 : vector<2x24x24xf32> to vector<2x24x24xbf16>
    "tpu.trace_start"() <{level = 10 : i32, message = "bqk,bkd->bqd"}> : () -> ()
    %cst_41 = arith.constant dense<0.000000e+00> : vector<2x24x8xf32>
    %122 = tpu.matmul %121, %105, %cst_41 {dimension_numbers = #tpu.dot_dimension_numbers<[2], [1], [1], [2], [0, 0, 0, 1, 1, 2], [0], [0]>} : vector<2x24x24xbf16>, vector<2x24x8xbf16>, vector<2x24x8xf32> -> vector<2x24x8xf32>
    "tpu.trace_stop"() : () -> ()
    %c0_42 = arith.constant 0 : index
    %c0_43 = arith.constant 0 : index
    %c16 = arith.constant 16 : index
    %123 = vector.load %arg15[%c0_42, %c0_43, %c16] : memref<2x24x32xf32, #tpu.memory_space<vmem>>, vector<2x24x8xf32>
    tpu.vector_store %arg15[%c0_42, %c0_43, %c16], %122 {strides = array<i32>} : memref<2x24x32xf32, #tpu.memory_space<vmem>>, vector<2x24x8xf32>,
    %124 = vector.extract_strided_slice %40 {offsets = [0, 0, 24], sizes = [2, 24, 8], strides = [1, 1, 1]} : vector<2x24x32xf32> to vector<2x24x8xf32>
    %125 = arith.truncf %124 : vector<2x24x8xf32> to vector<2x24x8xbf16>
    %126 = vector.extract_strided_slice %42 {offsets = [0, 0, 24], sizes = [2, 24, 8], strides = [1, 1, 1]} : vector<2x24x32xf32> to vector<2x24x8xf32>
    %127 = arith.truncf %126 : vector<2x24x8xf32> to vector<2x24x8xbf16>
    %128 = vector.extract_strided_slice %44 {offsets = [0, 0, 24], sizes = [2, 24, 8], strides = [1, 1, 1]} : vector<2x24x32xf32> to vector<2x24x8xf32>
    %129 = arith.truncf %128 : vector<2x24x8xf32> to vector<2x24x8xbf16>
    "tpu.trace_start"() <{level = 10 : i32, message = "bqd,bkd->bqk"}> : () -> ()
    %cst_44 = arith.constant dense<0.000000e+00> : vector<2x24x24xf32>
    %130 = tpu.matmul %125, %127, %cst_44 {dimension_numbers = #tpu.dot_dimension_numbers<[2], [2], [1], [1], [0, 0, 0, 1, 1, 1], [0], [0]>} : vector<2x24x8xbf16>, vector<2x24x8xbf16>, vector<2x24x24xf32> -> vector<2x24x24xf32>
    "tpu.trace_stop"() : () -> ()
    %cst_45 = arith.constant 0.353553385 : f32
    %131 = vector.broadcast %cst_45 : f32 to vector<2x24x24xf32>
    %132 = arith.mulf %130, %131 : vector<2x24x24xf32>
    %133 = vector.broadcast %51 : vector<1x24x24xf32> to vector<2x24x24xf32>
    %134 = arith.addf %132, %133 : vector<2x24x24xf32>
    %cst_46 = arith.constant dense<0xFF800000> : vector<2x24xf32>
    %135 = vector.multi_reduction <maximumf>, %134, %cst_46 [2] : vector<2x24x24xf32> to vector<2x24xf32>
    %136 = vector.shape_cast %135 : vector<2x24xf32> to vector<2x24x1xf32>
    %137 = vector.broadcast %136 : vector<2x24x1xf32> to vector<2x24x24xf32>
    %138 = arith.subf %134, %137 : vector<2x24x24xf32>
    %139 = math.exp %138 : vector<2x24x24xf32>
    %cst_47 = arith.constant dense<0.000000e+00> : vector<2x24xf32>
    %140 = vector.multi_reduction <add>, %139, %cst_47 [2] : vector<2x24x24xf32> to vector<2x24xf32>
    %141 = vector.shape_cast %140 : vector<2x24xf32> to vector<2x24x1xf32>
    %142 = tpu.reciprocal %141 {approx = true} : vector<2x24x1xf32> -> vector<2x24x1xf32>
    %143 = vector.broadcast %142 : vector<2x24x1xf32> to vector<2x24x24xf32>
    %144 = arith.mulf %139, %143 : vector<2x24x24xf32>
    %145 = arith.truncf %144 : vector<2x24x24xf32> to vector<2x24x24xbf16>
    "tpu.trace_start"() <{level = 10 : i32, message = "bqk,bkd->bqd"}> : () -> ()
    %cst_48 = arith.constant dense<0.000000e+00> : vector<2x24x8xf32>
    %146 = tpu.matmul %145, %129, %cst_48 {dimension_numbers = #tpu.dot_dimension_numbers<[2], [1], [1], [2], [0, 0, 0, 1, 1, 2], [0], [0]>} : vector<2x24x24xbf16>, vector<2x24x8xbf16>, vector<2x24x8xf32> -> vector<2x24x8xf32>
    "tpu.trace_stop"() : () -> ()
    %c0_49 = arith.constant 0 : index
    %c0_50 = arith.constant 0 : index
    %c24 = arith.constant 24 : index
    %147 = vector.load %arg15[%c0_49, %c0_50, %c24] : memref<2x24x32xf32, #tpu.memory_space<vmem>>, vector<2x24x8xf32>
    tpu.vector_store %arg15[%c0_49, %c0_50, %c24], %146 {strides = array<i32>} : memref<2x24x32xf32, #tpu.memory_space<vmem>>, vector<2x24x8xf32>,
    %c0_51 = arith.constant 0 : index
    %c0_52 = arith.constant 0 : index
    %c0_53 = arith.constant 0 : index
    %148 = vector.load %arg15[%c0_51, %c0_52, %c0_53] : memref<2x24x32xf32, #tpu.memory_space<vmem>>, vector<2x24x32xf32>
    %149 = vector.shape_cast %148 : vector<2x24x32xf32> to vector<48x32xf32>
    %150 = arith.truncf %149 : vector<48x32xf32> to vector<48x32xbf16>
    %c0_54 = arith.constant 0 : index
    %c0_55 = arith.constant 0 : index
    %c0_56 = arith.constant 0 : index
    %151 = vector.load %arg6[%c0_54, %c0_55, %c0_56] : memref<1x32x32xbf16, #tpu.memory_space<vmem>>, vector<1x32x32xbf16>
    %152 = vector.shape_cast %151 : vector<1x32x32xbf16> to vector<32x32xbf16>
    %cst_57 = arith.constant dense<0.000000e+00> : vector<48x32xf32>
    %153 = tpu.matmul %150, %152, %cst_57 {dimension_numbers = #tpu.dot_dimension_numbers<[1], [0], [0], [1], [0, 0, 1, 1], [], []>} : vector<48x32xbf16>, vector<32x32xbf16>, vector<48x32xf32> -> vector<48x32xf32>
    %c0_58 = arith.constant 0 : index
    %c0_59 = arith.constant 0 : index
    %c0_60 = arith.constant 0 : index
    %154 = vector.load %arg7[%c0_58, %c0_59, %c0_60] : memref<1x1x32xf32, #tpu.memory_space<vmem>>, vector<1x1x32xf32>
    %155 = vector.shape_cast %154 : vector<1x1x32xf32> to vector<1x32xf32>
    %156 = vector.broadcast %155 : vector<1x32xf32> to vector<48x32xf32>
    %157 = arith.addf %153, %156 : vector<48x32xf32>
    %158 = arith.addf %4, %157 : vector<48x32xf32>
    %c0_61 = arith.constant 0 : index
    %c0_62 = arith.constant 0 : index
    %c0_63 = arith.constant 0 : index
    %159 = vector.load %arg8[%c0_61, %c0_62, %c0_63] : memref<1x1x32xf32, #tpu.memory_space<vmem>>, vector<1x1x32xf32>
    %160 = vector.shape_cast %159 : vector<1x1x32xf32> to vector<1x32xf32>
    %c0_64 = arith.constant 0 : index
    %c0_65 = arith.constant 0 : index
    %c0_66 = arith.constant 0 : index
    %161 = vector.load %arg9[%c0_64, %c0_65, %c0_66] : memref<1x1x32xf32, #tpu.memory_space<vmem>>, vector<1x1x32xf32>
    %162 = vector.shape_cast %161 : vector<1x1x32xf32> to vector<1x32xf32>
    %cst_67 = arith.constant dense<0.000000e+00> : vector<48xf32>
    %163 = vector.multi_reduction <add>, %158, %cst_67 [1] : vector<48x32xf32> to vector<48xf32>
    %164 = vector.shape_cast %163 : vector<48xf32> to vector<48x1xf32>
    %cst_68 = arith.constant 3.200000e+01 : f32
    %165 = vector.broadcast %cst_68 : f32 to vector<48x1xf32>
    %166 = arith.divf %164, %165 : vector<48x1xf32>
    %167 = vector.broadcast %166 : vector<48x1xf32> to vector<48x32xf32>
    %168 = arith.subf %158, %167 : vector<48x32xf32>
    %169 = arith.mulf %168, %168 : vector<48x32xf32>
    %cst_69 = arith.constant dense<0.000000e+00> : vector<48xf32>
    %170 = vector.multi_reduction <add>, %169, %cst_69 [1] : vector<48x32xf32> to vector<48xf32>
    %171 = vector.shape_cast %170 : vector<48xf32> to vector<48x1xf32>
    %cst_70 = arith.constant 3.200000e+01 : f32
    %172 = vector.broadcast %cst_70 : f32 to vector<48x1xf32>
    %173 = arith.divf %171, %172 : vector<48x1xf32>
    %174 = vector.broadcast %166 : vector<48x1xf32> to vector<48x32xf32>
    %175 = arith.subf %158, %174 : vector<48x32xf32>
    %cst_71 = arith.constant 9.99999997E-7 : f32
    %176 = vector.broadcast %cst_71 : f32 to vector<48x1xf32>
    %177 = arith.addf %173, %176 : vector<48x1xf32>
    %178 = math.rsqrt %177 : vector<48x1xf32>
    %179 = vector.broadcast %178 : vector<48x1xf32> to vector<48x32xf32>
    %180 = arith.mulf %175, %179 : vector<48x32xf32>
    %181 = vector.broadcast %160 : vector<1x32xf32> to vector<48x32xf32>
    %182 = arith.mulf %180, %181 : vector<48x32xf32>
    %183 = vector.broadcast %162 : vector<1x32xf32> to vector<48x32xf32>
    %184 = arith.addf %182, %183 : vector<48x32xf32>
    %185 = arith.truncf %184 : vector<48x32xf32> to vector<48x32xbf16>
    %c0_72 = arith.constant 0 : index
    %c0_73 = arith.constant 0 : index
    %c0_74 = arith.constant 0 : index
    %186 = vector.load %arg10[%c0_72, %c0_73, %c0_74] : memref<1x32x128xbf16, #tpu.memory_space<vmem>>, vector<1x32x128xbf16>
    %187 = vector.shape_cast %186 : vector<1x32x128xbf16> to vector<32x128xbf16>
    %cst_75 = arith.constant dense<0.000000e+00> : vector<48x128xf32>
    %188 = tpu.matmul %185, %187, %cst_75 {dimension_numbers = #tpu.dot_dimension_numbers<[1], [0], [0], [1], [0, 0, 1, 1], [], []>} : vector<48x32xbf16>, vector<32x128xbf16>, vector<48x128xf32> -> vector<48x128xf32>
    %c0_76 = arith.constant 0 : index
    %c0_77 = arith.constant 0 : index
    %c0_78 = arith.constant 0 : index
    %189 = vector.load %arg11[%c0_76, %c0_77, %c0_78] : memref<1x1x128xf32, #tpu.memory_space<vmem>>, vector<1x1x128xf32>
    %190 = vector.shape_cast %189 : vector<1x1x128xf32> to vector<1x128xf32>
    %191 = vector.broadcast %190 : vector<1x128xf32> to vector<48x128xf32>
    %192 = arith.addf %188, %191 : vector<48x128xf32>
    %cst_79 = arith.constant 5.000000e-01 : f32
    %193 = vector.broadcast %cst_79 : f32 to vector<48x128xf32>
    %194 = arith.mulf %193, %192 : vector<48x128xf32>
    %cst_80 = arith.constant 0.707106769 : f32
    %195 = vector.broadcast %cst_80 : f32 to vector<48x128xf32>
    %196 = arith.mulf %192, %195 : vector<48x128xf32>
    %197 = math.erf %196 : vector<48x128xf32>
    %cst_81 = arith.constant 1.000000e+00 : f32
    %198 = vector.broadcast %cst_81 : f32 to vector<48x128xf32>
    %199 = arith.addf %198, %197 : vector<48x128xf32>
    %200 = arith.mulf %194, %199 : vector<48x128xf32>
    %201 = arith.truncf %200 : vector<48x128xf32> to vector<48x128xbf16>
    %c0_82 = arith.constant 0 : index
    %c0_83 = arith.constant 0 : index
    %c0_84 = arith.constant 0 : index
    %202 = vector.load %arg12[%c0_82, %c0_83, %c0_84] : memref<1x128x32xbf16, #tpu.memory_space<vmem>>, vector<1x128x32xbf16>
    %203 = vector.shape_cast %202 : vector<1x128x32xbf16> to vector<128x32xbf16>
    %cst_85 = arith.constant dense<0.000000e+00> : vector<48x32xf32>
    %204 = tpu.matmul %201, %203, %cst_85 {dimension_numbers = #tpu.dot_dimension_numbers<[1], [0], [0], [1], [0, 0, 1, 1], [], []>} : vector<48x128xbf16>, vector<128x32xbf16>, vector<48x32xf32> -> vector<48x32xf32>
    %c0_86 = arith.constant 0 : index
    %c0_87 = arith.constant 0 : index
    %c0_88 = arith.constant 0 : index
    %205 = vector.load %arg13[%c0_86, %c0_87, %c0_88] : memref<1x1x32xf32, #tpu.memory_space<vmem>>, vector<1x1x32xf32>
    %206 = vector.shape_cast %205 : vector<1x1x32xf32> to vector<1x32xf32>
    %207 = vector.broadcast %206 : vector<1x32xf32> to vector<48x32xf32>
    %208 = arith.addf %204, %207 : vector<48x32xf32>
    %209 = arith.addf %158, %208 : vector<48x32xf32>
    %210 = vector.shape_cast %209 : vector<48x32xf32> to vector<2x24x32xf32>
    %c0_89 = arith.constant 0 : index
    %c0_90 = arith.constant 0 : index
    %c0_91 = arith.constant 0 : index
    %211 = vector.load %arg14[%c0_89, %c0_90, %c0_91] : memref<2x24x32xf32, #tpu.memory_space<vmem>>, vector<2x24x32xf32>
    tpu.vector_store %arg14[%c0_89, %c0_90, %c0_91], %210 {strides = array<i32>} : memref<2x24x32xf32, #tpu.memory_space<vmem>>, vector<2x24x32xf32>,
    return
  }
  func.func @transform_0(%arg0: i32) -> (i32, i32, i32) {
    %c0_i32 = arith.constant 0 : i32
    %c0_i32_0 = arith.constant 0 : i32
    %c0_i32_1 = arith.constant 0 : i32
    %c0_i32_2 = arith.constant 0 : i32
    return %c0_i32, %c0_i32_0, %c0_i32_1 : i32, i32, i32
  }
  func.func @transform_1(%arg0: i32) -> (i32, i32, i32) {
    %c0_i32 = arith.constant 0 : i32
    %c0_i32_0 = arith.constant 0 : i32
    %c0_i32_1 = arith.constant 0 : i32
    return %arg0, %c0_i32, %c0_i32_0 : i32, i32, i32
  }
  func.func @transform_2(%arg0: i32) -> (i32, i32, i32) {
    %c0_i32 = arith.constant 0 : i32
    %c0_i32_0 = arith.constant 0 : i32
    %c0_i32_1 = arith.constant 0 : i32
    return %arg0, %c0_i32, %c0_i32_0 : i32, i32, i32
  }
  func.func @transform_3(%arg0: i32) -> (i32, i32, i32) {
    %c0_i32 = arith.constant 0 : i32
    %c0_i32_0 = arith.constant 0 : i32
    %c0_i32_1 = arith.constant 0 : i32
    return %arg0, %c0_i32, %c0_i32_0 : i32, i32, i32
  }
  func.func @transform_4(%arg0: i32) -> (i32, i32, i32) {
    %c0_i32 = arith.constant 0 : i32
    %c0_i32_0 = arith.constant 0 : i32
    %c0_i32_1 = arith.constant 0 : i32
    return %arg0, %c0_i32, %c0_i32_0 : i32, i32, i32
  }
  func.func @transform_5(%arg0: i32) -> (i32, i32, i32) {
    %c0_i32 = arith.constant 0 : i32
    %c0_i32_0 = arith.constant 0 : i32
    %c0_i32_1 = arith.constant 0 : i32
    return %arg0, %c0_i32, %c0_i32_0 : i32, i32, i32
  }
  func.func @transform_6(%arg0: i32) -> (i32, i32, i32) {
    %c0_i32 = arith.constant 0 : i32
    %c0_i32_0 = arith.constant 0 : i32
    %c0_i32_1 = arith.constant 0 : i32
    return %arg0, %c0_i32, %c0_i32_0 : i32, i32, i32
  }
  func.func @transform_7(%arg0: i32) -> (i32, i32, i32) {
    %c0_i32 = arith.constant 0 : i32
    %c0_i32_0 = arith.constant 0 : i32
    %c0_i32_1 = arith.constant 0 : i32
    return %arg0, %c0_i32, %c0_i32_0 : i32, i32, i32
  }
  func.func @transform_8(%arg0: i32) -> (i32, i32, i32) {
    %c0_i32 = arith.constant 0 : i32
    %c0_i32_0 = arith.constant 0 : i32
    %c0_i32_1 = arith.constant 0 : i32
    return %arg0, %c0_i32, %c0_i32_0 : i32, i32, i32
  }
  func.func @transform_9(%arg0: i32) -> (i32, i32, i32) {
    %c0_i32 = arith.constant 0 : i32
    %c0_i32_0 = arith.constant 0 : i32
    %c0_i32_1 = arith.constant 0 : i32
    return %arg0, %c0_i32, %c0_i32_0 : i32, i32, i32
  }
  func.func @transform_10(%arg0: i32) -> (i32, i32, i32) {
    %c0_i32 = arith.constant 0 : i32
    %c0_i32_0 = arith.constant 0 : i32
    %c0_i32_1 = arith.constant 0 : i32
    return %arg0, %c0_i32, %c0_i32_0 : i32, i32, i32
  }
  func.func @transform_11(%arg0: i32) -> (i32, i32, i32) {
    %c0_i32 = arith.constant 0 : i32
    %c0_i32_0 = arith.constant 0 : i32
    %c0_i32_1 = arith.constant 0 : i32
    return %arg0, %c0_i32, %c0_i32_0 : i32, i32, i32
  }
  func.func @transform_12(%arg0: i32) -> (i32, i32, i32) {
    %c0_i32 = arith.constant 0 : i32
    %c0_i32_0 = arith.constant 0 : i32
    %c0_i32_1 = arith.constant 0 : i32
    return %arg0, %c0_i32, %c0_i32_0 : i32, i32, i32
  }
  func.func @transform_13(%arg0: i32) -> (i32, i32, i32) {
    %c0_i32 = arith.constant 0 : i32
    %c0_i32_0 = arith.constant 0 : i32
    %c0_i32_1 = arith.constant 0 : i32
    %c0_i32_2 = arith.constant 0 : i32
    return %c0_i32, %c0_i32_0, %c0_i32_1 : i32, i32, i32
  }
}

module attributes {stable_mosaic.version = 11 : i64} {
  func.func @embed_kernel(%arg0: i32, %arg1: memref<32x64xf32, #tpu.memory_space<vmem>>, %arg2: memref<64x32xbf16, #tpu.memory_space<vmem>>, %arg3: memref<1x32xf32, #tpu.memory_space<vmem>>, %arg4: memref<1x1x32xf32, #tpu.memory_space<vmem>>, %arg5: memref<1x17x32xf32, #tpu.memory_space<vmem>>, %arg6: memref<2x24x32xf32, #tpu.memory_space<vmem>>) attributes {dimension_semantics = [#tpu.dimension_semantics<arbitrary>], iteration_bounds = array<i64: 1>, scalar_prefetch = 0 : i64, scratch_operands = 0 : i64, tpu.core_type = #tpu.core_type<tc>, window_params = [{pipeline_mode = #tpu.pipeline_mode<synchronous>, transform_indices = @transform_0, window_bounds = array<i64: 32, 64>}, {pipeline_mode = #tpu.pipeline_mode<synchronous>, transform_indices = @transform_1, window_bounds = array<i64: 64, 32>}, {pipeline_mode = #tpu.pipeline_mode<synchronous>, transform_indices = @transform_2, window_bounds = array<i64: 1, 32>}, {pipeline_mode = #tpu.pipeline_mode<synchronous>, transform_indices = @transform_3, window_bounds = array<i64: 1, 1, 32>}, {pipeline_mode = #tpu.pipeline_mode<synchronous>, transform_indices = @transform_4, window_bounds = array<i64: 1, 17, 32>}, {pipeline_mode = #tpu.pipeline_mode<synchronous>, transform_indices = @transform_5, window_bounds = array<i64: 2, 24, 32>}]} {
    %c0 = arith.constant 0 : index
    %c0_0 = arith.constant 0 : index
    %0 = vector.load %arg1[%c0, %c0_0] : memref<32x64xf32, #tpu.memory_space<vmem>>, vector<32x64xf32>
    %1 = arith.truncf %0 : vector<32x64xf32> to vector<32x64xbf16>
    %c0_1 = arith.constant 0 : index
    %c0_2 = arith.constant 0 : index
    %2 = vector.load %arg2[%c0_1, %c0_2] : memref<64x32xbf16, #tpu.memory_space<vmem>>, vector<64x32xbf16>
    %cst = arith.constant dense<0.000000e+00> : vector<32x32xf32>
    %3 = tpu.matmul %1, %2, %cst {dimension_numbers = #tpu.dot_dimension_numbers<[1], [0], [0], [1], [0, 0, 1, 1], [], []>} : vector<32x64xbf16>, vector<64x32xbf16>, vector<32x32xf32> -> vector<32x32xf32>
    %c0_3 = arith.constant 0 : index
    %c0_4 = arith.constant 0 : index
    %4 = vector.load %arg3[%c0_3, %c0_4] : memref<1x32xf32, #tpu.memory_space<vmem>>, vector<1x32xf32>
    %5 = vector.broadcast %4 : vector<1x32xf32> to vector<32x32xf32>
    %6 = arith.addf %3, %5 : vector<32x32xf32>
    %7 = vector.shape_cast %6 : vector<32x32xf32> to vector<2x16x32xf32>
    %c0_5 = arith.constant 0 : index
    %c0_6 = arith.constant 0 : index
    %c0_7 = arith.constant 0 : index
    %8 = vector.load %arg5[%c0_5, %c0_6, %c0_7] : memref<1x17x32xf32, #tpu.memory_space<vmem>>, vector<1x17x32xf32>
    %9 = vector.shape_cast %8 : vector<1x17x32xf32> to vector<17x32xf32>
    %10 = vector.extract_strided_slice %9 {offsets = [1, 0], sizes = [16, 32], strides = [1, 1]} : vector<17x32xf32> to vector<16x32xf32>
    %11 = vector.shape_cast %10 : vector<16x32xf32> to vector<1x16x32xf32>
    %12 = vector.broadcast %11 : vector<1x16x32xf32> to vector<2x16x32xf32>
    %13 = arith.addf %7, %12 : vector<2x16x32xf32>
    %c0_8 = arith.constant 0 : index
    %c1 = arith.constant 1 : index
    %c0_9 = arith.constant 0 : index
    %14 = vector.load %arg6[%c0_8, %c1, %c0_9] : memref<2x24x32xf32, #tpu.memory_space<vmem>>, vector<2x16x32xf32>
    tpu.vector_store %arg6[%c0_8, %c1, %c0_9], %13 {strides = array<i32>} : memref<2x24x32xf32, #tpu.memory_space<vmem>>, vector<2x16x32xf32>,
    %c0_10 = arith.constant 0 : index
    %c0_11 = arith.constant 0 : index
    %c0_12 = arith.constant 0 : index
    %15 = vector.load %arg4[%c0_10, %c0_11, %c0_12] : memref<1x1x32xf32, #tpu.memory_space<vmem>>, vector<1x1x32xf32>
    %16 = vector.shape_cast %15 : vector<1x1x32xf32> to vector<1x32xf32>
    %17 = vector.extract_strided_slice %9 {offsets = [0, 0], sizes = [1, 32], strides = [1, 1]} : vector<17x32xf32> to vector<1x32xf32>
    %18 = arith.addf %16, %17 : vector<1x32xf32>
    %19 = vector.shape_cast %18 : vector<1x32xf32> to vector<1x1x32xf32>
    %20 = vector.shape_cast %19 : vector<1x1x32xf32> to vector<1x1x32xf32>
    %21 = vector.broadcast %20 : vector<1x1x32xf32> to vector<2x1x32xf32>
    %c0_13 = arith.constant 0 : index
    %c0_14 = arith.constant 0 : index
    %c0_15 = arith.constant 0 : index
    %22 = vector.load %arg6[%c0_13, %c0_14, %c0_15] : memref<2x24x32xf32, #tpu.memory_space<vmem>>, vector<2x1x32xf32>
    tpu.vector_store %arg6[%c0_13, %c0_14, %c0_15], %21 {strides = array<i32>} : memref<2x24x32xf32, #tpu.memory_space<vmem>>, vector<2x1x32xf32>,
    %cst_16 = arith.constant 0.000000e+00 : f32
    %23 = vector.broadcast %cst_16 : f32 to vector<2x7x32xf32>
    %c0_17 = arith.constant 0 : index
    %c17 = arith.constant 17 : index
    %c0_18 = arith.constant 0 : index
    %24 = vector.load %arg6[%c0_17, %c17, %c0_18] : memref<2x24x32xf32, #tpu.memory_space<vmem>>, vector<2x7x32xf32>
    tpu.vector_store %arg6[%c0_17, %c17, %c0_18], %23 {strides = array<i32>} : memref<2x24x32xf32, #tpu.memory_space<vmem>>, vector<2x7x32xf32>,
    return
  }
  func.func @transform_0(%arg0: i32) -> (i32, i32) {
    %c0_i32 = arith.constant 0 : i32
    %c0_i32_0 = arith.constant 0 : i32
    %c0_i32_1 = arith.constant 0 : i32
    return %c0_i32, %c0_i32_0 : i32, i32
  }
  func.func @transform_1(%arg0: i32) -> (i32, i32) {
    %c0_i32 = arith.constant 0 : i32
    %c0_i32_0 = arith.constant 0 : i32
    %c0_i32_1 = arith.constant 0 : i32
    return %c0_i32, %c0_i32_0 : i32, i32
  }
  func.func @transform_2(%arg0: i32) -> (i32, i32) {
    %c0_i32 = arith.constant 0 : i32
    %c0_i32_0 = arith.constant 0 : i32
    %c0_i32_1 = arith.constant 0 : i32
    return %c0_i32, %c0_i32_0 : i32, i32
  }
  func.func @transform_3(%arg0: i32) -> (i32, i32, i32) {
    %c0_i32 = arith.constant 0 : i32
    %c0_i32_0 = arith.constant 0 : i32
    %c0_i32_1 = arith.constant 0 : i32
    %c0_i32_2 = arith.constant 0 : i32
    return %c0_i32, %c0_i32_0, %c0_i32_1 : i32, i32, i32
  }
  func.func @transform_4(%arg0: i32) -> (i32, i32, i32) {
    %c0_i32 = arith.constant 0 : i32
    %c0_i32_0 = arith.constant 0 : i32
    %c0_i32_1 = arith.constant 0 : i32
    %c0_i32_2 = arith.constant 0 : i32
    return %c0_i32, %c0_i32_0, %c0_i32_1 : i32, i32, i32
  }
  func.func @transform_5(%arg0: i32) -> (i32, i32, i32) {
    %c0_i32 = arith.constant 0 : i32
    %c0_i32_0 = arith.constant 0 : i32
    %c0_i32_1 = arith.constant 0 : i32
    %c0_i32_2 = arith.constant 0 : i32
    return %c0_i32, %c0_i32_0, %c0_i32_1 : i32, i32, i32
  }
}

module attributes {stable_mosaic.version = 11 : i64} {
  func.func @head_kernel(%arg0: i32, %arg1: memref<2x8x32xf32, #tpu.memory_space<vmem>>, %arg2: memref<1x32xf32, #tpu.memory_space<vmem>>, %arg3: memref<1x32xf32, #tpu.memory_space<vmem>>, %arg4: memref<32x128xf32, #tpu.memory_space<vmem>>, %arg5: memref<1x128xf32, #tpu.memory_space<vmem>>, %arg6: memref<2x128xf32, #tpu.memory_space<vmem>>) attributes {dimension_semantics = [#tpu.dimension_semantics<arbitrary>], iteration_bounds = array<i64: 1>, scalar_prefetch = 0 : i64, scratch_operands = 0 : i64, tpu.core_type = #tpu.core_type<tc>, window_params = [{transform_indices = @transform_0, window_bounds = array<i64: 2, 8, 32>}, {pipeline_mode = #tpu.pipeline_mode<synchronous>, transform_indices = @transform_1, window_bounds = array<i64: 1, 32>}, {pipeline_mode = #tpu.pipeline_mode<synchronous>, transform_indices = @transform_2, window_bounds = array<i64: 1, 32>}, {pipeline_mode = #tpu.pipeline_mode<synchronous>, transform_indices = @transform_3, window_bounds = array<i64: 32, 128>}, {pipeline_mode = #tpu.pipeline_mode<synchronous>, transform_indices = @transform_4, window_bounds = array<i64: 1, 128>}, {pipeline_mode = #tpu.pipeline_mode<synchronous>, transform_indices = @transform_5, window_bounds = array<i64: 2, 128>}]} {
    %c0 = arith.constant 0 : index
    %c0_0 = arith.constant 0 : index
    %c0_1 = arith.constant 0 : index
    %0 = vector.load %arg1[%c0, %c0_0, %c0_1] : memref<2x8x32xf32, #tpu.memory_space<vmem>>, vector<2x8x32xf32>
    %1 = vector.extract_strided_slice %0 {offsets = [0, 0, 0], sizes = [2, 1, 32], strides = [1, 1, 1]} : vector<2x8x32xf32> to vector<2x1x32xf32>
    %2 = vector.shape_cast %1 : vector<2x1x32xf32> to vector<2x32xf32>
    %cst = arith.constant dense<0.000000e+00> : vector<2xf32>
    %3 = vector.multi_reduction <add>, %2, %cst [1] : vector<2x32xf32> to vector<2xf32>
    %4 = vector.shape_cast %3 : vector<2xf32> to vector<2x1xf32>
    %cst_2 = arith.constant 3.200000e+01 : f32
    %5 = vector.broadcast %cst_2 : f32 to vector<2x1xf32>
    %6 = arith.divf %4, %5 : vector<2x1xf32>
    %7 = vector.broadcast %6 : vector<2x1xf32> to vector<2x32xf32>
    %8 = arith.subf %2, %7 : vector<2x32xf32>
    %9 = arith.mulf %8, %8 : vector<2x32xf32>
    %cst_3 = arith.constant dense<0.000000e+00> : vector<2xf32>
    %10 = vector.multi_reduction <add>, %9, %cst_3 [1] : vector<2x32xf32> to vector<2xf32>
    %11 = vector.shape_cast %10 : vector<2xf32> to vector<2x1xf32>
    %cst_4 = arith.constant 3.200000e+01 : f32
    %12 = vector.broadcast %cst_4 : f32 to vector<2x1xf32>
    %13 = arith.divf %11, %12 : vector<2x1xf32>
    %14 = vector.broadcast %6 : vector<2x1xf32> to vector<2x32xf32>
    %15 = arith.subf %2, %14 : vector<2x32xf32>
    %cst_5 = arith.constant 9.99999997E-7 : f32
    %16 = vector.broadcast %cst_5 : f32 to vector<2x1xf32>
    %17 = arith.addf %13, %16 : vector<2x1xf32>
    %18 = math.rsqrt %17 : vector<2x1xf32>
    %19 = vector.broadcast %18 : vector<2x1xf32> to vector<2x32xf32>
    %20 = arith.mulf %15, %19 : vector<2x32xf32>
    %c0_6 = arith.constant 0 : index
    %c0_7 = arith.constant 0 : index
    %21 = vector.load %arg2[%c0_6, %c0_7] : memref<1x32xf32, #tpu.memory_space<vmem>>, vector<1x32xf32>
    %22 = vector.broadcast %21 : vector<1x32xf32> to vector<2x32xf32>
    %23 = arith.mulf %20, %22 : vector<2x32xf32>
    %c0_8 = arith.constant 0 : index
    %c0_9 = arith.constant 0 : index
    %24 = vector.load %arg3[%c0_8, %c0_9] : memref<1x32xf32, #tpu.memory_space<vmem>>, vector<1x32xf32>
    %25 = vector.broadcast %24 : vector<1x32xf32> to vector<2x32xf32>
    %26 = arith.addf %23, %25 : vector<2x32xf32>
    %c0_10 = arith.constant 0 : index
    %c0_11 = arith.constant 0 : index
    %27 = vector.load %arg4[%c0_10, %c0_11] : memref<32x128xf32, #tpu.memory_space<vmem>>, vector<32x128xf32>
    %cst_12 = arith.constant dense<0.000000e+00> : vector<2x128xf32>
    %28 = tpu.matmul %26, %27, %cst_12 {dimension_numbers = #tpu.dot_dimension_numbers<[1], [0], [0], [1], [0, 0, 1, 1], [], []>} : vector<2x32xf32>, vector<32x128xf32>, vector<2x128xf32> -> vector<2x128xf32>
    %c0_13 = arith.constant 0 : index
    %c0_14 = arith.constant 0 : index
    %29 = vector.load %arg5[%c0_13, %c0_14] : memref<1x128xf32, #tpu.memory_space<vmem>>, vector<1x128xf32>
    %30 = vector.broadcast %29 : vector<1x128xf32> to vector<2x128xf32>
    %31 = arith.addf %28, %30 : vector<2x128xf32>
    %c0_15 = arith.constant 0 : index
    %c0_16 = arith.constant 0 : index
    %32 = vector.load %arg6[%c0_15, %c0_16] : memref<2x128xf32, #tpu.memory_space<vmem>>, vector<2x128xf32>
    tpu.vector_store %arg6[%c0_15, %c0_16], %31 {strides = array<i32>} : memref<2x128xf32, #tpu.memory_space<vmem>>, vector<2x128xf32>,
    return
  }
  func.func @transform_0(%arg0: i32) -> (i32, i32, i32) {
    %c0_i32 = arith.constant 0 : i32
    %c0_i32_0 = arith.constant 0 : i32
    %c0_i32_1 = arith.constant 0 : i32
    %c0_i32_2 = arith.constant 0 : i32
    return %c0_i32, %c0_i32_0, %c0_i32_1 : i32, i32, i32
  }
  func.func @transform_1(%arg0: i32) -> (i32, i32) {
    %c0_i32 = arith.constant 0 : i32
    %c0_i32_0 = arith.constant 0 : i32
    %c0_i32_1 = arith.constant 0 : i32
    return %c0_i32, %c0_i32_0 : i32, i32
  }
  func.func @transform_2(%arg0: i32) -> (i32, i32) {
    %c0_i32 = arith.constant 0 : i32
    %c0_i32_0 = arith.constant 0 : i32
    %c0_i32_1 = arith.constant 0 : i32
    return %c0_i32, %c0_i32_0 : i32, i32
  }
  func.func @transform_3(%arg0: i32) -> (i32, i32) {
    %c0_i32 = arith.constant 0 : i32
    %c0_i32_0 = arith.constant 0 : i32
    %c0_i32_1 = arith.constant 0 : i32
    return %c0_i32, %c0_i32_0 : i32, i32
  }
  func.func @transform_4(%arg0: i32) -> (i32, i32) {
    %c0_i32 = arith.constant 0 : i32
    %c0_i32_0 = arith.constant 0 : i32
    %c0_i32_1 = arith.constant 0 : i32
    return %c0_i32, %c0_i32_0 : i32, i32
  }
  func.func @transform_5(%arg0: i32) -> (i32, i32) {
    %c0_i32 = arith.constant 0 : i32
    %c0_i32_0 = arith.constant 0 : i32
    %c0_i32_1 = arith.constant 0 : i32
    return %c0_i32, %c0_i32_0 : i32, i32
  }
}

</mosaic_0001>

<llo_original>
// kernel: vit_forward.3
$region0: #{vit_forward.3}
  #allocation0 [shape = 'u32[]', space=smem, size = 0x4, offset = 0x4, fixed_abs, tag = 'smem constant byte address 0x4 - core index']
  #allocation1 [shape = 'u32[72,128]{1,0:T(1,128)}', space=vmem, size = 0x9000, scoped, tag = 'internal scratch']
  %s0 = inlined_call_operand.vmem [shape: f32[32,64], index: 0, kind: input, shape index: {}]
  %s1 = inlined_call_operand.vmem [shape: bf16[64,32], index: 1, kind: input, shape index: {}]
  %s2 = inlined_call_operand.vmem [shape: f32[1,32], index: 2, kind: input, shape index: {}]
  %s3 = inlined_call_operand.vmem [shape: f32[1,1,32], index: 3, kind: input, shape index: {}]
  %s4 = inlined_call_operand.vmem [shape: f32[1,17,32], index: 4, kind: input, shape index: {}]
  %s5 = inlined_call_operand.vmem [shape: f32[2,24,32], index: 5, kind: output, shape index: {}]
  %s6 = sld [smem:[#allocation0]]
  $region30: #{vit_forward.3} parent=0
    _
  %s8 = ssub.s32 1, %s6
  %s9 = scalar_select 0, %s8, %s6
  // Predicated region
  $region2: #{vit_forward.3} parent=0 // pred_check
    _
  $region3: #{vit_forward.3} parent=0 // pred_check_branch
    %11 = sbr.rel (0) target = $region5
  $region4: #{vit_forward.3} parent=0 // pred_region
    _
  $region5: #{vit_forward.3} parent=0 // pred_fallthru
    _
  // Predicated region
  $region6: #{vit_forward.3} parent=0 // pred_check
    _
  $region7: #{vit_forward.3} parent=0 // pred_check_branch
    %13 = sbr.rel (0) target = $region9
  $region8: #{vit_forward.3} parent=0 // pred_region
    _
  $region9: #{vit_forward.3} parent=0 // pred_fallthru
    _
  // Predicated region
  $region10: #{vit_forward.3} parent=0 // pred_check
    _
  $region11: #{vit_forward.3} parent=0 // pred_check_branch
    %15 = sbr.rel (0) target = $region13
  $region12: #{vit_forward.3} parent=0 // pred_region
    _
  $region13: #{vit_forward.3} parent=0 // pred_fallthru
    _
  // Predicated region
  $region14: #{vit_forward.3} parent=0 // pred_check
    _
  $region15: #{vit_forward.3} parent=0 // pred_check_branch
    %17 = sbr.rel (0) target = $region17
  $region16: #{vit_forward.3} parent=0 // pred_region
    _
  $region17: #{vit_forward.3} parent=0 // pred_fallthru
    _
  // Predicated region
  $region18: #{vit_forward.3} parent=0 // pred_check
    _
  $region19: #{vit_forward.3} parent=0 // pred_check_branch
    %19 = sbr.rel (0) target = $region21
  $region20: #{vit_forward.3} parent=0 // pred_region
    _
  $region21: #{vit_forward.3} parent=0 // pred_fallthru
    _
  %v21 = vld [vmem:[%s0] sm:$0xff]
  %v22 = vld [vmem:[%s0 + $0x8] sm:$0xff]
  %v23 = vld [vmem:[%s0 + $0x10] sm:$0xff]
  %v24 = vld [vmem:[%s0 + $0x18] sm:$0xff]
  %v25 = vpack.c.bf16 %v22, %v21
  %v26 = vpack.c.bf16 %v24, %v23
  %v27 = vld [vmem:[%s1] sm:$0xf]
  %v28 = vld [vmem:[%s1 + $0x4] sm:$0xf]
  %v29 = vld [vmem:[%s1 + $0x8] sm:$0xf]
  %v30 = vld [vmem:[%s1 + $0xc] sm:$0xf]
  %v31 = vld [vmem:[%s1 + $0x10] sm:$0xf]
  %v32 = vld [vmem:[%s1 + $0x14] sm:$0xf]
  %v33 = vld [vmem:[%s1 + $0x18] sm:$0xf]
  %v34 = vld [vmem:[%s1 + $0x1c] sm:$0xf]
  %v35 = vld [vmem:[%s2] sm:$0x1]
  %v37 = vperm.slane %v35, 0
  %v47 = vunpack.c.l.b16 %v27
  %v48 = vunpack.c.l.b16 %v28
  %v49 = vunpack.c.l.b16 %v29
  %v50 = vunpack.c.l.b16 %v30
  %v51 = vunpack.c.l.b16 %v31
  %v52 = vunpack.c.l.b16 %v32
  %v53 = vunpack.c.l.b16 %v33
  %v54 = vunpack.c.l.b16 %v34
  %v55 = vpack.c.b16 %v48, %v47
  %v56 = vpack.c.b16 %v50, %v49
  %v57 = vpack.c.b16 %v52, %v51
  %v58 = vpack.c.b16 %v54, %v53
  %vm63 = vcmask 523264
  %v65 = vsel %vm63, %v25, 0
  %v68 = vsel %vm63, %v26, 0
  %70 = vmatpush.bf16.msra.mxu0 0
  %71 = vmatpush.bf16.msra.mxu0 0
  %72 = vmatpush.bf16.msra.mxu0 0
  %73 = vmatpush.bf16.msra.mxu0 0
  %74 = vmatpush.bf16.msra.mxu0 %v58
  %75 = vmatpush.bf16.msra.mxu0 %v57
  %76 = vmatpush.bf16.msra.mxu0 %v56
  %77 = vmatpush.bf16.msra.mxu0 %v55
  %78 = vmatmul.bf16.gmra.mxu0 %v65
  %v79 = vpop.f32.mrf.mxu0
  %v80 = vadd.f32 %v37, %v79
  %v81 = vpop.f32.mrf.mxu0
  %v82 = vadd.f32 %v37, %v81
  %83 = vmatmul.bf16.gmra.mxu0 %v68
  %v84 = vpop.f32.mrf.mxu0
  %v85 = vadd.f32 %v37, %v84
  %v86 = vpop.f32.mrf.mxu0
  %v87 = vadd.f32 %v37, %v86
  %88 = vdwg.mxu0
  %v89 = vld [vmem:[%s4] sm:$0xff]
  %v90 = vld [vmem:[%s4 + $0x8] sm:$0xff]
  %v91 = vld [vmem:[%s4 + $0x10] sm:$0x1]
  %vm95 = vcmask 1046528
  %v96 = vrot.slane %v89, 1
  %v97 = vrot.slane %v90, 1
  %v98 = vsel %vm95, %v96, %v97
  %v99 = vrot.slane %v91, 1
  %v100 = vsel %vm95, %v97, %v99
  %v103 = vadd.f32 %v80, %v98
  %v104 = vadd.f32 %v82, %v100
  %v105 = vadd.f32 %v85, %v98
  %v106 = vadd.f32 %v87, %v100
  %vm107 = vcmask 261120
  %108 = vst.msk [vmem:[%s5 + $0x1] sm:$0xff] %vm107, %v103
  %109 = vst.msk [vmem:[%s5 + $0x9] sm:$0xff] %vm107, %v104
  %110 = vst.msk [vmem:[%s5 + $0x19] sm:$0xff] %vm107, %v105
  %111 = vst.msk [vmem:[%s5 + $0x21] sm:$0xff] %vm107, %v106
  %v112 = vld [vmem:[%s3] sm:$0x1]
  %v113 = vadd.f32 %v112, %v89
  %vm114 = vcmask 253952
  %115 = vst.msk [vmem:[%s5] sm:$0x1] %vm114, %v113
  %116 = vst.msk [vmem:[%s5 + $0x18] sm:$0x1] %vm114, %v113
  %vm117 = vcmask 260096
  %118 = vst.msk [vmem:[%s5 + $0x11] sm:$0x7f] %vm117, 0.0
  %119 = vst.msk [vmem:[%s5 + $0x29] sm:$0x7f] %vm117, 0.0
  // Predicated region
  $region22: #{vit_forward.3} parent=0 // pred_check
    _
  $region23: #{vit_forward.3} parent=0 // pred_check_branch
    %121 = sbr.rel (0) target = $region25
  $region24: #{vit_forward.3} parent=0 // pred_region
    _
  $region25: #{vit_forward.3} parent=0 // pred_fallthru
    _
  // Predicated region
  $region26: #{vit_forward.3} parent=0 // pred_check
    _
  $region27: #{vit_forward.3} parent=0 // pred_check_branch
    %123 = sbr.rel (0) target = $region29
  $region28: #{vit_forward.3} parent=0 // pred_region
    _
  $region29: #{vit_forward.3} parent=0 // pred_fallthru
    _

// kernel: vit_forward.5
$region0: #{vit_forward.5}
  #allocation0 [shape = 'u32[]', space=smem, size = 0x4, offset = 0x4, fixed_abs, tag = 'smem constant byte address 0x4 - core index']
  #allocation1 [shape = 'u32[72,128]{1,0:T(1,128)}', space=vmem, size = 0x9000, scoped, tag = 'internal scratch']
  %s0 = inlined_call_operand.vmem [shape: f32[2,24,32], index: 0, kind: input, shape index: {}]
  %s1 = inlined_call_operand.vmem [shape: f32[1,32], index: 1, kind: input, shape index: {}]
  %s2 = inlined_call_operand.vmem [shape: f32[1,32], index: 2, kind: input, shape index: {}]
  %s3 = inlined_call_operand.vmem [shape: f32[32,128], index: 3, kind: input, shape index: {}]
  %s4 = inlined_call_operand.vmem [shape: f32[1,128], index: 4, kind: input, shape index: {}]
  %s5 = inlined_call_operand.hbm [shape: f32[2,128], index: 5, kind: output, shape index: {}]
  %s6 = sld [smem:[#allocation0]]
  $region68: #{vit_forward.5} parent=0
    _
  %s8 = ssub.s32 1, %s6
  %s9 = scalar_select 0, %s8, %s6
  $region1: #{vit_forward.5} parent=0
    #allocation2 [shape = 'u8[8192]{0}', space=vmem, size = 0x2000, scoped, tag = 'input window, operand 0, single buffered']
    #allocation3 [shape = 'u8[1024]{0}', space=vmem, size = 0x400, scoped, tag = 'output window, operand 0, single buffered']
    #allocation4 [shape = 's32[1]{0}', space=sflag, size = 0x4, scoped, tag = 'scoped memory for vit_forward.5']
    %10 = vsyncpa [#allocation4], 0
    // Predicated region
    $region2: #{vit_forward.5} parent=1 // pred_check
      _
    $region3: #{vit_forward.5} parent=1 // pred_check_branch
      %12 = sbr.rel (0) target = $region5
    $region4: #{vit_forward.5} parent=1 // pred_region
      // Predicated region
      $region6: #{vit_forward.5} parent=4 // pred_check
        _
      $region7: #{vit_forward.5} parent=4 // pred_check_branch
        %14 = sbr.rel (0) target = $region9
      $region8: #{vit_forward.5} parent=4 // pred_region
        // Predicated region
        $region10: #{vit_forward.5} parent=8 // pred_check
          _
        $region11: #{vit_forward.5} parent=8 // pred_check_branch
          %16 = sbr.rel (0) target = $region13
        $region12: #{vit_forward.5} parent=8 // pred_region
          // Predicated region
          $region25: #{vit_forward.5} parent=12 // pred_check
            _
          $region26: #{vit_forward.5} parent=12 // pred_check_branch
            %34 = sbr.rel (0) target = $region28
          $region27: #{vit_forward.5} parent=12 // pred_region
            loop: start=0, step=1, limit=1
            $region29: #{vit_forward.5} parent=27 // loop_pre_header
              _
            $region30: #{vit_forward.5} parent=27 // loop_header
              %s36 = sphi 0, %s40
              %p37 = scmp.ge.s32.totalorder %s36, 1
              %s41 = sphi %s0, %s0
              %s42 = sphi [#allocation2], [#allocation2]
            $region31: #{vit_forward.5} parent=27 // loop_header_branch
              %39 = sbr.rel (%p37) target = $region35
            $region32: #{vit_forward.5} parent=27 // loop_body
              %v43 = vld [vmem:[%s41] sm:$0xff]
              %44 = vst [vmem:[%s42] sm:$0xff] %v43
              %v45 = vld [vmem:[%s41 + $0x18] sm:$0xff]
              %46 = vst [vmem:[%s42 + $0x8] sm:$0xff] %v45
            $region33: #{vit_forward.5} parent=27 // loop_footer
              %s40 = sadd.s32 1, %s36
            $region34: #{vit_forward.5} parent=27 // loop_footer_branch
              %35 = sbr.rel target = $region30
            $region35: #{vit_forward.5} parent=27 // loop_exit
              _
          $region28: #{vit_forward.5} parent=12 // pred_fallthru
            _
          // Predicated region
          $region36: #{vit_forward.5} parent=12 // pred_check
            _
          $region37: #{vit_forward.5} parent=12 // pred_check_branch
            %48 = sbr.rel target = $region39
          $region38: #{vit_forward.5} parent=12 // pred_region
            _
          $region39: #{vit_forward.5} parent=12 // pred_fallthru
            _
        $region13: #{vit_forward.5} parent=8 // pred_fallthru
          _
        // Predicated region
        $region14: #{vit_forward.5} parent=8 // pred_check
          _
        $region15: #{vit_forward.5} parent=8 // pred_check_branch
          %18 = sbr.rel target = $region17
        $region16: #{vit_forward.5} parent=8 // pred_region
          %s20 = ssub.s32 256, 1
          loop: start=0, step=1, limit=1
          $region18: #{vit_forward.5} parent=16 // loop_pre_header
            _
          $region19: #{vit_forward.5} parent=16 // loop_header
            %s22 = sphi 0, %s26
            %p23 = scmp.ge.s32.totalorder %s22, 1
            %s27 = sphi %s0, %s0
            %s28 = sphi [#allocation2], [#allocation2]
          $region20: #{vit_forward.5} parent=16 // loop_header_branch
            %25 = sbr.rel (%p23) target = $region24
          $region21: #{vit_forward.5} parent=16 // loop_body
            %v29 = vld [vmem:[%s27] sm:%s20]
            %30 = vst [vmem:[%s28] sm:%s20] %v29
            %v31 = vld [vmem:[%s27 + $0x18] sm:%s20]
            %32 = vst [vmem:[%s28 + $0x8] sm:%s20] %v31
          $region22: #{vit_forward.5} parent=16 // loop_footer
            %s26 = sadd.s32 1, %s22
          $region23: #{vit_forward.5} parent=16 // loop_footer_branch
            %21 = sbr.rel target = $region19
          $region24: #{vit_forward.5} parent=16 // loop_exit
            _
        $region17: #{vit_forward.5} parent=8 // pred_fallthru
          _
      $region9: #{vit_forward.5} parent=4 // pred_fallthru
        _
      %49 = vnop
    $region5: #{vit_forward.5} parent=1 // pred_fallthru
      _
    // Predicated region
    $region40: #{vit_forward.5} parent=1 // pred_check
      _
    $region41: #{vit_forward.5} parent=1 // pred_check_branch
      %51 = sbr.rel (0) target = $region43
    $region42: #{vit_forward.5} parent=1 // pred_region
      _
    $region43: #{vit_forward.5} parent=1 // pred_fallthru
      _
    // Predicated region
    $region44: #{vit_forward.5} parent=1 // pred_check
      _
    $region45: #{vit_forward.5} parent=1 // pred_check_branch
      %53 = sbr.rel (0) target = $region47
    $region46: #{vit_forward.5} parent=1 // pred_region
      _
    $region47: #{vit_forward.5} parent=1 // pred_fallthru
      _
    // Predicated region
    $region48: #{vit_forward.5} parent=1 // pred_check
      _
    $region49: #{vit_forward.5} parent=1 // pred_check_branch
      %55 = sbr.rel (0) target = $region51
    $region50: #{vit_forward.5} parent=1 // pred_region
      _
    $region51: #{vit_forward.5} parent=1 // pred_fallthru
      _
    // Predicated region
    $region52: #{vit_forward.5} parent=1 // pred_check
      _
    $region53: #{vit_forward.5} parent=1 // pred_check_branch
      %57 = sbr.rel (0) target = $region55
    $region54: #{vit_forward.5} parent=1 // pred_region
      _
    $region55: #{vit_forward.5} parent=1 // pred_fallthru
      _
    // Predicated region
    $region56: #{vit_forward.5} parent=1 // pred_check
      _
    $region57: #{vit_forward.5} parent=1 // pred_check_branch
      %59 = sbr.rel (0) target = $region59
    $region58: #{vit_forward.5} parent=1 // pred_region
      _
    $region59: #{vit_forward.5} parent=1 // pred_fallthru
      _
    %v60 = vld [vmem:[#allocation2] sm:$0xff]
    %v61 = vld [vmem:[#allocation2 + $0x8] sm:$0xff]
    %v64 = vrot.slane %v61, 7
    %vm65 = vcmask 1041409
    %v66 = vsel %vm65, %v64, %v60
    %vm68 = vcmask 254976
    %v69 = vsel %vm68, %v66, 0.0
    %70 = vadd.xlane.f32.xlu0 %v69
    %v71 = vpop.xlane.xlu0 %70
    %v72 = vrcp.pop 32.0
    %v73 = vmul.f32 32.0, %v72
    %v74 = vsub.f32 1.0, %v73
    %v75 = vmul.f32 %v72, %v74
    %v76 = vadd.f32 %v72, %v75
    %vm77 = vweird.f32 %v72
    %v78 = vsel %vm77, %v72, %v76
    %v79 = vmul.f32 %v71, %v78
    %v81 = vrot.slane %v79, 1
    %v84 = vsub.f32 %v60, %v79
    %v85 = vsub.f32 %v61, %v81
    %v86 = vmul.f32 %v84, %v84
    %v87 = vmul.f32 %v85, %v85
    %v90 = vrot.slane %v87, 7
    %v91 = vsel %vm65, %v90, %v86
    %v93 = vsel %vm68, %v91, 0.0
    %94 = vadd.xlane.f32.xlu0 %v93
    %v95 = vpop.xlane.xlu0 %94
    %v96 = vmul.f32 %v95, %v78
    %v97 = vadd.f32 %v96, 1e-06
    %v98 = vrsqrt.pop %v97
    %v99 = vmul.f32 %v98, %v97
    %v100 = vmul.f32 %v99, %v98
    %v101 = vmul.f32 0.5, %v100
    %v102 = vsub.f32 1.5, %v101
    %v103 = vmul.f32 %v98, %v102
    %vm104 = vweird.f32 %v97
    %vm105 = vweird.f32 %v98
    %vm106 = vmor %vm104, %vm105
    %v107 = vsel %vm106, %v98, %v103
    %v109 = vrot.slane %v107, 1
    %v112 = vmul.f32 %v84, %v107
    %v113 = vmul.f32 %v85, %v109
    %v114 = vld [vmem:[%s1] sm:$0x1]
    %v116 = vperm.slane %v114, 0
    %v118 = vmul.f32 %v112, %v116
    %v119 = vmul.f32 %v113, %v116
    %v120 = vld [vmem:[%s2] sm:$0x1]
    %v122 = vperm.slane %v120, 0
    %v124 = vadd.f32 %v118, %v122
    %v125 = vadd.f32 %v119, %v122
    %v126 = vld [vmem:[%s3] sm:$0xff]
    %v127 = vld [vmem:[%s3 + $0x8] sm:$0xff]
    %v128 = vld [vmem:[%s3 + $0x10] sm:$0xff]
    %v129 = vld [vmem:[%s3 + $0x18] sm:$0xff]
    %v130 = vld [vmem:[%s4] sm:$0x1]
    %v132 = vperm.slane %v130, 0
    %v136 = vrot.slane %v125, 7
    %v137 = vsel %vm65, %v136, %v124
    %vm138 = vcmask 261120
    %v139 = vsel %vm138, %v137, 0
    %141 = vmatpush.msra.mxu0 0.0
    %142 = vmatpush.msra.mxu0 0.0
    %143 = vmatpush.msra.mxu0 0.0
    %144 = vmatpush.msra.mxu0 0.0
    %145 = vmatpush.msra.mxu0 0.0
    %146 = vmatpush.msra.mxu0 0.0
    %147 = vmatpush.msra.mxu0 0.0
    %148 = vmatpush.msra.mxu0 0.0
    %149 = vmatpush.msra.mxu0 0.0
    %150 = vmatpush.msra.mxu0 0.0
    %151 = vmatpush.msra.mxu0 0.0
    %152 = vmatpush.msra.mxu0 0.0
    %153 = vmatpush.msra.mxu0 %v129
    %154 = vmatpush.msra.mxu0 %v128
    %155 = vmatpush.msra.mxu0 %v127
    %156 = vmatpush.msra.mxu0 %v126
    %157 = vmatmul.f32.gmra.mxu0 %v139
    %v158 = vpop.f32.mrf.mxu0
    %v159 = vadd.f32 %v132, %v158
    %160 = vdwg.mxu0
    %161 = vst [vmem:[#allocation3] sm:$0x3] %v159
    // Predicated region
    $region60: #{vit_forward.5} parent=1 // pred_check
      _
    $region61: #{vit_forward.5} parent=1 // pred_check_branch
      %163 = sbr.rel (0) target = $region63
    $region62: #{vit_forward.5} parent=1 // pred_region
      %165 = vsyncadd [#allocation4], 0
      %s167 = sshll.u32 [#allocation3], 4
      %s168 = int_to_ptr.vmem [resolvable:$true] %s167
      %s169 = sshll.u32 %s5, 4
      %s170 = int_to_ptr.hbm [resolvable:$true] %s169
      %172 = dma.vmem_to_hbm [thread:$0]  %s168, 32, %s170, [#allocation4]
    $region63: #{vit_forward.5} parent=1 // pred_fallthru
      _
    // Predicated region
    $region64: #{vit_forward.5} parent=1 // pred_check
      _
    $region65: #{vit_forward.5} parent=1 // pred_check_branch
      %174 = sbr.rel (0) target = $region67
    $region66: #{vit_forward.5} parent=1 // pred_region
      %176 = dma.done [#allocation4], 32
    $region67: #{vit_forward.5} parent=1 // pred_fallthru
      _
    %177 = vsyncpa [#allocation4], 1

// kernel: vit_forward.4
$region0: #{vit_forward.4}
  #allocation0 [shape = 'u32[]', space=smem, size = 0x4, offset = 0x4, fixed_abs, tag = 'smem constant byte address 0x4 - core index']
  #allocation1 [shape = 'u32[72,128]{1,0:T(1,128)}', space=vmem, size = 0x9000, scoped, tag = 'internal scratch']
  #allocation2 [shape = 'f32[2,24,32]{2,1,0:T(8,128)}', space=vmem, size = 0x6000, scoped, tag = 'scratch operand']
  %s0 = inlined_call_operand.vmem [shape: f32[2,24,32], index: 0, kind: input, shape index: {}]
  %s1 = inlined_call_operand.vmem [shape: f32[2,1,32], index: 1, kind: input, shape index: {}]
  %s2 = inlined_call_operand.vmem [shape: f32[2,1,32], index: 2, kind: input, shape index: {}]
  %s3 = inlined_call_operand.vmem [shape: bf16[2,32,96], index: 3, kind: input, shape index: {}]
  %s4 = inlined_call_operand.vmem [shape: f32[2,1,96], index: 4, kind: input, shape index: {}]
  %s5 = inlined_call_operand.vmem [shape: bf16[2,32,32], index: 5, kind: input, shape index: {}]
  %s6 = inlined_call_operand.vmem [shape: f32[2,1,32], index: 6, kind: input, shape index: {}]
  %s7 = inlined_call_operand.vmem [shape: f32[2,1,32], index: 7, kind: input, shape index: {}]
  %s8 = inlined_call_operand.vmem [shape: f32[2,1,32], index: 8, kind: input, shape index: {}]
  %s9 = inlined_call_operand.vmem [shape: bf16[2,32,128], index: 9, kind: input, shape index: {}]
  %s10 = inlined_call_operand.vmem [shape: f32[2,1,128], index: 10, kind: input, shape index: {}]
  %s11 = inlined_call_operand.vmem [shape: bf16[2,128,32], index: 11, kind: input, shape index: {}]
  %s12 = inlined_call_operand.vmem [shape: f32[2,1,32], index: 12, kind: input, shape index: {}]
  %s13 = inlined_call_operand.vmem [shape: f32[2,24,32], index: 13, kind: output, shape index: {}]
  %s14 = sld [smem:[#allocation0]]
  $region89: #{vit_forward.4} parent=0
    _
  %s16 = ssub.s32 1, %s14
  %s17 = scalar_select 0, %s16, %s14
  loop: start=0, step=1, limit=4
  $region2: #{vit_forward.4} parent=0 // loop_pre_header
    _
  $region3: #{vit_forward.4} parent=0 // loop_header
    %s19 = sphi 0, %s23
    %p20 = scmp.ge.s32.totalorder %s19, 4
    %s27 = sphi 0, %s27
    %s29 = sphi 0, %s27
    %s30 = sphi 0, %s29
    %s44 = sphi 0, %s30
    %s50 = sphi 0, %s52
    %s53 = sphi 0, %s50
    %s54 = sphi 0, %s53
    %s70 = sphi 0, %s54
    %s76 = sphi 0, %s78
    %s79 = sphi 0, %s76
    %s80 = sphi 0, %s79
    %s96 = sphi 0, %s80
    %s102 = sphi 0, %s104
    %s105 = sphi 0, %s102
    %s106 = sphi 0, %s105
    %s122 = sphi 0, %s106
    %s128 = sphi 0, %s130
    %s131 = sphi 0, %s128
    %s132 = sphi 0, %s131
    %s148 = sphi 0, %s132
    %s154 = sphi 0, %s156
    %s157 = sphi 0, %s154
    %s158 = sphi 0, %s157
    %s174 = sphi 0, %s158
    %s180 = sphi 0, %s182
    %s183 = sphi 0, %s180
    %s184 = sphi 0, %s183
    %s200 = sphi 0, %s184
    %s206 = sphi 0, %s208
    %s209 = sphi 0, %s206
    %s210 = sphi 0, %s209
    %s226 = sphi 0, %s210
    %s232 = sphi 0, %s234
    %s235 = sphi 0, %s232
    %s236 = sphi 0, %s235
    %s252 = sphi 0, %s236
    %s258 = sphi 0, %s260
    %s261 = sphi 0, %s258
    %s262 = sphi 0, %s261
    %s278 = sphi 0, %s262
    %s284 = sphi 0, %s286
    %s287 = sphi 0, %s284
    %s288 = sphi 0, %s287
    %s304 = sphi 0, %s288
    %s310 = sphi 0, %s312
    %s313 = sphi 0, %s310
    %s314 = sphi 0, %s313
    %s330 = sphi 0, %s314
    %s336 = sphi 0, %s338
    %s339 = sphi 0, %s336
    %s340 = sphi 0, %s339
    %s356 = sphi 0, %s340
    %s360 = sphi 0, %s360
    %s362 = sphi 0, %s360
    %s363 = sphi 0, %s362
    %s377 = sphi 0, %s363
  $region4: #{vit_forward.4} parent=0 // loop_header_branch
    %22 = sbr.rel (%p20) target = $region8
  $region5: #{vit_forward.4} parent=0 // loop_body
    %s24 = ssub.s32 %s19, 1
    %s25 = ssub.s32 %s19, 2
    %s26 = sadd.s32 %s19, 1
    %s28 = sadd.s32 %s27, 1
    %p31 = scmp.eq.s32.totalorder %s19, 1
    %p32 = scmp.ne.s32.totalorder %s27, %s29
    %p33 = scmp.eq.s32.totalorder %s19, 0
    %p34 = por %p32, %p33
    %p35 = scmp.ne.s32.totalorder %s27, %s29
    %p36 = scmp.eq.s32.totalorder %s24, 1
    %p37 = por %p35, %p36
    %p38 = scmp.ne.s32.totalorder %s29, %s30
    %p39 = scmp.eq.s32.totalorder %s24, 0
    %p40 = por %p38, %p39
    %p41 = scmp.ne.s32.totalorder %s29, %s30
    %p42 = scmp.eq.s32.totalorder %s25, 1
    %p43 = por %p41, %p42
    %p45 = scmp.ne.s32.totalorder %s30, %s44
    %p46 = scmp.eq.s32.totalorder %s25, 0
    %p47 = por %p45, %p46
    %s48 = ssub.s32 %s19, %s26
    %p49 = scmp.eq.s32.totalorder %s48, 0
    %s51 = sadd.s32 %s50, 1
    %s52 = scalar_select %p49, %s50, %s51
    %p55 = pneg %p49
    %p56 = scmp.eq.s32.totalorder %s19, 1
    %p57 = por %p55, %p56
    %p58 = scmp.ne.s32.totalorder %s50, %s53
    %p59 = scmp.eq.s32.totalorder %s19, 0
    %p60 = por %p58, %p59
    %p61 = scmp.ne.s32.totalorder %s50, %s53
    %p62 = scmp.eq.s32.totalorder %s24, 1
    %p63 = por %p61, %p62
    %p64 = scmp.ne.s32.totalorder %s53, %s54
    %p65 = scmp.eq.s32.totalorder %s24, 0
    %p66 = por %p64, %p65
    %p67 = scmp.ne.s32.totalorder %s53, %s54
    %p68 = scmp.eq.s32.totalorder %s25, 1
    %p69 = por %p67, %p68
    %p71 = scmp.ne.s32.totalorder %s54, %s70
    %p72 = scmp.eq.s32.totalorder %s25, 0
    %p73 = por %p71, %p72
    %s74 = ssub.s32 %s19, %s26
    %p75 = scmp.eq.s32.totalorder %s74, 0
    %s77 = sadd.s32 %s76, 1
    %s78 = scalar_select %p75, %s76, %s77
    %p81 = pneg %p75
    %p82 = scmp.eq.s32.totalorder %s19, 1
    %p83 = por %p81, %p82
    %p84 = scmp.ne.s32.totalorder %s76, %s79
    %p85 = scmp.eq.s32.totalorder %s19, 0
    %p86 = por %p84, %p85
    %p87 = scmp.ne.s32.totalorder %s76, %s79
    %p88 = scmp.eq.s32.totalorder %s24, 1
    %p89 = por %p87, %p88
    %p90 = scmp.ne.s32.totalorder %s79, %s80
    %p91 = scmp.eq.s32.totalorder %s24, 0
    %p92 = por %p90, %p91
    %p93 = scmp.ne.s32.totalorder %s79, %s80
    %p94 = scmp.eq.s32.totalorder %s25, 1
    %p95 = por %p93, %p94
    %p97 = scmp.ne.s32.totalorder %s80, %s96
    %p98 = scmp.eq.s32.totalorder %s25, 0
    %p99 = por %p97, %p98
    %s100 = ssub.s32 %s19, %s26
    %p101 = scmp.eq.s32.totalorder %s100, 0
    %s103 = sadd.s32 %s102, 1
    %s104 = scalar_select %p101, %s102, %s103
    %p107 = pneg %p101
    %p108 = scmp.eq.s32.totalorder %s19, 1
    %p109 = por %p107, %p108
    %p110 = scmp.ne.s32.totalorder %s102, %s105
    %p111 = scmp.eq.s32.totalorder %s19, 0
    %p112 = por %p110, %p111
    %p113 = scmp.ne.s32.totalorder %s102, %s105
    %p114 = scmp.eq.s32.totalorder %s24, 1
    %p115 = por %p113, %p114
    %p116 = scmp.ne.s32.totalorder %s105, %s106
    %p117 = scmp.eq.s32.totalorder %s24, 0
    %p118 = por %p116, %p117
    %p119 = scmp.ne.s32.totalorder %s105, %s106
    %p120 = scmp.eq.s32.totalorder %s25, 1
    %p121 = por %p119, %p120
    %p123 = scmp.ne.s32.totalorder %s106, %s122
    %p124 = scmp.eq.s32.totalorder %s25, 0
    %p125 = por %p123, %p124
    %s126 = ssub.s32 %s19, %s26
    %p127 = scmp.eq.s32.totalorder %s126, 0
    %s129 = sadd.s32 %s128, 1
    %s130 = scalar_select %p127, %s128, %s129
    %p133 = pneg %p127
    %p134 = scmp.eq.s32.totalorder %s19, 1
    %p135 = por %p133, %p134
    %p136 = scmp.ne.s32.totalorder %s128, %s131
    %p137 = scmp.eq.s32.totalorder %s19, 0
    %p138 = por %p136, %p137
    %p139 = scmp.ne.s32.totalorder %s128, %s131
    %p140 = scmp.eq.s32.totalorder %s24, 1
    %p141 = por %p139, %p140
    %p142 = scmp.ne.s32.totalorder %s131, %s132
    %p143 = scmp.eq.s32.totalorder %s24, 0
    %p144 = por %p142, %p143
    %p145 = scmp.ne.s32.totalorder %s131, %s132
    %p146 = scmp.eq.s32.totalorder %s25, 1
    %p147 = por %p145, %p146
    %p149 = scmp.ne.s32.totalorder %s132, %s148
    %p150 = scmp.eq.s32.totalorder %s25, 0
    %p151 = por %p149, %p150
    %s152 = ssub.s32 %s19, %s26
    %p153 = scmp.eq.s32.totalorder %s152, 0
    %s155 = sadd.s32 %s154, 1
    %s156 = scalar_select %p153, %s154, %s155
    %p159 = pneg %p153
    %p160 = scmp.eq.s32.totalorder %s19, 1
    %p161 = por %p159, %p160
    %p162 = scmp.ne.s32.totalorder %s154, %s157
    %p163 = scmp.eq.s32.totalorder %s19, 0
    %p164 = por %p162, %p163
    %p165 = scmp.ne.s32.totalorder %s154, %s157
    %p166 = scmp.eq.s32.totalorder %s24, 1
    %p167 = por %p165, %p166
    %p168 = scmp.ne.s32.totalorder %s157, %s158
    %p169 = scmp.eq.s32.totalorder %s24, 0
    %p170 = por %p168, %p169
    %p171 = scmp.ne.s32.totalorder %s157, %s158
    %p172 = scmp.eq.s32.totalorder %s25, 1
    %p173 = por %p171, %p172
    %p175 = scmp.ne.s32.totalorder %s158, %s174
    %p176 = scmp.eq.s32.totalorder %s25, 0
    %p177 = por %p175, %p176
    %s178 = ssub.s32 %s19, %s26
    %p179 = scmp.eq.s32.totalorder %s178, 0
    %s181 = sadd.s32 %s180, 1
    %s182 = scalar_select %p179, %s180, %s181
    %p185 = pneg %p179
    %p186 = scmp.eq.s32.totalorder %s19, 1
    %p187 = por %p185, %p186
    %p188 = scmp.ne.s32.totalorder %s180, %s183
    %p189 = scmp.eq.s32.totalorder %s19, 0
    %p190 = por %p188, %p189
    %p191 = scmp.ne.s32.totalorder %s180, %s183
    %p192 = scmp.eq.s32.totalorder %s24, 1
    %p193 = por %p191, %p192
    %p194 = scmp.ne.s32.totalorder %s183, %s184
    %p195 = scmp.eq.s32.totalorder %s24, 0
    %p196 = por %p194, %p195
    %p197 = scmp.ne.s32.totalorder %s183, %s184
    %p198 = scmp.eq.s32.totalorder %s25, 1
    %p199 = por %p197, %p198
    %p201 = scmp.ne.s32.totalorder %s184, %s200
    %p202 = scmp.eq.s32.totalorder %s25, 0
    %p203 = por %p201, %p202
    %s204 = ssub.s32 %s19, %s26
    %p205 = scmp.eq.s32.totalorder %s204, 0
    %s207 = sadd.s32 %s206, 1
    %s208 = scalar_select %p205, %s206, %s207
    %p211 = pneg %p205
    %p212 = scmp.eq.s32.totalorder %s19, 1
    %p213 = por %p211, %p212
    %p214 = scmp.ne.s32.totalorder %s206, %s209
    %p215 = scmp.eq.s32.totalorder %s19, 0
    %p216 = por %p214, %p215
    %p217 = scmp.ne.s32.totalorder %s206, %s209
    %p218 = scmp.eq.s32.totalorder %s24, 1
    %p219 = por %p217, %p218
    %p220 = scmp.ne.s32.totalorder %s209, %s210
    %p221 = scmp.eq.s32.totalorder %s24, 0
    %p222 = por %p220, %p221
    %p223 = scmp.ne.s32.totalorder %s209, %s210
    %p224 = scmp.eq.s32.totalorder %s25, 1
    %p225 = por %p223, %p224
    %p227 = scmp.ne.s32.totalorder %s210, %s226
    %p228 = scmp.eq.s32.totalorder %s25, 0
    %p229 = por %p227, %p228
    %s230 = ssub.s32 %s19, %s26
    %p231 = scmp.eq.s32.totalorder %s230, 0
    %s233 = sadd.s32 %s232, 1
    %s234 = scalar_select %p231, %s232, %s233
    %p237 = pneg %p231
    %p238 = scmp.eq.s32.totalorder %s19, 1
    %p239 = por %p237, %p238
    %p240 = scmp.ne.s32.totalorder %s232, %s235
    %p241 = scmp.eq.s32.totalorder %s19, 0
    %p242 = por %p240, %p241
    %p243 = scmp.ne.s32.totalorder %s232, %s235
    %p244 = scmp.eq.s32.totalorder %s24, 1
    %p245 = por %p243, %p244
    %p246 = scmp.ne.s32.totalorder %s235, %s236
    %p247 = scmp.eq.s32.totalorder %s24, 0
    %p248 = por %p246, %p247
    %p249 = scmp.ne.s32.totalorder %s235, %s236
    %p250 = scmp.eq.s32.totalorder %s25, 1
    %p251 = por %p249, %p250
    %p253 = scmp.ne.s32.totalorder %s236, %s252
    %p254 = scmp.eq.s32.totalorder %s25, 0
    %p255 = por %p253, %p254
    %s256 = ssub.s32 %s19, %s26
    %p257 = scmp.eq.s32.totalorder %s256, 0
    %s259 = sadd.s32 %s258, 1
    %s260 = scalar_select %p257, %s258, %s259
    %p263 = pneg %p257
    %p264 = scmp.eq.s32.totalorder %s19, 1
    %p265 = por %p263, %p264
    %p266 = scmp.ne.s32.totalorder %s258, %s261
    %p267 = scmp.eq.s32.totalorder %s19, 0
    %p268 = por %p266, %p267
    %p269 = scmp.ne.s32.totalorder %s258, %s261
    %p270 = scmp.eq.s32.totalorder %s24, 1
    %p271 = por %p269, %p270
    %p272 = scmp.ne.s32.totalorder %s261, %s262
    %p273 = scmp.eq.s32.totalorder %s24, 0
    %p274 = por %p272, %p273
    %p275 = scmp.ne.s32.totalorder %s261, %s262
    %p276 = scmp.eq.s32.totalorder %s25, 1
    %p277 = por %p275, %p276
    %p279 = scmp.ne.s32.totalorder %s262, %s278
    %p280 = scmp.eq.s32.totalorder %s25, 0
    %p281 = por %p279, %p280
    %s282 = ssub.s32 %s19, %s26
    %p283 = scmp.eq.s32.totalorder %s282, 0
    %s285 = sadd.s32 %s284, 1
    %s286 = scalar_select %p283, %s284, %s285
    %p289 = pneg %p283
    %p290 = scmp.eq.s32.totalorder %s19, 1
    %p291 = por %p289, %p290
    %p292 = scmp.ne.s32.totalorder %s284, %s287
    %p293 = scmp.eq.s32.totalorder %s19, 0
    %p294 = por %p292, %p293
    %p295 = scmp.ne.s32.totalorder %s284, %s287
    %p296 = scmp.eq.s32.totalorder %s24, 1
    %p297 = por %p295, %p296
    %p298 = scmp.ne.s32.totalorder %s287, %s288
    %p299 = scmp.eq.s32.totalorder %s24, 0
    %p300 = por %p298, %p299
    %p301 = scmp.ne.s32.totalorder %s287, %s288
    %p302 = scmp.eq.s32.totalorder %s25, 1
    %p303 = por %p301, %p302
    %p305 = scmp.ne.s32.totalorder %s288, %s304
    %p306 = scmp.eq.s32.totalorder %s25, 0
    %p307 = por %p305, %p306
    %s308 = ssub.s32 %s19, %s26
    %p309 = scmp.eq.s32.totalorder %s308, 0
    %s311 = sadd.s32 %s310, 1
    %s312 = scalar_select %p309, %s310, %s311
    %p315 = pneg %p309
    %p316 = scmp.eq.s32.totalorder %s19, 1
    %p317 = por %p315, %p316
    %p318 = scmp.ne.s32.totalorder %s310, %s313
    %p319 = scmp.eq.s32.totalorder %s19, 0
    %p320 = por %p318, %p319
    %p321 = scmp.ne.s32.totalorder %s310, %s313
    %p322 = scmp.eq.s32.totalorder %s24, 1
    %p323 = por %p321, %p322
    %p324 = scmp.ne.s32.totalorder %s313, %s314
    %p325 = scmp.eq.s32.totalorder %s24, 0
    %p326 = por %p324, %p325
    %p327 = scmp.ne.s32.totalorder %s313, %s314
    %p328 = scmp.eq.s32.totalorder %s25, 1
    %p329 = por %p327, %p328
    %p331 = scmp.ne.s32.totalorder %s314, %s330
    %p332 = scmp.eq.s32.totalorder %s25, 0
    %p333 = por %p331, %p332
    %s334 = ssub.s32 %s19, %s26
    %p335 = scmp.eq.s32.totalorder %s334, 0
    %s337 = sadd.s32 %s336, 1
    %s338 = scalar_select %p335, %s336, %s337
    %p341 = pneg %p335
    %p342 = scmp.eq.s32.totalorder %s19, 1
    %p343 = por %p341, %p342
    %p344 = scmp.ne.s32.totalorder %s336, %s339
    %p345 = scmp.eq.s32.totalorder %s19, 0
    %p346 = por %p344, %p345
    %p347 = scmp.ne.s32.totalorder %s336, %s339
    %p348 = scmp.eq.s32.totalorder %s24, 1
    %p349 = por %p347, %p348
    %p350 = scmp.ne.s32.totalorder %s339, %s340
    %p351 = scmp.eq.s32.totalorder %s24, 0
    %p352 = por %p350, %p351
    %p353 = scmp.ne.s32.totalorder %s339, %s340
    %p354 = scmp.eq.s32.totalorder %s25, 1
    %p355 = por %p353, %p354
    %p357 = scmp.ne.s32.totalorder %s340, %s356
    %p358 = scmp.eq.s32.totalorder %s25, 0
    %p359 = por %p357, %p358
    %s361 = sadd.s32 %s360, 1
    %p364 = scmp.eq.s32.totalorder %s19, 1
    %p365 = scmp.ne.s32.totalorder %s360, %s362
    %p366 = scmp.eq.s32.totalorder %s19, 0
    %p367 = por %p365, %p366
    %p368 = scmp.ne.s32.totalorder %s360, %s362
    %p369 = scmp.eq.s32.totalorder %s24, 1
    %p370 = por %p368, %p369
    %p371 = scmp.ne.s32.totalorder %s362, %s363
    %p372 = scmp.eq.s32.totalorder %s24, 0
    %p373 = por %p371, %p372
    %p374 = scmp.ne.s32.totalorder %s362, %s363
    %p375 = scmp.eq.s32.totalorder %s25, 1
    %p376 = por %p374, %p375
    %p378 = scmp.ne.s32.totalorder %s363, %s377
    %p379 = scmp.eq.s32.totalorder %s25, 0
    %p380 = por %p378, %p379
    %p381 = scmp.le.s32.totalorder 1, %s19
    %p382 = scmp.lt.s32.totalorder %s19, 3
    %p383 = pnand %p381, %p382
    %p384 = pneg %p383
    // Predicated region
    $region9: #{vit_forward.4} parent=5 // pred_check
      _
    $region10: #{vit_forward.4} parent=5 // pred_check_branch
      %386 = sbr.rel (%p383) target = $region12
    $region11: #{vit_forward.4} parent=5 // pred_region
      %s387 = ssub.s32 %s19, 1
      // Predicated region
      $region13: #{vit_forward.4} parent=11 // pred_check
        %p388 = pneg %p40
      $region14: #{vit_forward.4} parent=11 // pred_check_branch
        %390 = sbr.rel (%p388) target = $region16
      $region15: #{vit_forward.4} parent=11 // pred_region
        _
      $region16: #{vit_forward.4} parent=11 // pred_fallthru
        _
    $region12: #{vit_forward.4} parent=5 // pred_fallthru
      _
    %p391 = scmp.lt.s32.totalorder %s19, 2
    // Predicated region
    $region17: #{vit_forward.4} parent=5 // pred_check
      %p392 = pneg %p391
    $region18: #{vit_forward.4} parent=5 // pred_check_branch
      %394 = sbr.rel (%p392) target = $region20
    $region19: #{vit_forward.4} parent=5 // pred_region
      // Predicated region
      $region21: #{vit_forward.4} parent=19 // pred_check
        %p395 = pneg %p60
      $region22: #{vit_forward.4} parent=19 // pred_check_branch
        %397 = sbr.rel (%p395) target = $region24
      $region23: #{vit_forward.4} parent=19 // pred_region
        %p398 = scmp.lt.s32.totalorder %s19, 1
        %s399 = scalar_select %p398, %s19, 1
        %s400 = scalar_lea.vmem %s1, %s399
      $region24: #{vit_forward.4} parent=19 // pred_fallthru
        _
      // Predicated region
      $region25: #{vit_forward.4} parent=19 // pred_check
        %p401 = pneg %p86
      $region26: #{vit_forward.4} parent=19 // pred_check_branch
        %403 = sbr.rel (%p401) target = $region28
      $region27: #{vit_forward.4} parent=19 // pred_region
        %p404 = scmp.lt.s32.totalorder %s19, 1
        %s405 = scalar_select %p404, %s19, 1
        %s406 = scalar_lea.vmem %s2, %s405
      $region28: #{vit_forward.4} parent=19 // pred_fallthru
        _
      // Predicated region
      $region29: #{vit_forward.4} parent=19 // pred_check
        %p407 = pneg %p112
      $region30: #{vit_forward.4} parent=19 // pred_check_branch
        %409 = sbr.rel (%p407) target = $region32
      $region31: #{vit_forward.4} parent=19 // pred_region
        %p410 = scmp.lt.s32.totalorder %s19, 1
        %s411 = scalar_select %p410, %s19, 1
        %s412 = smul.addr %s411, 4
        %s413 = smul.addr %s412, 4
        %s414 = scalar_lea.vmem %s3, %s413
      $region32: #{vit_forward.4} parent=19 // pred_fallthru
        _
      // Predicated region
      $region33: #{vit_forward.4} parent=19 // pred_check
        %p415 = pneg %p138
      $region34: #{vit_forward.4} parent=19 // pred_check_branch
        %417 = sbr.rel (%p415) target = $region36
      $region35: #{vit_forward.4} parent=19 // pred_region
        %p418 = scmp.lt.s32.totalorder %s19, 1
        %s419 = scalar_select %p418, %s19, 1
        %s420 = scalar_lea.vmem %s4, %s419
      $region36: #{vit_forward.4} parent=19 // pred_fallthru
        _
      // Predicated region
      $region37: #{vit_forward.4} parent=19 // pred_check
        %p421 = pneg %p164
      $region38: #{vit_forward.4} parent=19 // pred_check_branch
        %423 = sbr.rel (%p421) target = $region40
      $region39: #{vit_forward.4} parent=19 // pred_region
        %p424 = scmp.lt.s32.totalorder %s19, 1
        %s425 = scalar_select %p424, %s19, 1
        %s426 = smul.addr %s425, 4
        %s427 = smul.addr %s426, 4
        %s428 = scalar_lea.vmem %s5, %s427
      $region40: #{vit_forward.4} parent=19 // pred_fallthru
        _
      // Predicated region
      $region41: #{vit_forward.4} parent=19 // pred_check
        %p429 = pneg %p190
      $region42: #{vit_forward.4} parent=19 // pred_check_branch
        %431 = sbr.rel (%p429) target = $region44
      $region43: #{vit_forward.4} parent=19 // pred_region
        %p432 = scmp.lt.s32.totalorder %s19, 1
        %s433 = scalar_select %p432, %s19, 1
        %s434 = scalar_lea.vmem %s6, %s433
      $region44: #{vit_forward.4} parent=19 // pred_fallthru
        _
      // Predicated region
      $region45: #{vit_forward.4} parent=19 // pred_check
        %p435 = pneg %p216
      $region46: #{vit_forward.4} parent=19 // pred_check_branch
        %437 = sbr.rel (%p435) target = $region48
      $region47: #{vit_forward.4} parent=19 // pred_region
        %p438 = scmp.lt.s32.totalorder %s19, 1
        %s439 = scalar_select %p438, %s19, 1
        %s440 = scalar_lea.vmem %s7, %s439
      $region48: #{vit_forward.4} parent=19 // pred_fallthru
        _
      // Predicated region
      $region49: #{vit_forward.4} parent=19 // pred_check
        %p441 = pneg %p242
      $region50: #{vit_forward.4} parent=19 // pred_check_branch
        %443 = sbr.rel (%p441) target = $region52
      $region51: #{vit_forward.4} parent=19 // pred_region
        %p444 = scmp.lt.s32.totalorder %s19, 1
        %s445 = scalar_select %p444, %s19, 1
        %s446 = scalar_lea.vmem %s8, %s445
      $region52: #{vit_forward.4} parent=19 // pred_fallthru
        _
      // Predicated region
      $region53: #{vit_forward.4} parent=19 // pred_check
        %p447 = pneg %p268
      $region54: #{vit_forward.4} parent=19 // pred_check_branch
        %449 = sbr.rel (%p447) target = $region56
      $region55: #{vit_forward.4} parent=19 // pred_region
        %p450 = scmp.lt.s32.totalorder %s19, 1
        %s451 = scalar_select %p450, %s19, 1
        %s452 = smul.addr %s451, 4
        %s453 = smul.addr %s452, 4
        %s454 = scalar_lea.vmem %s9, %s453
      $region56: #{vit_forward.4} parent=19 // pred_fallthru
        _
      // Predicated region
      $region57: #{vit_forward.4} parent=19 // pred_check
        %p455 = pneg %p294
      $region58: #{vit_forward.4} parent=19 // pred_check_branch
        %457 = sbr.rel (%p455) target = $region60
      $region59: #{vit_forward.4} parent=19 // pred_region
        %p458 = scmp.lt.s32.totalorder %s19, 1
        %s459 = scalar_select %p458, %s19, 1
        %s460 = scalar_lea.vmem %s10, %s459
      $region60: #{vit_forward.4} parent=19 // pred_fallthru
        _
      // Predicated region
      $region61: #{vit_forward.4} parent=19 // pred_check
        %p461 = pneg %p320
      $region62: #{vit_forward.4} parent=19 // pred_check_branch
        %463 = sbr.rel (%p461) target = $region64
      $region63: #{vit_forward.4} parent=19 // pred_region
        %p464 = scmp.lt.s32.totalorder %s19, 1
        %s465 = scalar_select %p464, %s19, 1
        %s466 = smul.addr %s465, 16
        %s467 = smul.addr %s466, 4
        %s468 = scalar_lea.vmem %s11, %s467
      $region64: #{vit_forward.4} parent=19 // pred_fallthru
        _
      // Predicated region
      $region65: #{vit_forward.4} parent=19 // pred_check
        %p469 = pneg %p346
      $region66: #{vit_forward.4} parent=19 // pred_check_branch
        %471 = sbr.rel (%p469) target = $region68
      $region67: #{vit_forward.4} parent=19 // pred_region
        %p472 = scmp.lt.s32.totalorder %s19, 1
        %s473 = scalar_select %p472, %s19, 1
        %s474 = scalar_lea.vmem %s12, %s473
      $region68: #{vit_forward.4} parent=19 // pred_fallthru
        _
    $region20: #{vit_forward.4} parent=5 // pred_fallthru
      _
    %p475 = scmp.le.s32.totalorder 1, %s19
    %p476 = scmp.lt.s32.totalorder %s19, 3
    %p477 = pnand %p475, %p476
    %p478 = pneg %p477
    // Predicated region
    $region69: #{vit_forward.4} parent=5 // pred_check
      _
    $region70: #{vit_forward.4} parent=5 // pred_check_branch
      %480 = sbr.rel (%p477) target = $region72
    $region71: #{vit_forward.4} parent=5 // pred_region
      %s481 = ssub.s32 %s19, 1
      %p482 = pneg %p40
      %p483 = pneg %p37
      %p484 = scmp.lt.s32.totalorder %s24, 1
      %s485 = scalar_select %p484, %s24, 1
      %s486 = scalar_lea.vmem %s1, %s485
      %p487 = pneg %p66
      %p488 = pneg %p63
      %p489 = scmp.lt.s32.totalorder %s24, 1
      %s490 = scalar_select %p489, %s24, 1
      %s491 = scalar_lea.vmem %s2, %s490
      %p492 = pneg %p92
      %p493 = pneg %p89
      %p494 = scmp.lt.s32.totalorder %s24, 1
      %s495 = scalar_select %p494, %s24, 1
      %s496 = smul.addr %s495, 4
      %s497 = smul.addr %s496, 4
      %s498 = scalar_lea.vmem %s3, %s497
      %p499 = pneg %p118
      %p500 = pneg %p115
      %p501 = scmp.lt.s32.totalorder %s24, 1
      %s502 = scalar_select %p501, %s24, 1
      %s503 = scalar_lea.vmem %s4, %s502
      %p504 = pneg %p144
      %p505 = pneg %p141
      %p506 = scmp.lt.s32.totalorder %s24, 1
      %s507 = scalar_select %p506, %s24, 1
      %s508 = smul.addr %s507, 4
      %s509 = smul.addr %s508, 4
      %s510 = scalar_lea.vmem %s5, %s509
      %p511 = pneg %p170
      %p512 = pneg %p167
      %p513 = scmp.lt.s32.totalorder %s24, 1
      %s514 = scalar_select %p513, %s24, 1
      %s515 = scalar_lea.vmem %s6, %s514
      %p516 = pneg %p196
      %p517 = pneg %p193
      %p518 = scmp.lt.s32.totalorder %s24, 1
      %s519 = scalar_select %p518, %s24, 1
      %s520 = scalar_lea.vmem %s7, %s519
      %p521 = pneg %p222
      %p522 = pneg %p219
      %p523 = scmp.lt.s32.totalorder %s24, 1
      %s524 = scalar_select %p523, %s24, 1
      %s525 = scalar_lea.vmem %s8, %s524
      %p526 = pneg %p248
      %p527 = pneg %p245
      %p528 = scmp.lt.s32.totalorder %s24, 1
      %s529 = scalar_select %p528, %s24, 1
      %s530 = smul.addr %s529, 4
      %s531 = smul.addr %s530, 4
      %s532 = scalar_lea.vmem %s9, %s531
      %p533 = pneg %p274
      %p534 = pneg %p271
      %p535 = scmp.lt.s32.totalorder %s24, 1
      %s536 = scalar_select %p535, %s24, 1
      %s537 = scalar_lea.vmem %s10, %s536
      %p538 = pneg %p300
      %p539 = pneg %p297
      %p540 = scmp.lt.s32.totalorder %s24, 1
      %s541 = scalar_select %p540, %s24, 1
      %s542 = smul.addr %s541, 16
      %s543 = smul.addr %s542, 4
      %s544 = scalar_lea.vmem %s11, %s543
      %p545 = pneg %p326
      %p546 = pneg %p323
      %p547 = scmp.lt.s32.totalorder %s24, 1
      %s548 = scalar_select %p547, %s24, 1
      %s549 = scalar_lea.vmem %s12, %s548
      %p550 = pneg %p352
      %p551 = pneg %p349
      %p552 = pneg %p373
      %p553 = pneg %p370
      %p554 = scmp.lt.s32.totalorder %s24, 1
      %s555 = scalar_select %p554, %s24, 1
      %s556 = scalar_lea.vmem %s1, %s555
      %p557 = scmp.lt.s32.totalorder %s24, 1
      %s558 = scalar_select %p557, %s24, 1
      %s559 = scalar_lea.vmem %s2, %s558
      %p560 = scmp.lt.s32.totalorder %s24, 1
      %s561 = scalar_select %p560, %s24, 1
      %s562 = smul.addr %s561, 4
      %s563 = smul.addr %s562, 4
      %s564 = scalar_lea.vmem %s3, %s563
      %p565 = scmp.lt.s32.totalorder %s24, 1
      %s566 = scalar_select %p565, %s24, 1
      %s567 = scalar_lea.vmem %s4, %s566
      %p568 = scmp.lt.s32.totalorder %s24, 1
      %s569 = scalar_select %p568, %s24, 1
      %s570 = smul.addr %s569, 4
      %s571 = smul.addr %s570, 4
      %s572 = scalar_lea.vmem %s5, %s571
      %p573 = scmp.lt.s32.totalorder %s24, 1
      %s574 = scalar_select %p573, %s24, 1
      %s575 = scalar_lea.vmem %s6, %s574
      %p576 = scmp.lt.s32.totalorder %s24, 1
      %s577 = scalar_select %p576, %s24, 1
      %s578 = scalar_lea.vmem %s7, %s577
      %p579 = scmp.lt.s32.totalorder %s24, 1
      %s580 = scalar_select %p579, %s24, 1
      %s581 = scalar_lea.vmem %s8, %s580
      %p582 = scmp.lt.s32.totalorder %s24, 1
      %s583 = scalar_select %p582, %s24, 1
      %s584 = smul.addr %s583, 4
      %s585 = smul.addr %s584, 4
      %s586 = scalar_lea.vmem %s9, %s585
      %p587 = scmp.lt.s32.totalorder %s24, 1
      %s588 = scalar_select %p587, %s24, 1
      %s589 = scalar_lea.vmem %s10, %s588
      %p590 = scmp.lt.s32.totalorder %s24, 1
      %s591 = scalar_select %p590, %s24, 1
      %s592 = smul.addr %s591, 16
      %s593 = smul.addr %s592, 4
      %s594 = scalar_lea.vmem %s11, %s593
      %p595 = scmp.lt.s32.totalorder %s24, 1
      %s596 = scalar_select %p595, %s24, 1
      %s597 = scalar_lea.vmem %s12, %s596
      %p599 = scmp.eq.s32.totalorder %s24, 0
      // Predicated region
      $region73: #{vit_forward.4} parent=71 // pred_check
        %p600 = pneg %p599
      $region74: #{vit_forward.4} parent=71 // pred_check_branch
        %602 = sbr.rel (%p600) target = $region76
      $region75: #{vit_forward.4} parent=71 // pred_region
        %v603 = vld [vmem:[%s0] sm:$0xff]
        %v604 = vld [vmem:[%s0 + $0x8] sm:$0xff]
        %v605 = vld [vmem:[%s0 + $0x10] sm:$0xff]
        %v606 = vld [vmem:[%s0 + $0x18] sm:$0xff]
        %v607 = vld [vmem:[%s0 + $0x20] sm:$0xff]
        %v608 = vld [vmem:[%s0 + $0x28] sm:$0xff]
        %vm609 = vcmask 261120
        %610 = vst.msk [vmem:[%s13] sm:$0xff] %vm609, %v603
        %611 = vst.msk [vmem:[%s13 + $0x8] sm:$0xff] %vm609, %v604
        %612 = vst.msk [vmem:[%s13 + $0x10] sm:$0xff] %vm609, %v605
        %613 = vst.msk [vmem:[%s13 + $0x18] sm:$0xff] %vm609, %v606
        %614 = vst.msk [vmem:[%s13 + $0x20] sm:$0xff] %vm609, %v607
        %615 = vst.msk [vmem:[%s13 + $0x28] sm:$0xff] %vm609, %v608
      $region76: #{vit_forward.4} parent=71 // pred_fallthru
        _
      %v616 = vld [vmem:[%s13] sm:$0xff]
      %v617 = vld [vmem:[%s13 + $0x8] sm:$0xff]
      %v618 = vld [vmem:[%s13 + $0x10] sm:$0xff]
      %v619 = vld [vmem:[%s13 + $0x18] sm:$0xff]
      %v620 = vld [vmem:[%s13 + $0x20] sm:$0xff]
      %v621 = vld [vmem:[%s13 + $0x28] sm:$0xff]
      %v622 = vld [vmem:[%s556] sm:$0x1]
      %v623 = vld [vmem:[%s559] sm:$0x1]
      %vm624 = vcmask 261120
      %v625 = vsel %vm624, %v616, 0.0
      %626 = vadd.xlane.f32.xlu0 %v625
      %v627 = vpop.xlane.xlu0 %626
      %v628 = vsel %vm624, %v617, 0.0
      %629 = vadd.xlane.f32.xlu0 %v628
      %v630 = vpop.xlane.xlu0 %629
      %v631 = vsel %vm624, %v618, 0.0
      %632 = vadd.xlane.f32.xlu0 %v631
      %v633 = vpop.xlane.xlu0 %632
      %v634 = vsel %vm624, %v619, 0.0
      %635 = vadd.xlane.f32.xlu0 %v634
      %v636 = vpop.xlane.xlu0 %635
      %v637 = vsel %vm624, %v620, 0.0
      %638 = vadd.xlane.f32.xlu0 %v637
      %v639 = vpop.xlane.xlu0 %638
      %v640 = vsel %vm624, %v621, 0.0
      %641 = vadd.xlane.f32.xlu0 %v640
      %v642 = vpop.xlane.xlu0 %641
      %v643 = vrcp.pop 32.0
      %v644 = vmul.f32 32.0, %v643
      %v645 = vsub.f32 1.0, %v644
      %v646 = vmul.f32 %v643, %v645
      %v647 = vadd.f32 %v643, %v646
      %vm648 = vweird.f32 %v643
      %v649 = vsel %vm648, %v643, %v647
      %v650 = vmul.f32 %v627, %v649
      %v651 = vmul.f32 %v630, %v649
      %v652 = vmul.f32 %v633, %v649
      %v653 = vmul.f32 %v636, %v649
      %v654 = vmul.f32 %v639, %v649
      %v655 = vmul.f32 %v642, %v649
      %v656 = vsub.f32 %v616, %v650
      %v657 = vsub.f32 %v617, %v651
      %v658 = vsub.f32 %v618, %v652
      %v659 = vsub.f32 %v619, %v653
      %v660 = vsub.f32 %v620, %v654
      %v661 = vsub.f32 %v621, %v655
      %v662 = vmul.f32 %v656, %v656
      %v663 = vmul.f32 %v657, %v657
      %v664 = vmul.f32 %v658, %v658
      %v665 = vmul.f32 %v659, %v659
      %v666 = vmul.f32 %v660, %v660
      %v667 = vmul.f32 %v661, %v661
      %v668 = vsel %vm624, %v662, 0.0
      %669 = vadd.xlane.f32.xlu0 %v668
      %v670 = vpop.xlane.xlu0 %669
      %v671 = vsel %vm624, %v663, 0.0
      %672 = vadd.xlane.f32.xlu0 %v671
      %v673 = vpop.xlane.xlu0 %672
      %v674 = vsel %vm624, %v664, 0.0
      %675 = vadd.xlane.f32.xlu0 %v674
      %v676 = vpop.xlane.xlu0 %675
      %v677 = vsel %vm624, %v665, 0.0
      %678 = vadd.xlane.f32.xlu0 %v677
      %v679 = vpop.xlane.xlu0 %678
      %v680 = vsel %vm624, %v666, 0.0
      %681 = vadd.xlane.f32.xlu0 %v680
      %v682 = vpop.xlane.xlu0 %681
      %v683 = vsel %vm624, %v667, 0.0
      %684 = vadd.xlane.f32.xlu0 %v683
      %v685 = vpop.xlane.xlu0 %684
      %v686 = vmul.f32 %v670, %v649
      %v687 = vmul.f32 %v673, %v649
      %v688 = vmul.f32 %v676, %v649
      %v689 = vmul.f32 %v679, %v649
      %v690 = vmul.f32 %v682, %v649
      %v691 = vmul.f32 %v685, %v649
      %v692 = vadd.f32 %v686, 1e-06
      %v693 = vadd.f32 %v687, 1e-06
      %v694 = vadd.f32 %v688, 1e-06
      %v695 = vadd.f32 %v689, 1e-06
      %v696 = vadd.f32 %v690, 1e-06
      %v697 = vadd.f32 %v691, 1e-06
      %v698 = vrsqrt.pop %v692
      %v699 = vmul.f32 %v698, %v692
      %v700 = vmul.f32 %v699, %v698
      %v701 = vmul.f32 0.5, %v700
      %v702 = vsub.f32 1.5, %v701
      %v703 = vmul.f32 %v698, %v702
      %vm704 = vweird.f32 %v692
      %vm705 = vweird.f32 %v698
      %vm706 = vmor %vm704, %vm705
      %v707 = vsel %vm706, %v698, %v703
      %v708 = vrsqrt.pop %v693
      %v709 = vmul.f32 %v708, %v693
      %v710 = vmul.f32 %v709, %v708
      %v711 = vmul.f32 0.5, %v710
      %v712 = vsub.f32 1.5, %v711
      %v713 = vmul.f32 %v708, %v712
      %vm714 = vweird.f32 %v693
      %vm715 = vweird.f32 %v708
      %vm716 = vmor %vm714, %vm715
      %v717 = vsel %vm716, %v708, %v713
      %v718 = vrsqrt.pop %v694
      %v719 = vmul.f32 %v718, %v694
      %v720 = vmul.f32 %v719, %v718
      %v721 = vmul.f32 0.5, %v720
      %v722 = vsub.f32 1.5, %v721
      %v723 = vmul.f32 %v718, %v722
      %vm724 = vweird.f32 %v694
      %vm725 = vweird.f32 %v718
      %vm726 = vmor %vm724, %vm725
      %v727 = vsel %vm726, %v718, %v723
      %v728 = vrsqrt.pop %v695
      %v729 = vmul.f32 %v728, %v695
      %v730 = vmul.f32 %v729, %v728
      %v731 = vmul.f32 0.5, %v730
      %v732 = vsub.f32 1.5, %v731
      %v733 = vmul.f32 %v728, %v732
      %vm734 = vweird.f32 %v695
      %vm735 = vweird.f32 %v728
      %vm736 = vmor %vm734, %vm735
      %v737 = vsel %vm736, %v728, %v733
      %v738 = vrsqrt.pop %v696
      %v739 = vmul.f32 %v738, %v696
      %v740 = vmul.f32 %v739, %v738
      %v741 = vmul.f32 0.5, %v740
      %v742 = vsub.f32 1.5, %v741
      %v743 = vmul.f32 %v738, %v742
      %vm744 = vweird.f32 %v696
      %vm745 = vweird.f32 %v738
      %vm746 = vmor %vm744, %vm745
      %v747 = vsel %vm746, %v738, %v743
      %v748 = vrsqrt.pop %v697
      %v749 = vmul.f32 %v748, %v697
      %v750 = vmul.f32 %v749, %v748
      %v751 = vmul.f32 0.5, %v750
      %v752 = vsub.f32 1.5, %v751
      %v753 = vmul.f32 %v748, %v752
      %vm754 = vweird.f32 %v697
      %vm755 = vweird.f32 %v748
      %vm756 = vmor %vm754, %vm755
      %v757 = vsel %vm756, %v748, %v753
      %v758 = vmul.f32 %v656, %v707
      %v759 = vmul.f32 %v657, %v717
      %v760 = vmul.f32 %v658, %v727
      %v761 = vmul.f32 %v659, %v737
      %v762 = vmul.f32 %v660, %v747
      %v763 = vmul.f32 %v661, %v757
      %v765 = vperm.slane %v622, 0
      %v767 = vmul.f32 %v758, %v765
      %v768 = vmul.f32 %v759, %v765
      %v769 = vmul.f32 %v760, %v765
      %v770 = vmul.f32 %v761, %v765
      %v771 = vmul.f32 %v762, %v765
      %v772 = vmul.f32 %v763, %v765
      %v774 = vperm.slane %v623, 0
      %v776 = vadd.f32 %v767, %v774
      %v777 = vadd.f32 %v768, %v774
      %v778 = vadd.f32 %v769, %v774
      %v779 = vadd.f32 %v770, %v774
      %v780 = vadd.f32 %v771, %v774
      %v781 = vadd.f32 %v772, %v774
      %v782 = vpack.c.bf16 %v777, %v776
      %v783 = vpack.c.bf16 %v779, %v778
      %v784 = vpack.c.bf16 %v781, %v780
      %v785 = vld [vmem:[%s564] sm:$0xf]
      %v786 = vld [vmem:[%s564 + $0x4] sm:$0xf]
      %v787 = vld [vmem:[%s564 + $0x8] sm:$0xf]
      %v788 = vld [vmem:[%s564 + $0xc] sm:$0xf]
      %v789 = vld [vmem:[%s567] sm:$0x1]
      %v791 = vperm.slane %v789, 0
      %v797 = vunpack.c.l.b16 %v785
      %v798 = vunpack.c.l.b16 %v786
      %v799 = vunpack.c.l.b16 %v787
      %v800 = vunpack.c.l.b16 %v788
      %v801 = vpack.c.b16 %v798, %v797
      %v802 = vpack.c.b16 %v800, %v799
      %v806 = vsel %vm624, %v782, 0
      %v809 = vsel %vm624, %v783, 0
      %v812 = vsel %vm624, %v784, 0
      %814 = vmatpush.bf16.msra.mxu0 0
      %815 = vmatpush.bf16.msra.mxu0 0
      %816 = vmatpush.bf16.msra.mxu0 0
      %817 = vmatpush.bf16.msra.mxu0 0
      %818 = vmatpush.bf16.msra.mxu0 0
      %819 = vmatpush.bf16.msra.mxu0 0
      %820 = vmatpush.bf16.msra.mxu0 %v802
      %821 = vmatpush.bf16.msra.mxu0 %v801
      %822 = vmatmul.bf16.gmra.mxu0 %v806
      %v823 = vpop.f32.mrf.mxu0
      %v824 = vadd.f32 %v791, %v823
      %v825 = vpop.f32.mrf.mxu0
      %v826 = vadd.f32 %v791, %v825
      %827 = vmatmul.bf16.gmra.mxu0 %v809
      %v828 = vpop.f32.mrf.mxu0
      %v829 = vadd.f32 %v791, %v828
      %v830 = vpop.f32.mrf.mxu0
      %v831 = vadd.f32 %v791, %v830
      %832 = vmatmul.bf16.gmra.mxu0 %v812
      %v833 = vpop.f32.mrf.mxu0
      %v834 = vadd.f32 %v791, %v833
      %v835 = vpop.f32.mrf.mxu0
      %v836 = vadd.f32 %v791, %v835
      %837 = vdwg.mxu0
      %v838 = vlaneseq
      %v839 = vand.u32 %v838, 127
      %vm840 = vcmp.lt.s32.totalorder %v839, 17
      %v841 = vsel %vm840, 0.0, -1e+30
      %v842 = vpack.c.bf16 %v824, %v824
      %v843 = vpack.c.bf16 %v826, %v826
      %v844 = vpack.c.bf16 %v829, %v829
      %v845 = vpack.c.bf16 %v831, %v831
      %v846 = vpack.c.bf16 %v834, %v834
      %v847 = vpack.c.bf16 %v836, %v836
      %v851 = vunpack.c.l.b16 %v842
      %v852 = vunpack.c.l.b16 %v843
      %v853 = vunpack.c.l.b16 %v844
      %v854 = vpack.c.b16 %v852, %v851
      %v855 = vpack.c.b16 %v853, %v853
      %856 = vrot.lane.b32.xlu0 %v854, 96
      %v857 = vpop.permute.xlu0 %856
      %858 = vrot.lane.b32.xlu0 %v855, 96
      %v859 = vpop.permute.xlu0 %858
      %vm860 = vcmask 64512
      %v862 = vsel %vm860, %v854, 0
      %v865 = vsel %vm860, %v855, 0
      %v868 = vsel %vm860, %v857, 0
      %v871 = vsel %vm860, %v859, 0
      %873 = vmatpush.bf16.xpose.msra.mxu0 0
      %874 = vmatpush.bf16.xpose.msra.mxu0 0
      %875 = vmatpush.bf16.xpose.msra.mxu0 0
      %876 = vmatpush.bf16.xpose.msra.mxu0 0
      %877 = vmatpush.bf16.xpose.msra.mxu0 0
      %878 = vmatpush.bf16.xpose.msra.mxu0 0
      %879 = vmatpush.bf16.xpose.msra.mxu0 %v871
      %880 = vmatpush.bf16.xpose.msra.mxu0 %v868
      %881 = vmatmul.bf16.gmra.mxu0 %v862
      %v882 = vpop.f32.mrf.mxu0
      %v883 = vadd.f32 0.0, %v882
      %v884 = vpop.f32.mrf.mxu0
      %v885 = vadd.f32 0.0, %v884
      %886 = vmatmul.bf16.gmra.mxu0 %v865
      %v887 = vpop.f32.mrf.mxu0
      %v888 = vadd.f32 0.0, %v887
      %v889 = vpop.f32.mrf.mxu0
      %890 = vdwg.mxu0
      %v894 = vunpack.c.l.b16 %v845
      %v895 = vunpack.c.l.b16 %v846
      %v896 = vunpack.c.l.b16 %v847
      %v897 = vpack.c.b16 %v895, %v894
      %v898 = vpack.c.b16 %v896, %v896
      %899 = vrot.lane.b32.xlu0 %v897, 96
      %v900 = vpop.permute.xlu0 %899
      %901 = vrot.lane.b32.xlu0 %v898, 96
      %v902 = vpop.permute.xlu0 %901
      %v904 = vsel %vm860, %v897, 0
      %v907 = vsel %vm860, %v898, 0
      %v910 = vsel %vm860, %v900, 0
      %v913 = vsel %vm860, %v902, 0
      %915 = vmatpush.bf16.xpose.msra.mxu0 0
      %916 = vmatpush.bf16.xpose.msra.mxu0 0
      %917 = vmatpush.bf16.xpose.msra.mxu0 0
      %918 = vmatpush.bf16.xpose.msra.mxu0 0
      %919 = vmatpush.bf16.xpose.msra.mxu0 0
      %920 = vmatpush.bf16.xpose.msra.mxu0 0
      %921 = vmatpush.bf16.xpose.msra.mxu0 %v913
      %922 = vmatpush.bf16.xpose.msra.mxu0 %v910
      %923 = vmatmul.bf16.gmra.mxu0 %v904
      %v924 = vpop.f32.mrf.mxu0
      %v925 = vadd.f32 0.0, %v924
      %v926 = vpop.f32.mrf.mxu0
      %v927 = vadd.f32 0.0, %v926
      %928 = vmatmul.bf16.gmra.mxu0 %v907
      %v929 = vpop.f32.mrf.mxu0
      %v930 = vadd.f32 0.0, %v929
      %v931 = vpop.f32.mrf.mxu0
      %932 = vdwg.mxu0
      %v933 = vmul.f32 %v883, 0.35355338
      %v934 = vmul.f32 %v885, 0.35355338
      %v935 = vmul.f32 %v888, 0.35355338
      %v936 = vmul.f32 %v925, 0.35355338
      %v937 = vmul.f32 %v927, 0.35355338
      %v938 = vmul.f32 %v930, 0.35355338
      %v939 = vadd.f32 %v933, %v841
      %v940 = vadd.f32 %v934, %v841
      %v941 = vadd.f32 %v935, %v841
      %v942 = vadd.f32 %v936, %v841
      %v943 = vadd.f32 %v937, %v841
      %v944 = vadd.f32 %v938, %v841
      %vm945 = vcmask 195584
      %v946 = vsel %vm945, %v939, -inf
      %947 = vmax.xlane.f32.xlu0 %v946
      %v948 = vpop.xlane.xlu0 %947
      %v949 = vsel %vm945, %v940, -inf
      %950 = vmax.xlane.f32.xlu0 %v949
      %v951 = vpop.xlane.xlu0 %950
      %v952 = vsel %vm945, %v941, -inf
      %953 = vmax.xlane.f32.xlu0 %v952
      %v954 = vpop.xlane.xlu0 %953
      %v955 = vsel %vm945, %v942, -inf
      %956 = vmax.xlane.f32.xlu0 %v955
      %v957 = vpop.xlane.xlu0 %956
      %v958 = vsel %vm945, %v943, -inf
      %959 = vmax.xlane.f32.xlu0 %v958
      %v960 = vpop.xlane.xlu0 %959
      %v961 = vsel %vm945, %v944, -inf
      %962 = vmax.xlane.f32.xlu0 %v961
      %v963 = vpop.xlane.xlu0 %962
      %v964 = vsub.f32 %v939, %v948
      %v965 = vsub.f32 %v940, %v951
      %v966 = vsub.f32 %v941, %v954
      %v967 = vsub.f32 %v942, %v957
      %v968 = vsub.f32 %v943, %v960
      %v969 = vsub.f32 %v944, %v963
      %v970 = vmul.f32 %v964, 1.442695
      %v971 = vpow.pop %v970
      %v972 = vmul.f32 %v965, 1.442695
      %v973 = vpow.pop %v972
      %v974 = vmul.f32 %v966, 1.442695
      %v975 = vpow.pop %v974
      %v976 = vmul.f32 %v967, 1.442695
      %v977 = vpow.pop %v976
      %v978 = vmul.f32 %v968, 1.442695
      %v979 = vpow.pop %v978
      %v980 = vmul.f32 %v969, 1.442695
      %v981 = vpow.pop %v980
      %v982 = vsel %vm945, %v971, 0.0
      %983 = vadd.xlane.f32.xlu0 %v982
      %v984 = vpop.xlane.xlu0 %983
      %v985 = vsel %vm945, %v973, 0.0
      %986 = vadd.xlane.f32.xlu0 %v985
      %v987 = vpop.xlane.xlu0 %986
      %v988 = vsel %vm945, %v975, 0.0
      %989 = vadd.xlane.f32.xlu0 %v988
      %v990 = vpop.xlane.xlu0 %989
      %v991 = vsel %vm945, %v977, 0.0
      %992 = vadd.xlane.f32.xlu0 %v991
      %v993 = vpop.xlane.xlu0 %992
      %v994 = vsel %vm945, %v979, 0.0
      %995 = vadd.xlane.f32.xlu0 %v994
      %v996 = vpop.xlane.xlu0 %995
      %v997 = vsel %vm945, %v981, 0.0
      %998 = vadd.xlane.f32.xlu0 %v997
      %v999 = vpop.xlane.xlu0 %998
      %v1000 = vrcp.pop %v984
      %v1001 = vrcp.pop %v987
      %v1002 = vrcp.pop %v990
      %v1003 = vrcp.pop %v993
      %v1004 = vrcp.pop %v996
      %v1005 = vrcp.pop %v999
      %v1006 = vmul.f32 %v971, %v1000
      %v1007 = vmul.f32 %v973, %v1001
      %v1008 = vmul.f32 %v975, %v1002
      %v1009 = vmul.f32 %v977, %v1003
      %v1010 = vmul.f32 %v979, %v1004
      %v1011 = vmul.f32 %v981, %v1005
      %v1012 = vpack.c.bf16 %v1006, %v1006
      %v1013 = vpack.c.bf16 %v1007, %v1007
      %v1014 = vpack.c.bf16 %v1008, %v1008
      %v1015 = vpack.c.bf16 %v1009, %v1009
      %v1016 = vpack.c.bf16 %v1010, %v1010
      %v1017 = vpack.c.bf16 %v1011, %v1011
      %v1021 = vunpack.c.l.b16 %v1012
      %v1022 = vunpack.c.l.b16 %v1013
      %v1023 = vunpack.c.l.b16 %v1014
      %v1024 = vpack.c.b16 %v1022, %v1021
      %v1025 = vpack.c.b16 %v1023, %v1023
      %1026 = vrot.lane.b32.xlu0 %v854, 64
      %v1027 = vpop.permute.xlu0 %1026
      %1028 = vrot.lane.b32.xlu0 %v855, 64
      %v1029 = vpop.permute.xlu0 %1028
      %v1032 = vsel %vm945, %v1024, 0
      %v1035 = vsel %vm945, %v1025, 0
      %vm1037 = vcmask 1043456
      %v1039 = vsel %vm1037, %v1029, 0
      %1041 = vmatpush.bf16.msra.mxu0 0
      %1042 = vmatpush.bf16.msra.mxu0 0
      %1043 = vmatpush.bf16.msra.mxu0 0
      %1044 = vmatpush.bf16.msra.mxu0 0
      %1045 = vmatpush.bf16.msra.mxu0 0
      %1046 = vmatpush.bf16.msra.mxu0 0
      %1047 = vmatpush.bf16.msra.mxu0 %v1039
      %1048 = vmatpush.bf16.msra.mxu0 %v1027
      %1049 = vmatmul.bf16.gmra.mxu0 %v1032
      %v1050 = vpop.f32.mrf.mxu0
      %v1051 = vadd.f32 0.0, %v1050
      %v1052 = vpop.f32.mrf.mxu0
      %v1053 = vadd.f32 0.0, %v1052
      %1054 = vmatmul.bf16.gmra.mxu0 %v1035
      %v1055 = vpop.f32.mrf.mxu0
      %v1056 = vadd.f32 0.0, %v1055
      %v1057 = vpop.f32.mrf.mxu0
      %1058 = vdwg.mxu0
      %v1062 = vunpack.c.l.b16 %v1015
      %v1063 = vunpack.c.l.b16 %v1016
      %v1064 = vunpack.c.l.b16 %v1017
      %v1065 = vpack.c.b16 %v1063, %v1062
      %v1066 = vpack.c.b16 %v1064, %v1064
      %1067 = vrot.lane.b32.xlu0 %v897, 64
      %v1068 = vpop.permute.xlu0 %1067
      %1069 = vrot.lane.b32.xlu0 %v898, 64
      %v1070 = vpop.permute.xlu0 %1069
      %v1073 = vsel %vm945, %v1065, 0
      %v1076 = vsel %vm945, %v1066, 0
      %v1079 = vsel %vm1037, %v1070, 0
      %1081 = vmatpush.bf16.msra.mxu0 0
      %1082 = vmatpush.bf16.msra.mxu0 0
      %1083 = vmatpush.bf16.msra.mxu0 0
      %1084 = vmatpush.bf16.msra.mxu0 0
      %1085 = vmatpush.bf16.msra.mxu0 0
      %1086 = vmatpush.bf16.msra.mxu0 0
      %1087 = vmatpush.bf16.msra.mxu0 %v1079
      %1088 = vmatpush.bf16.msra.mxu0 %v1068
      %1089 = vmatmul.bf16.gmra.mxu0 %v1073
      %v1090 = vpop.f32.mrf.mxu0
      %v1091 = vadd.f32 0.0, %v1090
      %v1092 = vpop.f32.mrf.mxu0
      %v1093 = vadd.f32 0.0, %v1092
      %1094 = vmatmul.bf16.gmra.mxu0 %v1076
      %v1095 = vpop.f32.mrf.mxu0
      %v1096 = vadd.f32 0.0, %v1095
      %v1097 = vpop.f32.mrf.mxu0
      %1098 = vdwg.mxu0
      %1099 = vst.msk [vmem:[#allocation2] sm:$0xff] %vm860, %v1051
      %1100 = vst.msk [vmem:[#allocation2 + $0x8] sm:$0xff] %vm860, %v1053
      %1101 = vst.msk [vmem:[#allocation2 + $0x10] sm:$0xff] %vm860, %v1056
      %1102 = vst.msk [vmem:[#allocation2 + $0x18] sm:$0xff] %vm860, %v1091
      %1103 = vst.msk [vmem:[#allocation2 + $0x20] sm:$0xff] %vm860, %v1093
      %1104 = vst.msk [vmem:[#allocation2 + $0x28] sm:$0xff] %vm860, %v1096
      %1105 = vrot.lane.b32.xlu0 %v854, 120
      %v1106 = vpop.permute.xlu0 %1105
      %1107 = vrot.lane.b32.xlu0 %v855, 120
      %v1108 = vpop.permute.xlu0 %1107
      %1109 = vrot.lane.b32.xlu0 %v854, 88
      %v1110 = vpop.permute.xlu0 %1109
      %1111 = vrot.lane.b32.xlu0 %v855, 88
      %v1112 = vpop.permute.xlu0 %1111
      %v1114 = vsel %vm860, %v1106, 0
      %v1117 = vsel %vm860, %v1108, 0
      %v1120 = vsel %vm860, %v1110, 0
      %v1123 = vsel %vm860, %v1112, 0
      %1125 = vmatpush.bf16.xpose.msra.mxu0 0
      %1126 = vmatpush.bf16.xpose.msra.mxu0 0
      %1127 = vmatpush.bf16.xpose.msra.mxu0 0
      %1128 = vmatpush.bf16.xpose.msra.mxu0 0
      %1129 = vmatpush.bf16.xpose.msra.mxu0 0
      %1130 = vmatpush.bf16.xpose.msra.mxu0 0
      %1131 = vmatpush.bf16.xpose.msra.mxu0 %v1123
      %1132 = vmatpush.bf16.xpose.msra.mxu0 %v1120
      %1133 = vmatmul.bf16.gmra.mxu0 %v1114
      %v1134 = vpop.f32.mrf.mxu0
      %v1135 = vadd.f32 0.0, %v1134
      %v1136 = vpop.f32.mrf.mxu0
      %v1137 = vadd.f32 0.0, %v1136
      %1138 = vmatmul.bf16.gmra.mxu0 %v1117
      %v1139 = vpop.f32.mrf.mxu0
      %v1140 = vadd.f32 0.0, %v1139
      %v1141 = vpop.f32.mrf.mxu0
      %1142 = vdwg.mxu0
      %1143 = vrot.lane.b32.xlu0 %v897, 120
      %v1144 = vpop.permute.xlu0 %1143
      %1145 = vrot.lane.b32.xlu0 %v898, 120
      %v1146 = vpop.permute.xlu0 %1145
      %1147 = vrot.lane.b32.xlu0 %v897, 88
      %v1148 = vpop.permute.xlu0 %1147
      %1149 = vrot.lane.b32.xlu0 %v898, 88
      %v1150 = vpop.permute.xlu0 %1149
      %v1152 = vsel %vm860, %v1144, 0
      %v1155 = vsel %vm860, %v1146, 0
      %v1158 = vsel %vm860, %v1148, 0
      %v1161 = vsel %vm860, %v1150, 0
      %1163 = vmatpush.bf16.xpose.msra.mxu0 0
      %1164 = vmatpush.bf16.xpose.msra.mxu0 0
      %1165 = vmatpush.bf16.xpose.msra.mxu0 0
      %1166 = vmatpush.bf16.xpose.msra.mxu0 0
      %1167 = vmatpush.bf16.xpose.msra.mxu0 0
      %1168 = vmatpush.bf16.xpose.msra.mxu0 0
      %1169 = vmatpush.bf16.xpose.msra.mxu0 %v1161
      %1170 = vmatpush.bf16.xpose.msra.mxu0 %v1158
      %1171 = vmatmul.bf16.gmra.mxu0 %v1152
      %v1172 = vpop.f32.mrf.mxu0
      %v1173 = vadd.f32 0.0, %v1172
      %v1174 = vpop.f32.mrf.mxu0
      %v1175 = vadd.f32 0.0, %v1174
      %1176 = vmatmul.bf16.gmra.mxu0 %v1155
      %v1177 = vpop.f32.mrf.mxu0
      %v1178 = vadd.f32 0.0, %v1177
      %v1179 = vpop.f32.mrf.mxu0
      %1180 = vdwg.mxu0
      %v1181 = vmul.f32 %v1135, 0.35355338
      %v1182 = vmul.f32 %v1137, 0.35355338
      %v1183 = vmul.f32 %v1140, 0.35355338
      %v1184 = vmul.f32 %v1173, 0.35355338
      %v1185 = vmul.f32 %v1175, 0.35355338
      %v1186 = vmul.f32 %v1178, 0.35355338
      %v1187 = vadd.f32 %v1181, %v841
      %v1188 = vadd.f32 %v1182, %v841
      %v1189 = vadd.f32 %v1183, %v841
      %v1190 = vadd.f32 %v1184, %v841
      %v1191 = vadd.f32 %v1185, %v841
      %v1192 = vadd.f32 %v1186, %v841
      %v1193 = vsel %vm945, %v1187, -inf
      %1194 = vmax.xlane.f32.xlu0 %v1193
      %v1195 = vpop.xlane.xlu0 %1194
      %v1196 = vsel %vm945, %v1188, -inf
      %1197 = vmax.xlane.f32.xlu0 %v1196
      %v1198 = vpop.xlane.xlu0 %1197
      %v1199 = vsel %vm945, %v1189, -inf
      %1200 = vmax.xlane.f32.xlu0 %v1199
      %v1201 = vpop.xlane.xlu0 %1200
      %v1202 = vsel %vm945, %v1190, -inf
      %1203 = vmax.xlane.f32.xlu0 %v1202
      %v1204 = vpop.xlane.xlu0 %1203
      %v1205 = vsel %vm945, %v1191, -inf
      %1206 = vmax.xlane.f32.xlu0 %v1205
      %v1207 = vpop.xlane.xlu0 %1206
      %v1208 = vsel %vm945, %v1192, -inf
      %1209 = vmax.xlane.f32.xlu0 %v1208
      %v1210 = vpop.xlane.xlu0 %1209
      %v1211 = vsub.f32 %v1187, %v1195
      %v1212 = vsub.f32 %v1188, %v1198
      %v1213 = vsub.f32 %v1189, %v1201
      %v1214 = vsub.f32 %v1190, %v1204
      %v1215 = vsub.f32 %v1191, %v1207
      %v1216 = vsub.f32 %v1192, %v1210
      %v1217 = vmul.f32 %v1211, 1.442695
      %v1218 = vpow.pop %v1217
      %v1219 = vmul.f32 %v1212, 1.442695
      %v1220 = vpow.pop %v1219
      %v1221 = vmul.f32 %v1213, 1.442695
      %v1222 = vpow.pop %v1221
      %v1223 = vmul.f32 %v1214, 1.442695
      %v1224 = vpow.pop %v1223
      %v1225 = vmul.f32 %v1215, 1.442695
      %v1226 = vpow.pop %v1225
      %v1227 = vmul.f32 %v1216, 1.442695
      %v1228 = vpow.pop %v1227
      %v1229 = vsel %vm945, %v1218, 0.0
      %1230 = vadd.xlane.f32.xlu0 %v1229
      %v1231 = vpop.xlane.xlu0 %1230
      %v1232 = vsel %vm945, %v1220, 0.0
      %1233 = vadd.xlane.f32.xlu0 %v1232
      %v1234 = vpop.xlane.xlu0 %1233
      %v1235 = vsel %vm945, %v1222, 0.0
      %1236 = vadd.xlane.f32.xlu0 %v1235
      %v1237 = vpop.xlane.xlu0 %1236
      %v1238 = vsel %vm945, %v1224, 0.0
      %1239 = vadd.xlane.f32.xlu0 %v1238
      %v1240 = vpop.xlane.xlu0 %1239
      %v1241 = vsel %vm945, %v1226, 0.0
      %1242 = vadd.xlane.f32.xlu0 %v1241
      %v1243 = vpop.xlane.xlu0 %1242
      %v1244 = vsel %vm945, %v1228, 0.0
      %1245 = vadd.xlane.f32.xlu0 %v1244
      %v1246 = vpop.xlane.xlu0 %1245
      %v1247 = vrcp.pop %v1231
      %v1248 = vrcp.pop %v1234
      %v1249 = vrcp.pop %v1237
      %v1250 = vrcp.pop %v1240
      %v1251 = vrcp.pop %v1243
      %v1252 = vrcp.pop %v1246
      %v1253 = vmul.f32 %v1218, %v1247
      %v1254 = vmul.f32 %v1220, %v1248
      %v1255 = vmul.f32 %v1222, %v1249
      %v1256 = vmul.f32 %v1224, %v1250
      %v1257 = vmul.f32 %v1226, %v1251
      %v1258 = vmul.f32 %v1228, %v1252
      %v1259 = vpack.c.bf16 %v1253, %v1253
      %v1260 = vpack.c.bf16 %v1254, %v1254
      %v1261 = vpack.c.bf16 %v1255, %v1255
      %v1262 = vpack.c.bf16 %v1256, %v1256
      %v1263 = vpack.c.bf16 %v1257, %v1257
      %v1264 = vpack.c.bf16 %v1258, %v1258
      %v1268 = vunpack.c.l.b16 %v1259
      %v1269 = vunpack.c.l.b16 %v1260
      %v1270 = vunpack.c.l.b16 %v1261
      %v1271 = vpack.c.b16 %v1269, %v1268
      %v1272 = vpack.c.b16 %v1270, %v1270
      %1273 = vrot.lane.b32.xlu0 %v854, 56
      %v1274 = vpop.permute.xlu0 %1273
      %1275 = vrot.lane.b32.xlu0 %v855, 56
      %v1276 = vpop.permute.xlu0 %1275
      %v1279 = vsel %vm945, %v1271, 0
      %v1282 = vsel %vm945, %v1272, 0
      %v1285 = vsel %vm1037, %v1276, 0
      %1287 = vmatpush.bf16.msra.mxu0 0
      %1288 = vmatpush.bf16.msra.mxu0 0
      %1289 = vmatpush.bf16.msra.mxu0 0
      %1290 = vmatpush.bf16.msra.mxu0 0
      %1291 = vmatpush.bf16.msra.mxu0 0
      %1292 = vmatpush.bf16.msra.mxu0 0
      %1293 = vmatpush.bf16.msra.mxu0 %v1285
      %1294 = vmatpush.bf16.msra.mxu0 %v1274
      %1295 = vmatmul.bf16.gmra.mxu0 %v1279
      %v1296 = vpop.f32.mrf.mxu0
      %v1297 = vadd.f32 0.0, %v1296
      %v1298 = vpop.f32.mrf.mxu0
      %v1299 = vadd.f32 0.0, %v1298
      %1300 = vmatmul.bf16.gmra.mxu0 %v1282
      %v1301 = vpop.f32.mrf.mxu0
      %v1302 = vadd.f32 0.0, %v1301
      %v1303 = vpop.f32.mrf.mxu0
      %1304 = vdwg.mxu0
      %v1308 = vunpack.c.l.b16 %v1262
      %v1309 = vunpack.c.l.b16 %v1263
      %v1310 = vunpack.c.l.b16 %v1264
      %v1311 = vpack.c.b16 %v1309, %v1308
      %v1312 = vpack.c.b16 %v1310, %v1310
      %1313 = vrot.lane.b32.xlu0 %v897, 56
      %v1314 = vpop.permute.xlu0 %1313
      %1315 = vrot.lane.b32.xlu0 %v898, 56
      %v1316 = vpop.permute.xlu0 %1315
      %v1319 = vsel %vm945, %v1311, 0
      %v1322 = vsel %vm945, %v1312, 0
      %v1325 = vsel %vm1037, %v1316, 0
      %1327 = vmatpush.bf16.msra.mxu0 0
      %1328 = vmatpush.bf16.msra.mxu0 0
      %1329 = vmatpush.bf16.msra.mxu0 0
      %1330 = vmatpush.bf16.msra.mxu0 0
      %1331 = vmatpush.bf16.msra.mxu0 0
      %1332 = vmatpush.bf16.msra.mxu0 0
      %1333 = vmatpush.bf16.msra.mxu0 %v1325
      %1334 = vmatpush.bf16.msra.mxu0 %v1314
      %1335 = vmatmul.bf16.gmra.mxu0 %v1319
      %v1336 = vpop.f32.mrf.mxu0
      %v1337 = vadd.f32 0.0, %v1336
      %v1338 = vpop.f32.mrf.mxu0
      %v1339 = vadd.f32 0.0, %v1338
      %1340 = vmatmul.bf16.gmra.mxu0 %v1322
      %v1341 = vpop.f32.mrf.mxu0
      %v1342 = vadd.f32 0.0, %v1341
      %v1343 = vpop.f32.mrf.mxu0
      %1344 = vdwg.mxu0
      %1351 = vrot.lane.b32.xlu0 %v1297, 8
      %v1352 = vpop.permute.xlu0 %1351
      %1353 = vrot.lane.b32.xlu0 %v1299, 8
      %v1354 = vpop.permute.xlu0 %1353
      %1355 = vrot.lane.b32.xlu0 %v1302, 8
      %v1356 = vpop.permute.xlu0 %1355
      %1357 = vrot.lane.b32.xlu0 %v1337, 8
      %v1358 = vpop.permute.xlu0 %1357
      %1359 = vrot.lane.b32.xlu0 %v1339, 8
      %v1360 = vpop.permute.xlu0 %1359
      %1361 = vrot.lane.b32.xlu0 %v1342, 8
      %v1362 = vpop.permute.xlu0 %1361
      %vm1369 = vcmask 130112
      %1370 = vst.msk [vmem:[#allocation2] sm:$0xff] %vm1369, %v1352
      %1371 = vst.msk [vmem:[#allocation2 + $0x8] sm:$0xff] %vm1369, %v1354
      %1372 = vst.msk [vmem:[#allocation2 + $0x10] sm:$0xff] %vm1369, %v1356
      %1373 = vst.msk [vmem:[#allocation2 + $0x18] sm:$0xff] %vm1369, %v1358
      %1374 = vst.msk [vmem:[#allocation2 + $0x20] sm:$0xff] %vm1369, %v1360
      %1375 = vst.msk [vmem:[#allocation2 + $0x28] sm:$0xff] %vm1369, %v1362
      %1376 = vrot.lane.b32.xlu0 %v854, 112
      %v1377 = vpop.permute.xlu0 %1376
      %1378 = vrot.lane.b32.xlu0 %v855, 112
      %v1379 = vpop.permute.xlu0 %1378
      %1380 = vrot.lane.b32.xlu0 %v854, 80
      %v1381 = vpop.permute.xlu0 %1380
      %1382 = vrot.lane.b32.xlu0 %v855, 80
      %v1383 = vpop.permute.xlu0 %1382
      %v1385 = vsel %vm860, %v1377, 0
      %v1388 = vsel %vm860, %v1379, 0
      %v1391 = vsel %vm860, %v1381, 0
      %v1394 = vsel %vm860, %v1383, 0
      %1396 = vmatpush.bf16.xpose.msra.mxu0 0
      %1397 = vmatpush.bf16.xpose.msra.mxu0 0
      %1398 = vmatpush.bf16.xpose.msra.mxu0 0
      %1399 = vmatpush.bf16.xpose.msra.mxu0 0
      %1400 = vmatpush.bf16.xpose.msra.mxu0 0
      %1401 = vmatpush.bf16.xpose.msra.mxu0 0
      %1402 = vmatpush.bf16.xpose.msra.mxu0 %v1394
      %1403 = vmatpush.bf16.xpose.msra.mxu0 %v1391
      %1404 = vmatmul.bf16.gmra.mxu0 %v1385
      %v1405 = vpop.f32.mrf.mxu0
      %v1406 = vadd.f32 0.0, %v1405
      %v1407 = vpop.f32.mrf.mxu0
      %v1408 = vadd.f32 0.0, %v1407
      %1409 = vmatmul.bf16.gmra.mxu0 %v1388
      %v1410 = vpop.f32.mrf.mxu0
      %v1411 = vadd.f32 0.0, %v1410
      %v1412 = vpop.f32.mrf.mxu0
      %1413 = vdwg.mxu0
      %1414 = vrot.lane.b32.xlu0 %v897, 112
      %v1415 = vpop.permute.xlu0 %1414
      %1416 = vrot.lane.b32.xlu0 %v898, 112
      %v1417 = vpop.permute.xlu0 %1416
      %1418 = vrot.lane.b32.xlu0 %v897, 80
      %v1419 = vpop.permute.xlu0 %1418
      %1420 = vrot.lane.b32.xlu0 %v898, 80
      %v1421 = vpop.permute.xlu0 %1420
      %v1423 = vsel %vm860, %v1415, 0
      %v1426 = vsel %vm860, %v1417, 0
      %v1429 = vsel %vm860, %v1419, 0
      %v1432 = vsel %vm860, %v1421, 0
      %1434 = vmatpush.bf16.xpose.msra.mxu0 0
      %1435 = vmatpush.bf16.xpose.msra.mxu0 0
      %1436 = vmatpush.bf16.xpose.msra.mxu0 0
      %1437 = vmatpush.bf16.xpose.msra.mxu0 0
      %1438 = vmatpush.bf16.xpose.msra.mxu0 0
      %1439 = vmatpush.bf16.xpose.msra.mxu0 0
      %1440 = vmatpush.bf16.xpose.msra.mxu0 %v1432
      %1441 = vmatpush.bf16.xpose.msra.mxu0 %v1429
      %1442 = vmatmul.bf16.gmra.mxu0 %v1423
      %v1443 = vpop.f32.mrf.mxu0
      %v1444 = vadd.f32 0.0, %v1443
      %v1445 = vpop.f32.mrf.mxu0
      %v1446 = vadd.f32 0.0, %v1445
      %1447 = vmatmul.bf16.gmra.mxu0 %v1426
      %v1448 = vpop.f32.mrf.mxu0
      %v1449 = vadd.f32 0.0, %v1448
      %v1450 = vpop.f32.mrf.mxu0
      %1451 = vdwg.mxu0
      %v1452 = vmul.f32 %v1406, 0.35355338
      %v1453 = vmul.f32 %v1408, 0.35355338
      %v1454 = vmul.f32 %v1411, 0.35355338
      %v1455 = vmul.f32 %v1444, 0.35355338
      %v1456 = vmul.f32 %v1446, 0.35355338
      %v1457 = vmul.f32 %v1449, 0.35355338
      %v1458 = vadd.f32 %v1452, %v841
      %v1459 = vadd.f32 %v1453, %v841
      %v1460 = vadd.f32 %v1454, %v841
      %v1461 = vadd.f32 %v1455, %v841
      %v1462 = vadd.f32 %v1456, %v841
      %v1463 = vadd.f32 %v1457, %v841
      %v1464 = vsel %vm945, %v1458, -inf
      %1465 = vmax.xlane.f32.xlu0 %v1464
      %v1466 = vpop.xlane.xlu0 %1465
      %v1467 = vsel %vm945, %v1459, -inf
      %1468 = vmax.xlane.f32.xlu0 %v1467
      %v1469 = vpop.xlane.xlu0 %1468
      %v1470 = vsel %vm945, %v1460, -inf
      %1471 = vmax.xlane.f32.xlu0 %v1470
      %v1472 = vpop.xlane.xlu0 %1471
      %v1473 = vsel %vm945, %v1461, -inf
      %1474 = vmax.xlane.f32.xlu0 %v1473
      %v1475 = vpop.xlane.xlu0 %1474
      %v1476 = vsel %vm945, %v1462, -inf
      %1477 = vmax.xlane.f32.xlu0 %v1476
      %v1478 = vpop.xlane.xlu0 %1477
      %v1479 = vsel %vm945, %v1463, -inf
      %1480 = vmax.xlane.f32.xlu0 %v1479
      %v1481 = vpop.xlane.xlu0 %1480
      %v1482 = vsub.f32 %v1458, %v1466
      %v1483 = vsub.f32 %v1459, %v1469
      %v1484 = vsub.f32 %v1460, %v1472
      %v1485 = vsub.f32 %v1461, %v1475
      %v1486 = vsub.f32 %v1462, %v1478
      %v1487 = vsub.f32 %v1463, %v1481
      %v1488 = vmul.f32 %v1482, 1.442695
      %v1489 = vpow.pop %v1488
      %v1490 = vmul.f32 %v1483, 1.442695
      %v1491 = vpow.pop %v1490
      %v1492 = vmul.f32 %v1484, 1.442695
      %v1493 = vpow.pop %v1492
      %v1494 = vmul.f32 %v1485, 1.442695
      %v1495 = vpow.pop %v1494
      %v1496 = vmul.f32 %v1486, 1.442695
      %v1497 = vpow.pop %v1496
      %v1498 = vmul.f32 %v1487, 1.442695
      %v1499 = vpow.pop %v1498
      %v1500 = vsel %vm945, %v1489, 0.0
      %1501 = vadd.xlane.f32.xlu0 %v1500
      %v1502 = vpop.xlane.xlu0 %1501
      %v1503 = vsel %vm945, %v1491, 0.0
      %1504 = vadd.xlane.f32.xlu0 %v1503
      %v1505 = vpop.xlane.xlu0 %1504
      %v1506 = vsel %vm945, %v1493, 0.0
      %1507 = vadd.xlane.f32.xlu0 %v1506
      %v1508 = vpop.xlane.xlu0 %1507
      %v1509 = vsel %vm945, %v1495, 0.0
      %1510 = vadd.xlane.f32.xlu0 %v1509
      %v1511 = vpop.xlane.xlu0 %1510
      %v1512 = vsel %vm945, %v1497, 0.0
      %1513 = vadd.xlane.f32.xlu0 %v1512
      %v1514 = vpop.xlane.xlu0 %1513
      %v1515 = vsel %vm945, %v1499, 0.0
      %1516 = vadd.xlane.f32.xlu0 %v1515
      %v1517 = vpop.xlane.xlu0 %1516
      %v1518 = vrcp.pop %v1502
      %v1519 = vrcp.pop %v1505
      %v1520 = vrcp.pop %v1508
      %v1521 = vrcp.pop %v1511
      %v1522 = vrcp.pop %v1514
      %v1523 = vrcp.pop %v1517
      %v1524 = vmul.f32 %v1489, %v1518
      %v1525 = vmul.f32 %v1491, %v1519
      %v1526 = vmul.f32 %v1493, %v1520
      %v1527 = vmul.f32 %v1495, %v1521
      %v1528 = vmul.f32 %v1497, %v1522
      %v1529 = vmul.f32 %v1499, %v1523
      %v1530 = vpack.c.bf16 %v1524, %v1524
      %v1531 = vpack.c.bf16 %v1525, %v1525
      %v1532 = vpack.c.bf16 %v1526, %v1526
      %v1533 = vpack.c.bf16 %v1527, %v1527
      %v1534 = vpack.c.bf16 %v1528, %v1528
      %v1535 = vpack.c.bf16 %v1529, %v1529
      %v1539 = vunpack.c.l.b16 %v1530
      %v1540 = vunpack.c.l.b16 %v1531
      %v1541 = vunpack.c.l.b16 %v1532
      %v1542 = vpack.c.b16 %v1540, %v1539
      %v1543 = vpack.c.b16 %v1541, %v1541
      %1544 = vrot.lane.b32.xlu0 %v854, 48
      %v1545 = vpop.permute.xlu0 %1544
      %1546 = vrot.lane.b32.xlu0 %v855, 48
      %v1547 = vpop.permute.xlu0 %1546
      %v1550 = vsel %vm945, %v1542, 0
      %v1553 = vsel %vm945, %v1543, 0
      %v1556 = vsel %vm1037, %v1547, 0
      %1558 = vmatpush.bf16.msra.mxu0 0
      %1559 = vmatpush.bf16.msra.mxu0 0
      %1560 = vmatpush.bf16.msra.mxu0 0
      %1561 = vmatpush.bf16.msra.mxu0 0
      %1562 = vmatpush.bf16.msra.mxu0 0
      %1563 = vmatpush.bf16.msra.mxu0 0
      %1564 = vmatpush.bf16.msra.mxu0 %v1556
      %1565 = vmatpush.bf16.msra.mxu0 %v1545
      %1566 = vmatmul.bf16.gmra.mxu0 %v1550
      %v1567 = vpop.f32.mrf.mxu0
      %v1568 = vadd.f32 0.0, %v1567
      %v1569 = vpop.f32.mrf.mxu0
      %v1570 = vadd.f32 0.0, %v1569
      %1571 = vmatmul.bf16.gmra.mxu0 %v1553
      %v1572 = vpop.f32.mrf.mxu0
      %v1573 = vadd.f32 0.0, %v1572
      %v1574 = vpop.f32.mrf.mxu0
      %1575 = vdwg.mxu0
      %v1579 = vunpack.c.l.b16 %v1533
      %v1580 = vunpack.c.l.b16 %v1534
      %v1581 = vunpack.c.l.b16 %v1535
      %v1582 = vpack.c.b16 %v1580, %v1579
      %v1583 = vpack.c.b16 %v1581, %v1581
      %1584 = vrot.lane.b32.xlu0 %v897, 48
      %v1585 = vpop.permute.xlu0 %1584
      %1586 = vrot.lane.b32.xlu0 %v898, 48
      %v1587 = vpop.permute.xlu0 %1586
      %v1590 = vsel %vm945, %v1582, 0
      %v1593 = vsel %vm945, %v1583, 0
      %v1596 = vsel %vm1037, %v1587, 0
      %1598 = vmatpush.bf16.msra.mxu0 0
      %1599 = vmatpush.bf16.msra.mxu0 0
      %1600 = vmatpush.bf16.msra.mxu0 0
      %1601 = vmatpush.bf16.msra.mxu0 0
      %1602 = vmatpush.bf16.msra.mxu0 0
      %1603 = vmatpush.bf16.msra.mxu0 0
      %1604 = vmatpush.bf16.msra.mxu0 %v1596
      %1605 = vmatpush.bf16.msra.mxu0 %v1585
      %1606 = vmatmul.bf16.gmra.mxu0 %v1590
      %v1607 = vpop.f32.mrf.mxu0
      %v1608 = vadd.f32 0.0, %v1607
      %v1609 = vpop.f32.mrf.mxu0
      %v1610 = vadd.f32 0.0, %v1609
      %1611 = vmatmul.bf16.gmra.mxu0 %v1593
      %v1612 = vpop.f32.mrf.mxu0
      %v1613 = vadd.f32 0.0, %v1612
      %v1614 = vpop.f32.mrf.mxu0
      %1615 = vdwg.mxu0
      %1622 = vrot.lane.b32.xlu0 %v1568, 16
      %v1623 = vpop.permute.xlu0 %1622
      %1624 = vrot.lane.b32.xlu0 %v1570, 16
      %v1625 = vpop.permute.xlu0 %1624
      %1626 = vrot.lane.b32.xlu0 %v1573, 16
      %v1627 = vpop.permute.xlu0 %1626
      %1628 = vrot.lane.b32.xlu0 %v1608, 16
      %v1629 = vpop.permute.xlu0 %1628
      %1630 = vrot.lane.b32.xlu0 %v1610, 16
      %v1631 = vpop.permute.xlu0 %1630
      %1632 = vrot.lane.b32.xlu0 %v1613, 16
      %v1633 = vpop.permute.xlu0 %1632
      %vm1640 = vcmask 195712
      %1641 = vst.msk [vmem:[#allocation2] sm:$0xff] %vm1640, %v1623
      %1642 = vst.msk [vmem:[#allocation2 + $0x8] sm:$0xff] %vm1640, %v1625
      %1643 = vst.msk [vmem:[#allocation2 + $0x10] sm:$0xff] %vm1640, %v1627
      %1644 = vst.msk [vmem:[#allocation2 + $0x18] sm:$0xff] %vm1640, %v1629
      %1645 = vst.msk [vmem:[#allocation2 + $0x20] sm:$0xff] %vm1640, %v1631
      %1646 = vst.msk [vmem:[#allocation2 + $0x28] sm:$0xff] %vm1640, %v1633
      %1647 = vrot.lane.b32.xlu0 %v854, 104
      %v1648 = vpop.permute.xlu0 %1647
      %1649 = vrot.lane.b32.xlu0 %v855, 104
      %v1650 = vpop.permute.xlu0 %1649
      %1651 = vrot.lane.b32.xlu0 %v854, 72
      %v1652 = vpop.permute.xlu0 %1651
      %1653 = vrot.lane.b32.xlu0 %v855, 72
      %v1654 = vpop.permute.xlu0 %1653
      %v1656 = vsel %vm860, %v1648, 0
      %v1659 = vsel %vm860, %v1650, 0
      %v1662 = vsel %vm860, %v1652, 0
      %v1665 = vsel %vm860, %v1654, 0
      %1667 = vmatpush.bf16.xpose.msra.mxu0 0
      %1668 = vmatpush.bf16.xpose.msra.mxu0 0
      %1669 = vmatpush.bf16.xpose.msra.mxu0 0
      %1670 = vmatpush.bf16.xpose.msra.mxu0 0
      %1671 = vmatpush.bf16.xpose.msra.mxu0 0
      %1672 = vmatpush.bf16.xpose.msra.mxu0 0
      %1673 = vmatpush.bf16.xpose.msra.mxu0 %v1665
      %1674 = vmatpush.bf16.xpose.msra.mxu0 %v1662
      %1675 = vmatmul.bf16.gmra.mxu0 %v1656
      %v1676 = vpop.f32.mrf.mxu0
      %v1677 = vadd.f32 0.0, %v1676
      %v1678 = vpop.f32.mrf.mxu0
      %v1679 = vadd.f32 0.0, %v1678
      %1680 = vmatmul.bf16.gmra.mxu0 %v1659
      %v1681 = vpop.f32.mrf.mxu0
      %v1682 = vadd.f32 0.0, %v1681
      %v1683 = vpop.f32.mrf.mxu0
      %1684 = vdwg.mxu0
      %1685 = vrot.lane.b32.xlu0 %v897, 104
      %v1686 = vpop.permute.xlu0 %1685
      %1687 = vrot.lane.b32.xlu0 %v898, 104
      %v1688 = vpop.permute.xlu0 %1687
      %1689 = vrot.lane.b32.xlu0 %v897, 72
      %v1690 = vpop.permute.xlu0 %1689
      %1691 = vrot.lane.b32.xlu0 %v898, 72
      %v1692 = vpop.permute.xlu0 %1691
      %v1694 = vsel %vm860, %v1686, 0
      %v1697 = vsel %vm860, %v1688, 0
      %v1700 = vsel %vm860, %v1690, 0
      %v1703 = vsel %vm860, %v1692, 0
      %1705 = vmatpush.bf16.xpose.msra.mxu0 0
      %1706 = vmatpush.bf16.xpose.msra.mxu0 0
      %1707 = vmatpush.bf16.xpose.msra.mxu0 0
      %1708 = vmatpush.bf16.xpose.msra.mxu0 0
      %1709 = vmatpush.bf16.xpose.msra.mxu0 0
      %1710 = vmatpush.bf16.xpose.msra.mxu0 0
      %1711 = vmatpush.bf16.xpose.msra.mxu0 %v1703
      %1712 = vmatpush.bf16.xpose.msra.mxu0 %v1700
      %1713 = vmatmul.bf16.gmra.mxu0 %v1694
      %v1714 = vpop.f32.mrf.mxu0
      %v1715 = vadd.f32 0.0, %v1714
      %v1716 = vpop.f32.mrf.mxu0
      %v1717 = vadd.f32 0.0, %v1716
      %1718 = vmatmul.bf16.gmra.mxu0 %v1697
      %v1719 = vpop.f32.mrf.mxu0
      %v1720 = vadd.f32 0.0, %v1719
      %v1721 = vpop.f32.mrf.mxu0
      %1722 = vdwg.mxu0
      %v1723 = vmul.f32 %v1677, 0.35355338
      %v1724 = vmul.f32 %v1679, 0.35355338
      %v1725 = vmul.f32 %v1682, 0.35355338
      %v1726 = vmul.f32 %v1715, 0.35355338
      %v1727 = vmul.f32 %v1717, 0.35355338
      %v1728 = vmul.f32 %v1720, 0.35355338
      %v1729 = vadd.f32 %v1723, %v841
      %v1730 = vadd.f32 %v1724, %v841
      %v1731 = vadd.f32 %v1725, %v841
      %v1732 = vadd.f32 %v1726, %v841
      %v1733 = vadd.f32 %v1727, %v841
      %v1734 = vadd.f32 %v1728, %v841
      %v1735 = vsel %vm945, %v1729, -inf
      %1736 = vmax.xlane.f32.xlu0 %v1735
      %v1737 = vpop.xlane.xlu0 %1736
      %v1738 = vsel %vm945, %v1730, -inf
      %1739 = vmax.xlane.f32.xlu0 %v1738
      %v1740 = vpop.xlane.xlu0 %1739
      %v1741 = vsel %vm945, %v1731, -inf
      %1742 = vmax.xlane.f32.xlu0 %v1741
      %v1743 = vpop.xlane.xlu0 %1742
      %v1744 = vsel %vm945, %v1732, -inf
      %1745 = vmax.xlane.f32.xlu0 %v1744
      %v1746 = vpop.xlane.xlu0 %1745
      %v1747 = vsel %vm945, %v1733, -inf
      %1748 = vmax.xlane.f32.xlu0 %v1747
      %v1749 = vpop.xlane.xlu0 %1748
      %v1750 = vsel %vm945, %v1734, -inf
      %1751 = vmax.xlane.f32.xlu0 %v1750
      %v1752 = vpop.xlane.xlu0 %1751
      %v1753 = vsub.f32 %v1729, %v1737
      %v1754 = vsub.f32 %v1730, %v1740
      %v1755 = vsub.f32 %v1731, %v1743
      %v1756 = vsub.f32 %v1732, %v1746
      %v1757 = vsub.f32 %v1733, %v1749
      %v1758 = vsub.f32 %v1734, %v1752
      %v1759 = vmul.f32 %v1753, 1.442695
      %v1760 = vpow.pop %v1759
      %v1761 = vmul.f32 %v1754, 1.442695
      %v1762 = vpow.pop %v1761
      %v1763 = vmul.f32 %v1755, 1.442695
      %v1764 = vpow.pop %v1763
      %v1765 = vmul.f32 %v1756, 1.442695
      %v1766 = vpow.pop %v1765
      %v1767 = vmul.f32 %v1757, 1.442695
      %v1768 = vpow.pop %v1767
      %v1769 = vmul.f32 %v1758, 1.442695
      %v1770 = vpow.pop %v1769
      %v1771 = vsel %vm945, %v1760, 0.0
      %1772 = vadd.xlane.f32.xlu0 %v1771
      %v1773 = vpop.xlane.xlu0 %1772
      %v1774 = vsel %vm945, %v1762, 0.0
      %1775 = vadd.xlane.f32.xlu0 %v1774
      %v1776 = vpop.xlane.xlu0 %1775
      %v1777 = vsel %vm945, %v1764, 0.0
      %1778 = vadd.xlane.f32.xlu0 %v1777
      %v1779 = vpop.xlane.xlu0 %1778
      %v1780 = vsel %vm945, %v1766, 0.0
      %1781 = vadd.xlane.f32.xlu0 %v1780
      %v1782 = vpop.xlane.xlu0 %1781
      %v1783 = vsel %vm945, %v1768, 0.0
      %1784 = vadd.xlane.f32.xlu0 %v1783
      %v1785 = vpop.xlane.xlu0 %1784
      %v1786 = vsel %vm945, %v1770, 0.0
      %1787 = vadd.xlane.f32.xlu0 %v1786
      %v1788 = vpop.xlane.xlu0 %1787
      %v1789 = vrcp.pop %v1773
      %v1790 = vrcp.pop %v1776
      %v1791 = vrcp.pop %v1779
      %v1792 = vrcp.pop %v1782
      %v1793 = vrcp.pop %v1785
      %v1794 = vrcp.pop %v1788
      %v1795 = vmul.f32 %v1760, %v1789
      %v1796 = vmul.f32 %v1762, %v1790
      %v1797 = vmul.f32 %v1764, %v1791
      %v1798 = vmul.f32 %v1766, %v1792
      %v1799 = vmul.f32 %v1768, %v1793
      %v1800 = vmul.f32 %v1770, %v1794
      %v1801 = vpack.c.bf16 %v1795, %v1795
      %v1802 = vpack.c.bf16 %v1796, %v1796
      %v1803 = vpack.c.bf16 %v1797, %v1797
      %v1804 = vpack.c.bf16 %v1798, %v1798
      %v1805 = vpack.c.bf16 %v1799, %v1799
      %v1806 = vpack.c.bf16 %v1800, %v1800
      %v1810 = vunpack.c.l.b16 %v1801
      %v1811 = vunpack.c.l.b16 %v1802
      %v1812 = vunpack.c.l.b16 %v1803
      %v1813 = vpack.c.b16 %v1811, %v1810
      %v1814 = vpack.c.b16 %v1812, %v1812
      %1815 = vrot.lane.b32.xlu0 %v854, 40
      %v1816 = vpop.permute.xlu0 %1815
      %1817 = vrot.lane.b32.xlu0 %v855, 40
      %v1818 = vpop.permute.xlu0 %1817
      %v1821 = vsel %vm945, %v1813, 0
      %v1824 = vsel %vm945, %v1814, 0
      %v1827 = vsel %vm1037, %v1818, 0
      %1829 = vmatpush.bf16.msra.mxu0 0
      %1830 = vmatpush.bf16.msra.mxu0 0
      %1831 = vmatpush.bf16.msra.mxu0 0
      %1832 = vmatpush.bf16.msra.mxu0 0
      %1833 = vmatpush.bf16.msra.mxu0 0
      %1834 = vmatpush.bf16.msra.mxu0 0
      %1835 = vmatpush.bf16.msra.mxu0 %v1827
      %1836 = vmatpush.bf16.msra.mxu0 %v1816
      %1837 = vmatmul.bf16.gmra.mxu0 %v1821
      %v1838 = vpop.f32.mrf.mxu0
      %v1839 = vadd.f32 0.0, %v1838
      %v1840 = vpop.f32.mrf.mxu0
      %v1841 = vadd.f32 0.0, %v1840
      %1842 = vmatmul.bf16.gmra.mxu0 %v1824
      %v1843 = vpop.f32.mrf.mxu0
      %v1844 = vadd.f32 0.0, %v1843
      %v1845 = vpop.f32.mrf.mxu0
      %1846 = vdwg.mxu0
      %v1850 = vunpack.c.l.b16 %v1804
      %v1851 = vunpack.c.l.b16 %v1805
      %v1852 = vunpack.c.l.b16 %v1806
      %v1853 = vpack.c.b16 %v1851, %v1850
      %v1854 = vpack.c.b16 %v1852, %v1852
      %1855 = vrot.lane.b32.xlu0 %v897, 40
      %v1856 = vpop.permute.xlu0 %1855
      %1857 = vrot.lane.b32.xlu0 %v898, 40
      %v1858 = vpop.permute.xlu0 %1857
      %v1861 = vsel %vm945, %v1853, 0
      %v1864 = vsel %vm945, %v1854, 0
      %v1867 = vsel %vm1037, %v1858, 0
      %1869 = vmatpush.bf16.msra.mxu0 0
      %1870 = vmatpush.bf16.msra.mxu0 0
      %1871 = vmatpush.bf16.msra.mxu0 0
      %1872 = vmatpush.bf16.msra.mxu0 0
      %1873 = vmatpush.bf16.msra.mxu0 0
      %1874 = vmatpush.bf16.msra.mxu0 0
      %1875 = vmatpush.bf16.msra.mxu0 %v1867
      %1876 = vmatpush.bf16.msra.mxu0 %v1856
      %1877 = vmatmul.bf16.gmra.mxu0 %v1861
      %v1878 = vpop.f32.mrf.mxu0
      %v1879 = vadd.f32 0.0, %v1878
      %v1880 = vpop.f32.mrf.mxu0
      %v1881 = vadd.f32 0.0, %v1880
      %1882 = vmatmul.bf16.gmra.mxu0 %v1864
      %v1883 = vpop.f32.mrf.mxu0
      %v1884 = vadd.f32 0.0, %v1883
      %v1885 = vpop.f32.mrf.mxu0
      %1886 = vdwg.mxu0
      %1893 = vrot.lane.b32.xlu0 %v1839, 24
      %v1894 = vpop.permute.xlu0 %1893
      %1895 = vrot.lane.b32.xlu0 %v1841, 24
      %v1896 = vpop.permute.xlu0 %1895
      %1897 = vrot.lane.b32.xlu0 %v1844, 24
      %v1898 = vpop.permute.xlu0 %1897
      %1899 = vrot.lane.b32.xlu0 %v1879, 24
      %v1900 = vpop.permute.xlu0 %1899
      %1901 = vrot.lane.b32.xlu0 %v1881, 24
      %v1902 = vpop.permute.xlu0 %1901
      %1903 = vrot.lane.b32.xlu0 %v1884, 24
      %v1904 = vpop.permute.xlu0 %1903
      %vm1911 = vcmask 261312
      %1912 = vst.msk [vmem:[#allocation2] sm:$0xff] %vm1911, %v1894
      %1913 = vst.msk [vmem:[#allocation2 + $0x8] sm:$0xff] %vm1911, %v1896
      %1914 = vst.msk [vmem:[#allocation2 + $0x10] sm:$0xff] %vm1911, %v1898
      %1915 = vst.msk [vmem:[#allocation2 + $0x18] sm:$0xff] %vm1911, %v1900
      %1916 = vst.msk [vmem:[#allocation2 + $0x20] sm:$0xff] %vm1911, %v1902
      %1917 = vst.msk [vmem:[#allocation2 + $0x28] sm:$0xff] %vm1911, %v1904
      %v1918 = vld [vmem:[#allocation2] sm:$0xff]
      %v1919 = vld [vmem:[#allocation2 + $0x8] sm:$0xff]
      %v1920 = vld [vmem:[#allocation2 + $0x10] sm:$0xff]
      %v1921 = vld [vmem:[#allocation2 + $0x18] sm:$0xff]
      %v1922 = vld [vmem:[#allocation2 + $0x20] sm:$0xff]
      %v1923 = vld [vmem:[#allocation2 + $0x28] sm:$0xff]
      %v1924 = vpack.c.bf16 %v1919, %v1918
      %v1925 = vpack.c.bf16 %v1921, %v1920
      %v1926 = vpack.c.bf16 %v1923, %v1922
      %v1927 = vld [vmem:[%s572] sm:$0xf]
      %v1928 = vld [vmem:[%s572 + $0x4] sm:$0xf]
      %v1929 = vld [vmem:[%s572 + $0x8] sm:$0xf]
      %v1930 = vld [vmem:[%s572 + $0xc] sm:$0xf]
      %v1931 = vld [vmem:[%s575] sm:$0x1]
      %v1933 = vperm.slane %v1931, 0
      %v1939 = vunpack.c.l.b16 %v1927
      %v1940 = vunpack.c.l.b16 %v1928
      %v1941 = vunpack.c.l.b16 %v1929
      %v1942 = vunpack.c.l.b16 %v1930
      %v1943 = vpack.c.b16 %v1940, %v1939
      %v1944 = vpack.c.b16 %v1942, %v1941
      %v1948 = vsel %vm624, %v1924, 0
      %v1951 = vsel %vm624, %v1925, 0
      %v1954 = vsel %vm624, %v1926, 0
      %1956 = vmatpush.bf16.msra.mxu0 0
      %1957 = vmatpush.bf16.msra.mxu0 0
      %1958 = vmatpush.bf16.msra.mxu0 0
      %1959 = vmatpush.bf16.msra.mxu0 0
      %1960 = vmatpush.bf16.msra.mxu0 0
      %1961 = vmatpush.bf16.msra.mxu0 0
      %1962 = vmatpush.bf16.msra.mxu0 %v1944
      %1963 = vmatpush.bf16.msra.mxu0 %v1943
      %1964 = vmatmul.bf16.gmra.mxu0 %v1948
      %v1965 = vpop.f32.mrf.mxu0
      %v1966 = vadd.f32 %v1933, %v1965
      %v1967 = vpop.f32.mrf.mxu0
      %v1968 = vadd.f32 %v1933, %v1967
      %1969 = vmatmul.bf16.gmra.mxu0 %v1951
      %v1970 = vpop.f32.mrf.mxu0
      %v1971 = vadd.f32 %v1933, %v1970
      %v1972 = vpop.f32.mrf.mxu0
      %v1973 = vadd.f32 %v1933, %v1972
      %1974 = vmatmul.bf16.gmra.mxu0 %v1954
      %v1975 = vpop.f32.mrf.mxu0
      %v1976 = vadd.f32 %v1933, %v1975
      %v1977 = vpop.f32.mrf.mxu0
      %v1978 = vadd.f32 %v1933, %v1977
      %1979 = vdwg.mxu0
      %v1980 = vadd.f32 %v616, %v1966
      %v1981 = vadd.f32 %v617, %v1968
      %v1982 = vadd.f32 %v618, %v1971
      %v1983 = vadd.f32 %v619, %v1973
      %v1984 = vadd.f32 %v620, %v1976
      %v1985 = vadd.f32 %v621, %v1978
      %v1986 = vld [vmem:[%s578] sm:$0x1]
      %v1987 = vld [vmem:[%s581] sm:$0x1]
      %v1988 = vsel %vm624, %v1980, 0.0
      %1989 = vadd.xlane.f32.xlu0 %v1988
      %v1990 = vpop.xlane.xlu0 %1989
      %v1991 = vsel %vm624, %v1981, 0.0
      %1992 = vadd.xlane.f32.xlu0 %v1991
      %v1993 = vpop.xlane.xlu0 %1992
      %v1994 = vsel %vm624, %v1982, 0.0
      %1995 = vadd.xlane.f32.xlu0 %v1994
      %v1996 = vpop.xlane.xlu0 %1995
      %v1997 = vsel %vm624, %v1983, 0.0
      %1998 = vadd.xlane.f32.xlu0 %v1997
      %v1999 = vpop.xlane.xlu0 %1998
      %v2000 = vsel %vm624, %v1984, 0.0
      %2001 = vadd.xlane.f32.xlu0 %v2000
      %v2002 = vpop.xlane.xlu0 %2001
      %v2003 = vsel %vm624, %v1985, 0.0
      %2004 = vadd.xlane.f32.xlu0 %v2003
      %v2005 = vpop.xlane.xlu0 %2004
      %v2006 = vmul.f32 %v1990, %v649
      %v2007 = vmul.f32 %v1993, %v649
      %v2008 = vmul.f32 %v1996, %v649
      %v2009 = vmul.f32 %v1999, %v649
      %v2010 = vmul.f32 %v2002, %v649
      %v2011 = vmul.f32 %v2005, %v649
      %v2012 = vsub.f32 %v1980, %v2006
      %v2013 = vsub.f32 %v1981, %v2007
      %v2014 = vsub.f32 %v1982, %v2008
      %v2015 = vsub.f32 %v1983, %v2009
      %v2016 = vsub.f32 %v1984, %v2010
      %v2017 = vsub.f32 %v1985, %v2011
      %v2018 = vmul.f32 %v2012, %v2012
      %v2019 = vmul.f32 %v2013, %v2013
      %v2020 = vmul.f32 %v2014, %v2014
      %v2021 = vmul.f32 %v2015, %v2015
      %v2022 = vmul.f32 %v2016, %v2016
      %v2023 = vmul.f32 %v2017, %v2017
      %v2024 = vsel %vm624, %v2018, 0.0
      %2025 = vadd.xlane.f32.xlu0 %v2024
      %v2026 = vpop.xlane.xlu0 %2025
      %v2027 = vsel %vm624, %v2019, 0.0
      %2028 = vadd.xlane.f32.xlu0 %v2027
      %v2029 = vpop.xlane.xlu0 %2028
      %v2030 = vsel %vm624, %v2020, 0.0
      %2031 = vadd.xlane.f32.xlu0 %v2030
      %v2032 = vpop.xlane.xlu0 %2031
      %v2033 = vsel %vm624, %v2021, 0.0
      %2034 = vadd.xlane.f32.xlu0 %v2033
      %v2035 = vpop.xlane.xlu0 %2034
      %v2036 = vsel %vm624, %v2022, 0.0
      %2037 = vadd.xlane.f32.xlu0 %v2036
      %v2038 = vpop.xlane.xlu0 %2037
      %v2039 = vsel %vm624, %v2023, 0.0
      %2040 = vadd.xlane.f32.xlu0 %v2039
      %v2041 = vpop.xlane.xlu0 %2040
      %v2042 = vmul.f32 %v2026, %v649
      %v2043 = vmul.f32 %v2029, %v649
      %v2044 = vmul.f32 %v2032, %v649
      %v2045 = vmul.f32 %v2035, %v649
      %v2046 = vmul.f32 %v2038, %v649
      %v2047 = vmul.f32 %v2041, %v649
      %v2048 = vadd.f32 %v2042, 1e-06
      %v2049 = vadd.f32 %v2043, 1e-06
      %v2050 = vadd.f32 %v2044, 1e-06
      %v2051 = vadd.f32 %v2045, 1e-06
      %v2052 = vadd.f32 %v2046, 1e-06
      %v2053 = vadd.f32 %v2047, 1e-06
      %v2054 = vrsqrt.pop %v2048
      %v2055 = vmul.f32 %v2054, %v2048
      %v2056 = vmul.f32 %v2055, %v2054
      %v2057 = vmul.f32 0.5, %v2056
      %v2058 = vsub.f32 1.5, %v2057
      %v2059 = vmul.f32 %v2054, %v2058
      %vm2060 = vweird.f32 %v2048
      %vm2061 = vweird.f32 %v2054
      %vm2062 = vmor %vm2060, %vm2061
      %v2063 = vsel %vm2062, %v2054, %v2059
      %v2064 = vrsqrt.pop %v2049
      %v2065 = vmul.f32 %v2064, %v2049
      %v2066 = vmul.f32 %v2065, %v2064
      %v2067 = vmul.f32 0.5, %v2066
      %v2068 = vsub.f32 1.5, %v2067
      %v2069 = vmul.f32 %v2064, %v2068
      %vm2070 = vweird.f32 %v2049
      %vm2071 = vweird.f32 %v2064
      %vm2072 = vmor %vm2070, %vm2071
      %v2073 = vsel %vm2072, %v2064, %v2069
      %v2074 = vrsqrt.pop %v2050
      %v2075 = vmul.f32 %v2074, %v2050
      %v2076 = vmul.f32 %v2075, %v2074
      %v2077 = vmul.f32 0.5, %v2076
      %v2078 = vsub.f32 1.5, %v2077
      %v2079 = vmul.f32 %v2074, %v2078
      %vm2080 = vweird.f32 %v2050
      %vm2081 = vweird.f32 %v2074
      %vm2082 = vmor %vm2080, %vm2081
      %v2083 = vsel %vm2082, %v2074, %v2079
      %v2084 = vrsqrt.pop %v2051
      %v2085 = vmul.f32 %v2084, %v2051
      %v2086 = vmul.f32 %v2085, %v2084
      %v2087 = vmul.f32 0.5, %v2086
      %v2088 = vsub.f32 1.5, %v2087
      %v2089 = vmul.f32 %v2084, %v2088
      %vm2090 = vweird.f32 %v2051
      %vm2091 = vweird.f32 %v2084
      %vm2092 = vmor %vm2090, %vm2091
      %v2093 = vsel %vm2092, %v2084, %v2089
      %v2094 = vrsqrt.pop %v2052
      %v2095 = vmul.f32 %v2094, %v2052
      %v2096 = vmul.f32 %v2095, %v2094
      %v2097 = vmul.f32 0.5, %v2096
      %v2098 = vsub.f32 1.5, %v2097
      %v2099 = vmul.f32 %v2094, %v2098
      %vm2100 = vweird.f32 %v2052
      %vm2101 = vweird.f32 %v2094
      %vm2102 = vmor %vm2100, %vm2101
      %v2103 = vsel %vm2102, %v2094, %v2099
      %v2104 = vrsqrt.pop %v2053
      %v2105 = vmul.f32 %v2104, %v2053
      %v2106 = vmul.f32 %v2105, %v2104
      %v2107 = vmul.f32 0.5, %v2106
      %v2108 = vsub.f32 1.5, %v2107
      %v2109 = vmul.f32 %v2104, %v2108
      %vm2110 = vweird.f32 %v2053
      %vm2111 = vweird.f32 %v2104
      %vm2112 = vmor %vm2110, %vm2111
      %v2113 = vsel %vm2112, %v2104, %v2109
      %v2114 = vmul.f32 %v2012, %v2063
      %v2115 = vmul.f32 %v2013, %v2073
      %v2116 = vmul.f32 %v2014, %v2083
      %v2117 = vmul.f32 %v2015, %v2093
      %v2118 = vmul.f32 %v2016, %v2103
      %v2119 = vmul.f32 %v2017, %v2113
      %v2121 = vperm.slane %v1986, 0
      %v2123 = vmul.f32 %v2114, %v2121
      %v2124 = vmul.f32 %v2115, %v2121
      %v2125 = vmul.f32 %v2116, %v2121
      %v2126 = vmul.f32 %v2117, %v2121
      %v2127 = vmul.f32 %v2118, %v2121
      %v2128 = vmul.f32 %v2119, %v2121
      %v2130 = vperm.slane %v1987, 0
      %v2132 = vadd.f32 %v2123, %v2130
      %v2133 = vadd.f32 %v2124, %v2130
      %v2134 = vadd.f32 %v2125, %v2130
      %v2135 = vadd.f32 %v2126, %v2130
      %v2136 = vadd.f32 %v2127, %v2130
      %v2137 = vadd.f32 %v2128, %v2130
      %v2138 = vpack.c.bf16 %v2133, %v2132
      %v2139 = vpack.c.bf16 %v2135, %v2134
      %v2140 = vpack.c.bf16 %v2137, %v2136
      %v2141 = vld [vmem:[%s586] sm:$0xf]
      %v2142 = vld [vmem:[%s586 + $0x4] sm:$0xf]
      %v2143 = vld [vmem:[%s586 + $0x8] sm:$0xf]
      %v2144 = vld [vmem:[%s586 + $0xc] sm:$0xf]
      %v2145 = vld [vmem:[%s589] sm:$0x1]
      %v2147 = vperm.slane %v2145, 0
      %v2153 = vunpack.c.l.b16 %v2141
      %v2154 = vunpack.c.l.b16 %v2142
      %v2155 = vunpack.c.l.b16 %v2143
      %v2156 = vunpack.c.l.b16 %v2144
      %v2157 = vpack.c.b16 %v2154, %v2153
      %v2158 = vpack.c.b16 %v2156, %v2155
      %v2162 = vsel %vm624, %v2138, 0
      %v2165 = vsel %vm624, %v2139, 0
      %v2168 = vsel %vm624, %v2140, 0
      %2170 = vmatpush.bf16.msra.mxu0 0
      %2171 = vmatpush.bf16.msra.mxu0 0
      %2172 = vmatpush.bf16.msra.mxu0 0
      %2173 = vmatpush.bf16.msra.mxu0 0
      %2174 = vmatpush.bf16.msra.mxu0 0
      %2175 = vmatpush.bf16.msra.mxu0 0
      %2176 = vmatpush.bf16.msra.mxu0 %v2158
      %2177 = vmatpush.bf16.msra.mxu0 %v2157
      %2178 = vmatmul.bf16.gmra.mxu0 %v2162
      %v2179 = vpop.f32.mrf.mxu0
      %v2180 = vadd.f32 %v2147, %v2179
      %v2181 = vpop.f32.mrf.mxu0
      %v2182 = vadd.f32 %v2147, %v2181
      %2183 = vmatmul.bf16.gmra.mxu0 %v2165
      %v2184 = vpop.f32.mrf.mxu0
      %v2185 = vadd.f32 %v2147, %v2184
      %v2186 = vpop.f32.mrf.mxu0
      %v2187 = vadd.f32 %v2147, %v2186
      %2188 = vmatmul.bf16.gmra.mxu0 %v2168
      %v2189 = vpop.f32.mrf.mxu0
      %v2190 = vadd.f32 %v2147, %v2189
      %v2191 = vpop.f32.mrf.mxu0
      %v2192 = vadd.f32 %v2147, %v2191
      %2193 = vdwg.mxu0
      %v2194 = vmul.f32 %v2180, 0.5
      %v2195 = vmul.f32 %v2182, 0.5
      %v2196 = vmul.f32 %v2185, 0.5
      %v2197 = vmul.f32 %v2187, 0.5
      %v2198 = vmul.f32 %v2190, 0.5
      %v2199 = vmul.f32 %v2192, 0.5
      %v2200 = vmul.f32 %v2180, 0.70710677
      %v2201 = vmul.f32 %v2182, 0.70710677
      %v2202 = vmul.f32 %v2185, 0.70710677
      %v2203 = vmul.f32 %v2187, 0.70710677
      %v2204 = vmul.f32 %v2190, 0.70710677
      %v2205 = vmul.f32 %v2192, 0.70710677
      %v2206 = vmul.f32 %v2200, %v2200
      %v2207 = vmin.f32 16.0, %v2206
      %v2208 = vmul.f32 %v2207, 2.1237322e-06
      %v2209 = vadd.f32 %v2208, 0.00028619796
      %v2210 = vmul.f32 %v2207, %v2209
      %v2211 = vadd.f32 %v2210, 0.0036580483
      %v2212 = vmul.f32 %v2207, %v2211
      %v2213 = vadd.f32 %v2212, 0.05243302
      %v2214 = vmul.f32 %v2207, %v2213
      %v2215 = vadd.f32 %v2214, 0.18741608
      %v2216 = vmul.f32 %v2207, %v2215
      %v2217 = vadd.f32 %v2216, 1.1283791
      %v2218 = vmul.f32 %v2200, %v2217
      %v2219 = vmul.f32 %v2207, 3.8918573e-05
      %v2220 = vadd.f32 %v2219, 0.001143296
      %v2221 = vmul.f32 %v2207, %v2220
      %v2222 = vadd.f32 %v2221, 0.014752088
      %v2223 = vmul.f32 %v2207, %v2222
      %v2224 = vadd.f32 %v2223, 0.112945676
      %v2225 = vmul.f32 %v2207, %v2224
      %v2226 = vadd.f32 %v2225, 0.4994258
      %v2227 = vmul.f32 %v2207, %v2226
      %v2228 = vadd.f32 %v2227, 1.0
      %v2229 = vrcp.pop %v2228
      %v2230 = vmul.f32 %v2228, %v2229
      %v2231 = vsub.f32 1.0, %v2230
      %v2232 = vmul.f32 %v2229, %v2231
      %v2233 = vadd.f32 %v2229, %v2232
      %vm2234 = vweird.f32 %v2228
      %vm2235 = vweird.f32 %v2229
      %vm2236 = vmor %vm2234, %vm2235
      %v2237 = vsel %vm2236, %v2229, %v2233
      %v2238 = vand.u32 2147483647, %v2228
      %vm2239 = vcmp.eq.f32.partialorder %v2238, 8.507059e+37
      %v2240 = vand.u32 %v2228, 2147483648
      %v2241 = vor.u32 1.1754944e-38, %v2240
      %v2242 = vsel %vm2239, %v2241, %v2237
      %v2243 = vmul.f32 %v2218, %v2242
      %v2244 = vmin.f32 %v2243, 1.0
      %v2245 = vmax.f32 %v2244, -1.0
      %v2246 = vmul.f32 %v2201, %v2201
      %v2247 = vmin.f32 16.0, %v2246
      %v2248 = vmul.f32 %v2247, 2.1237322e-06
      %v2249 = vadd.f32 %v2248, 0.00028619796
      %v2250 = vmul.f32 %v2247, %v2249
      %v2251 = vadd.f32 %v2250, 0.0036580483
      %v2252 = vmul.f32 %v2247, %v2251
      %v2253 = vadd.f32 %v2252, 0.05243302
      %v2254 = vmul.f32 %v2247, %v2253
      %v2255 = vadd.f32 %v2254, 0.18741608
      %v2256 = vmul.f32 %v2247, %v2255
      %v2257 = vadd.f32 %v2256, 1.1283791
      %v2258 = vmul.f32 %v2201, %v2257
      %v2259 = vmul.f32 %v2247, 3.8918573e-05
      %v2260 = vadd.f32 %v2259, 0.001143296
      %v2261 = vmul.f32 %v2247, %v2260
      %v2262 = vadd.f32 %v2261, 0.014752088
      %v2263 = vmul.f32 %v2247, %v2262
      %v2264 = vadd.f32 %v2263, 0.112945676
      %v2265 = vmul.f32 %v2247, %v2264
      %v2266 = vadd.f32 %v2265, 0.4994258
      %v2267 = vmul.f32 %v2247, %v2266
      %v2268 = vadd.f32 %v2267, 1.0
      %v2269 = vrcp.pop %v2268
      %v2270 = vmul.f32 %v2268, %v2269
      %v2271 = vsub.f32 1.0, %v2270
      %v2272 = vmul.f32 %v2269, %v2271
      %v2273 = vadd.f32 %v2269, %v2272
      %vm2274 = vweird.f32 %v2268
      %vm2275 = vweird.f32 %v2269
      %vm2276 = vmor %vm2274, %vm2275
      %v2277 = vsel %vm2276, %v2269, %v2273
      %v2278 = vand.u32 2147483647, %v2268
      %vm2279 = vcmp.eq.f32.partialorder %v2278, 8.507059e+37
      %v2280 = vand.u32 %v2268, 2147483648
      %v2281 = vor.u32 1.1754944e-38, %v2280
      %v2282 = vsel %vm2279, %v2281, %v2277
      %v2283 = vmul.f32 %v2258, %v2282
      %v2284 = vmin.f32 %v2283, 1.0
      %v2285 = vmax.f32 %v2284, -1.0
      %v2286 = vmul.f32 %v2202, %v2202
      %v2287 = vmin.f32 16.0, %v2286
      %v2288 = vmul.f32 %v2287, 2.1237322e-06
      %v2289 = vadd.f32 %v2288, 0.00028619796
      %v2290 = vmul.f32 %v2287, %v2289
      %v2291 = vadd.f32 %v2290, 0.0036580483
      %v2292 = vmul.f32 %v2287, %v2291
      %v2293 = vadd.f32 %v2292, 0.05243302
      %v2294 = vmul.f32 %v2287, %v2293
      %v2295 = vadd.f32 %v2294, 0.18741608
      %v2296 = vmul.f32 %v2287, %v2295
      %v2297 = vadd.f32 %v2296, 1.1283791
      %v2298 = vmul.f32 %v2202, %v2297
      %v2299 = vmul.f32 %v2287, 3.8918573e-05
      %v2300 = vadd.f32 %v2299, 0.001143296
      %v2301 = vmul.f32 %v2287, %v2300
      %v2302 = vadd.f32 %v2301, 0.014752088
      %v2303 = vmul.f32 %v2287, %v2302
      %v2304 = vadd.f32 %v2303, 0.112945676
      %v2305 = vmul.f32 %v2287, %v2304
      %v2306 = vadd.f32 %v2305, 0.4994258
      %v2307 = vmul.f32 %v2287, %v2306
      %v2308 = vadd.f32 %v2307, 1.0
      %v2309 = vrcp.pop %v2308
      %v2310 = vmul.f32 %v2308, %v2309
      %v2311 = vsub.f32 1.0, %v2310
      %v2312 = vmul.f32 %v2309, %v2311
      %v2313 = vadd.f32 %v2309, %v2312
      %vm2314 = vweird.f32 %v2308
      %vm2315 = vweird.f32 %v2309
      %vm2316 = vmor %vm2314, %vm2315
      %v2317 = vsel %vm2316, %v2309, %v2313
      %v2318 = vand.u32 2147483647, %v2308
      %vm2319 = vcmp.eq.f32.partialorder %v2318, 8.507059e+37
      %v2320 = vand.u32 %v2308, 2147483648
      %v2321 = vor.u32 1.1754944e-38, %v2320
      %v2322 = vsel %vm2319, %v2321, %v2317
      %v2323 = vmul.f32 %v2298, %v2322
      %v2324 = vmin.f32 %v2323, 1.0
      %v2325 = vmax.f32 %v2324, -1.0
      %v2326 = vmul.f32 %v2203, %v2203
      %v2327 = vmin.f32 16.0, %v2326
      %v2328 = vmul.f32 %v2327, 2.1237322e-06
      %v2329 = vadd.f32 %v2328, 0.00028619796
      %v2330 = vmul.f32 %v2327, %v2329
      %v2331 = vadd.f32 %v2330, 0.0036580483
      %v2332 = vmul.f32 %v2327, %v2331
      %v2333 = vadd.f32 %v2332, 0.05243302
      %v2334 = vmul.f32 %v2327, %v2333
      %v2335 = vadd.f32 %v2334, 0.18741608
      %v2336 = vmul.f32 %v2327, %v2335
      %v2337 = vadd.f32 %v2336, 1.1283791
      %v2338 = vmul.f32 %v2203, %v2337
      %v2339 = vmul.f32 %v2327, 3.8918573e-05
      %v2340 = vadd.f32 %v2339, 0.001143296
      %v2341 = vmul.f32 %v2327, %v2340
      %v2342 = vadd.f32 %v2341, 0.014752088
      %v2343 = vmul.f32 %v2327, %v2342
      %v2344 = vadd.f32 %v2343, 0.112945676
      %v2345 = vmul.f32 %v2327, %v2344
      %v2346 = vadd.f32 %v2345, 0.4994258
      %v2347 = vmul.f32 %v2327, %v2346
      %v2348 = vadd.f32 %v2347, 1.0
      %v2349 = vrcp.pop %v2348
      %v2350 = vmul.f32 %v2348, %v2349
      %v2351 = vsub.f32 1.0, %v2350
      %v2352 = vmul.f32 %v2349, %v2351
      %v2353 = vadd.f32 %v2349, %v2352
      %vm2354 = vweird.f32 %v2348
      %vm2355 = vweird.f32 %v2349
      %vm2356 = vmor %vm2354, %vm2355
      %v2357 = vsel %vm2356, %v2349, %v2353
      %v2358 = vand.u32 2147483647, %v2348
      %vm2359 = vcmp.eq.f32.partialorder %v2358, 8.507059e+37
      %v2360 = vand.u32 %v2348, 2147483648
      %v2361 = vor.u32 1.1754944e-38, %v2360
      %v2362 = vsel %vm2359, %v2361, %v2357
      %v2363 = vmul.f32 %v2338, %v2362
      %v2364 = vmin.f32 %v2363, 1.0
      %v2365 = vmax.f32 %v2364, -1.0
      %v2366 = vmul.f32 %v2204, %v2204
      %v2367 = vmin.f32 16.0, %v2366
      %v2368 = vmul.f32 %v2367, 2.1237322e-06
      %v2369 = vadd.f32 %v2368, 0.00028619796
      %v2370 = vmul.f32 %v2367, %v2369
      %v2371 = vadd.f32 %v2370, 0.0036580483
      %v2372 = vmul.f32 %v2367, %v2371
      %v2373 = vadd.f32 %v2372, 0.05243302
      %v2374 = vmul.f32 %v2367, %v2373
      %v2375 = vadd.f32 %v2374, 0.18741608
      %v2376 = vmul.f32 %v2367, %v2375
      %v2377 = vadd.f32 %v2376, 1.1283791
      %v2378 = vmul.f32 %v2204, %v2377
      %v2379 = vmul.f32 %v2367, 3.8918573e-05
      %v2380 = vadd.f32 %v2379, 0.001143296
      %v2381 = vmul.f32 %v2367, %v2380
      %v2382 = vadd.f32 %v2381, 0.014752088
      %v2383 = vmul.f32 %v2367, %v2382
      %v2384 = vadd.f32 %v2383, 0.112945676
      %v2385 = vmul.f32 %v2367, %v2384
      %v2386 = vadd.f32 %v2385, 0.4994258
      %v2387 = vmul.f32 %v2367, %v2386
      %v2388 = vadd.f32 %v2387, 1.0
      %v2389 = vrcp.pop %v2388
      %v2390 = vmul.f32 %v2388, %v2389
      %v2391 = vsub.f32 1.0, %v2390
      %v2392 = vmul.f32 %v2389, %v2391
      %v2393 = vadd.f32 %v2389, %v2392
      %vm2394 = vweird.f32 %v2388
      %vm2395 = vweird.f32 %v2389
      %vm2396 = vmor %vm2394, %vm2395
      %v2397 = vsel %vm2396, %v2389, %v2393
      %v2398 = vand.u32 2147483647, %v2388
      %vm2399 = vcmp.eq.f32.partialorder %v2398, 8.507059e+37
      %v2400 = vand.u32 %v2388, 2147483648
      %v2401 = vor.u32 1.1754944e-38, %v2400
      %v2402 = vsel %vm2399, %v2401, %v2397
      %v2403 = vmul.f32 %v2378, %v2402
      %v2404 = vmin.f32 %v2403, 1.0
      %v2405 = vmax.f32 %v2404, -1.0
      %v2406 = vmul.f32 %v2205, %v2205
      %v2407 = vmin.f32 16.0, %v2406
      %v2408 = vmul.f32 %v2407, 2.1237322e-06
      %v2409 = vadd.f32 %v2408, 0.00028619796
      %v2410 = vmul.f32 %v2407, %v2409
      %v2411 = vadd.f32 %v2410, 0.0036580483
      %v2412 = vmul.f32 %v2407, %v2411
      %v2413 = vadd.f32 %v2412, 0.05243302
      %v2414 = vmul.f32 %v2407, %v2413
      %v2415 = vadd.f32 %v2414, 0.18741608
      %v2416 = vmul.f32 %v2407, %v2415
      %v2417 = vadd.f32 %v2416, 1.1283791
      %v2418 = vmul.f32 %v2205, %v2417
      %v2419 = vmul.f32 %v2407, 3.8918573e-05
      %v2420 = vadd.f32 %v2419, 0.001143296
      %v2421 = vmul.f32 %v2407, %v2420
      %v2422 = vadd.f32 %v2421, 0.014752088
      %v2423 = vmul.f32 %v2407, %v2422
      %v2424 = vadd.f32 %v2423, 0.112945676
      %v2425 = vmul.f32 %v2407, %v2424
      %v2426 = vadd.f32 %v2425, 0.4994258
      %v2427 = vmul.f32 %v2407, %v2426
      %v2428 = vadd.f32 %v2427, 1.0
      %v2429 = vrcp.pop %v2428
      %v2430 = vmul.f32 %v2428, %v2429
      %v2431 = vsub.f32 1.0, %v2430
      %v2432 = vmul.f32 %v2429, %v2431
      %v2433 = vadd.f32 %v2429, %v2432
      %vm2434 = vweird.f32 %v2428
      %vm2435 = vweird.f32 %v2429
      %vm2436 = vmor %vm2434, %vm2435
      %v2437 = vsel %vm2436, %v2429, %v2433
      %v2438 = vand.u32 2147483647, %v2428
      %vm2439 = vcmp.eq.f32.partialorder %v2438, 8.507059e+37
      %v2440 = vand.u32 %v2428, 2147483648
      %v2441 = vor.u32 1.1754944e-38, %v2440
      %v2442 = vsel %vm2439, %v2441, %v2437
      %v2443 = vmul.f32 %v2418, %v2442
      %v2444 = vmin.f32 %v2443, 1.0
      %v2445 = vmax.f32 %v2444, -1.0
      %v2446 = vadd.f32 %v2245, 1.0
      %v2447 = vadd.f32 %v2285, 1.0
      %v2448 = vadd.f32 %v2325, 1.0
      %v2449 = vadd.f32 %v2365, 1.0
      %v2450 = vadd.f32 %v2405, 1.0
      %v2451 = vadd.f32 %v2445, 1.0
      %v2452 = vmul.f32 %v2194, %v2446
      %v2453 = vmul.f32 %v2195, %v2447
      %v2454 = vmul.f32 %v2196, %v2448
      %v2455 = vmul.f32 %v2197, %v2449
      %v2456 = vmul.f32 %v2198, %v2450
      %v2457 = vmul.f32 %v2199, %v2451
      %v2458 = vpack.c.bf16 %v2453, %v2452
      %v2459 = vpack.c.bf16 %v2455, %v2454
      %v2460 = vpack.c.bf16 %v2457, %v2456
      %v2461 = vld [vmem:[%s594] sm:$0xf]
      %v2462 = vld [vmem:[%s594 + $0x4] sm:$0xf]
      %v2463 = vld [vmem:[%s594 + $0x8] sm:$0xf]
      %v2464 = vld [vmem:[%s594 + $0xc] sm:$0xf]
      %v2465 = vld [vmem:[%s594 + $0x10] sm:$0xf]
      %v2466 = vld [vmem:[%s594 + $0x14] sm:$0xf]
      %v2467 = vld [vmem:[%s594 + $0x18] sm:$0xf]
      %v2468 = vld [vmem:[%s594 + $0x1c] sm:$0xf]
      %v2469 = vld [vmem:[%s594 + $0x20] sm:$0xf]
      %v2470 = vld [vmem:[%s594 + $0x24] sm:$0xf]
      %v2471 = vld [vmem:[%s594 + $0x28] sm:$0xf]
      %v2472 = vld [vmem:[%s594 + $0x2c] sm:$0xf]
      %v2473 = vld [vmem:[%s594 + $0x30] sm:$0xf]
      %v2474 = vld [vmem:[%s594 + $0x34] sm:$0xf]
      %v2475 = vld [vmem:[%s594 + $0x38] sm:$0xf]
      %v2476 = vld [vmem:[%s594 + $0x3c] sm:$0xf]
      %v2477 = vld [vmem:[%s597] sm:$0x1]
      %v2479 = vperm.slane %v2477, 0
      %v2497 = vunpack.c.l.b16 %v2461
      %v2498 = vunpack.c.l.b16 %v2462
      %v2499 = vunpack.c.l.b16 %v2463
      %v2500 = vunpack.c.l.b16 %v2464
      %v2501 = vunpack.c.l.b16 %v2465
      %v2502 = vunpack.c.l.b16 %v2466
      %v2503 = vunpack.c.l.b16 %v2467
      %v2504 = vunpack.c.l.b16 %v2468
      %v2505 = vunpack.c.l.b16 %v2469
      %v2506 = vunpack.c.l.b16 %v2470
      %v2507 = vunpack.c.l.b16 %v2471
      %v2508 = vunpack.c.l.b16 %v2472
      %v2509 = vunpack.c.l.b16 %v2473
      %v2510 = vunpack.c.l.b16 %v2474
      %v2511 = vunpack.c.l.b16 %v2475
      %v2512 = vunpack.c.l.b16 %v2476
      %v2513 = vpack.c.b16 %v2498, %v2497
      %v2514 = vpack.c.b16 %v2500, %v2499
      %v2515 = vpack.c.b16 %v2502, %v2501
      %v2516 = vpack.c.b16 %v2504, %v2503
      %v2517 = vpack.c.b16 %v2506, %v2505
      %v2518 = vpack.c.b16 %v2508, %v2507
      %v2519 = vpack.c.b16 %v2510, %v2509
      %v2520 = vpack.c.b16 %v2512, %v2511
      %2529 = vmatpush.bf16.msra.mxu0 %v2520
      %2530 = vmatpush.bf16.msra.mxu0 %v2519
      %2531 = vmatpush.bf16.msra.mxu0 %v2518
      %2532 = vmatpush.bf16.msra.mxu0 %v2517
      %2533 = vmatpush.bf16.msra.mxu0 %v2516
      %2534 = vmatpush.bf16.msra.mxu0 %v2515
      %2535 = vmatpush.bf16.msra.mxu0 %v2514
      %2536 = vmatpush.bf16.msra.mxu0 %v2513
      %2537 = vmatmul.bf16.gmra.mxu0 %v2458
      %v2538 = vpop.f32.mrf.mxu0
      %v2539 = vadd.f32 %v2479, %v2538
      %v2540 = vpop.f32.mrf.mxu0
      %v2541 = vadd.f32 %v2479, %v2540
      %2542 = vmatmul.bf16.gmra.mxu0 %v2459
      %v2543 = vpop.f32.mrf.mxu0
      %v2544 = vadd.f32 %v2479, %v2543
      %v2545 = vpop.f32.mrf.mxu0
      %v2546 = vadd.f32 %v2479, %v2545
      %2547 = vmatmul.bf16.gmra.mxu0 %v2460
      %v2548 = vpop.f32.mrf.mxu0
      %v2549 = vadd.f32 %v2479, %v2548
      %v2550 = vpop.f32.mrf.mxu0
      %v2551 = vadd.f32 %v2479, %v2550
      %2552 = vdwg.mxu0
      %v2553 = vadd.f32 %v1980, %v2539
      %v2554 = vadd.f32 %v1981, %v2541
      %v2555 = vadd.f32 %v1982, %v2544
      %v2556 = vadd.f32 %v1983, %v2546
      %v2557 = vadd.f32 %v1984, %v2549
      %v2558 = vadd.f32 %v1985, %v2551
      %2559 = vst.msk [vmem:[%s13] sm:$0xff] %vm624, %v2553
      %2560 = vst.msk [vmem:[%s13 + $0x8] sm:$0xff] %vm624, %v2554
      %2561 = vst.msk [vmem:[%s13 + $0x10] sm:$0xff] %vm624, %v2555
      %2562 = vst.msk [vmem:[%s13 + $0x18] sm:$0xff] %vm624, %v2556
      %2563 = vst.msk [vmem:[%s13 + $0x20] sm:$0xff] %vm624, %v2557
      %2564 = vst.msk [vmem:[%s13 + $0x28] sm:$0xff] %vm624, %v2558
      // Predicated region
      $region77: #{vit_forward.4} parent=71 // pred_check
        %p2565 = pneg %p370
      $region78: #{vit_forward.4} parent=71 // pred_check_branch
        %2567 = sbr.rel (%p2565) target = $region80
      $region79: #{vit_forward.4} parent=71 // pred_region
        _
      $region80: #{vit_forward.4} parent=71 // pred_fallthru
        _
      // Predicated region
      $region81: #{vit_forward.4} parent=71 // pred_check
        %p2568 = pneg %p370
      $region82: #{vit_forward.4} parent=71 // pred_check_branch
        %2570 = sbr.rel (%p2568) target = $region84
      $region83: #{vit_forward.4} parent=71 // pred_region
        _
      $region84: #{vit_forward.4} parent=71 // pred_fallthru
        _
    $region72: #{vit_forward.4} parent=5 // pred_fallthru
      _
    %p2571 = scmp.le.s32.totalorder 2, %s19
    // Predicated region
    $region85: #{vit_forward.4} parent=5 // pred_check
      %p2572 = pneg %p2571
    $region86: #{vit_forward.4} parent=5 // pred_check_branch
      %2574 = sbr.rel (%p2572) target = $region88
    $region87: #{vit_forward.4} parent=5 // pred_region
      %s2575 = ssub.s32 %s19, 2
    $region88: #{vit_forward.4} parent=5 // pred_fallthru
      _
  $region6: #{vit_forward.4} parent=0 // loop_footer
    %s23 = sadd.s32 1, %s19
  $region7: #{vit_forward.4} parent=0 // loop_footer_branch
    %18 = sbr.rel target = $region3
  $region8: #{vit_forward.4} parent=0 // loop_exit
    _

</llo_original>
